<compile_context>
chip_gen: v7x
topology: tpu7x:2x2x1
jax: 0.10.0
libtpu: 0.0.40
codegen_flags: <defaults>
</compile_context>

<pallas_src>
import math

import numpy as np

import jax
import jax.numpy as jnp
from jax.experimental import pallas as pl
from jax.experimental.pallas import tpu as pltpu

# ---------------------------------------------------------------------------
# Constants (not provided by the reference file — fixed here, documented).
# ---------------------------------------------------------------------------
ACTION_DIM = 4
PLAYER_TOKEN_LENGTH = 12                  # player token feature size
WEAPON_TOKEN_LENGTH = 6                   # weapon token feature size
NUM_WEAPON_TOKENS = 2
NUM_WEAPON_TYPES = 3                      # trailing one-hot block of weapon token
NUM_PLAYER_MODES = 4                      # trailing one-hot block of player token
PLAYER_TRIM_INDICES = (0, 2, 3, 5, 7, 9)  # len == WEAPON_TOKEN_LENGTH
STATE_SPLIT = (1, PLAYER_TOKEN_LENGTH, NUM_WEAPON_TOKENS * WEAPON_TOKEN_LENGTH)
HALF_DIM = sum(STATE_SPLIT)               # 25
STATE_DIM = 2 * HALF_DIM                  # 50
SEARCH_MODE = "search"
BACKPROP_MODE = "backprop"

WEAPON_POS_DIM = 3                        # weapon_pos_embedding_dim (default)
PLAYER_POS_DIM = 2                        # player_pos_embedding_dim (default)
WEAPON_HEADS = 3                          # num_heads (default)
PLAYER_HEADS = 2
WE = WEAPON_TOKEN_LENGTH + WEAPON_POS_DIM       # 9  = weapon-attn embed dim
PSE = WEAPON_TOKEN_LENGTH + PLAYER_POS_DIM      # 8  = player-self-attn embed dim
WEAPON_MLP_IN = 3 * WE + ACTION_DIM             # 31
OH_MLP_IN = 2 * WEAPON_TOKEN_LENGTH + PLAYER_POS_DIM + ACTION_DIM  # 18

W = WEAPON_TOKEN_LENGTH
NW = NUM_WEAPON_TOKENS
P = PLAYER_TOKEN_LENGTH

# Fused action-side layer-1 column layout: [weapon tok0 | weapon tok1 | player | oh]
ACT_W0 = 0
ACT_W1 = 15
ACT_PL = 30
ACT_OH = 45
ACT_COLS = 55

# ---------------------------------------------------------------------------
# Raw module parameters: (name, shape).  Matrices are (in, out); biases (1, out).
# ---------------------------------------------------------------------------
PARAM_SPECS = [
    ("wpos", (NW, WEAPON_POS_DIM)),              # weapon_pos_embedding
    ("ppos", (2, PLAYER_POS_DIM)),               # player_pos_embedding
    # weapon_self_attn (embed 9, 3 heads)
    ("wsa_qw", (WE, WE)), ("wsa_qb", (1, WE)),
    ("wsa_kw", (WE, WE)), ("wsa_kb", (1, WE)),
    ("wsa_vw", (WE, WE)), ("wsa_vb", (1, WE)),
    ("wsa_ow", (WE, WE)), ("wsa_ob", (1, WE)),
    # weapon_to_player_attn (embed 9, kdim = vdim = player_dim, 3 heads)
    ("w2p_qw", (WE, WE)), ("w2p_qb", (1, WE)),
    ("w2p_kw", (P, WE)), ("w2p_kb", (1, WE)),
    ("w2p_vw", (P, WE)), ("w2p_vb", (1, WE)),
    ("w2p_ow", (WE, WE)), ("w2p_ob", (1, WE)),
    # weapon_MLP: 31 -> 15 -> 6
    ("wmlp_w1", (WEAPON_MLP_IN, 15)), ("wmlp_b1", (1, 15)),
    ("wmlp_w2", (15, W)), ("wmlp_b2", (1, W)),
    # player_MLP: 16 -> 15 -> 12 -> 12
    ("pmlp_w1", (P + ACTION_DIM, 15)), ("pmlp_b1", (1, 15)),
    ("pmlp_w2", (15, 12)), ("pmlp_b2", (1, 12)),
    ("pmlp_w3", (12, P)), ("pmlp_b3", (1, P)),
    # player_to_weapon_attn (embed 6, 2 heads)
    ("p2w_qw", (W, W)), ("p2w_qb", (1, W)),
    ("p2w_kw", (W, W)), ("p2w_kb", (1, W)),
    ("p2w_vw", (W, W)), ("p2w_vb", (1, W)),
    ("p2w_ow", (W, W)), ("p2w_ob", (1, W)),
    # player_self_attn (embed 8, 2 heads)
    ("psa_qw", (PSE, PSE)), ("psa_qb", (1, PSE)),
    ("psa_kw", (PSE, PSE)), ("psa_kb", (1, PSE)),
    ("psa_vw", (PSE, PSE)), ("psa_vb", (1, PSE)),
    ("psa_ow", (PSE, PSE)), ("psa_ob", (1, PSE)),
    # opponent_health_MLP: 18 -> 10 -> 10 -> 1
    ("oh_w1", (OH_MLP_IN, 10)), ("oh_b1", (1, 10)),
    ("oh_w2", (10, 10)), ("oh_b2", (1, 10)),
    ("oh_w3", (10, 1)), ("oh_b3", (1, 1)),
]
PARAM_NAMES = [n for n, _ in PARAM_SPECS]

# ---------------------------------------------------------------------------
# Packed (pre-fused, pre-folded) parameter layout: one VMEM-resident blob,
# one HBM->VMEM DMA.  Each entry starts on an 8-row (sublane) boundary.
# ---------------------------------------------------------------------------
PACK_W = ACT_COLS                       # 55: widest packed entry
PACKED_SPECS = [
    # weapon attention, fused projections (query scale folded, pos-emb folded)
    ("w_x_w", (W, 4 * WE)),             # [Wq_sa*s | Wk_sa | Wv_sa | Wq_ca*s]
    ("w_x_b", (NW, 4 * WE)),            # pos-embedding + bias, one row / weapon token
    ("w_p_kv_w", (P, 2 * WE)),          # [Wk_ca | Wv_ca]
    ("w_p_kv_b", (1, 2 * WE)),
    # head-pooling one-hots (constants)
    ("pool9", (WE, WEAPON_HEADS)), ("pool9T", (WEAPON_HEADS, WE)),
    ("pool6", (W, PLAYER_HEADS)), ("pool6T", (PLAYER_HEADS, W)),
    ("pool8", (PSE, PLAYER_HEADS)), ("pool8T", (PLAYER_HEADS, PSE)),
    # weapon MLP layer 1, split by input block; attn output proj + pos folded
    ("wm1_wt", (W, 15)), ("wm1_sa", (WE, 15)), ("wm1_ca", (WE, 15)),
    ("wm1_b", (NW, 15)),
    # fused action-side layer-1 weight (weapon x2 | player | opp-health)
    ("act1_w", (ACTION_DIM, ACT_COLS)),
    # weapon MLP layer 2, block-diagonal (both weapon tokens at once)
    ("wm2_bd", (30, 2 * W)), ("wm2_bd_b", (1, 2 * W)),
    # player MLP
    ("pm1_tok", (P, 15)), ("pm1_b", (1, 15)),
    ("pm2_w", (15, 12)), ("pm2_b", (1, 12)),
    ("pm3_w", (12, P)), ("pm3_b", (1, P)),
    # opponent-health cross attention (trim + query scale folded)
    ("ohx_qw", (P, W)), ("ohx_qb", (1, W)),
    ("ohx_kv_w", (W, 2 * W)), ("ohx_kv_b", (1, 2 * W)),
    # player self-attention (trim + pos-embedding + query scale folded)
    ("psa_w", (P, 3 * PSE)), ("psa_b", (2, 3 * PSE)),
    # opponent health MLP layer 1 (attn output projections + biases folded)
    ("oh1_cross", (W, 10)), ("oh1_self", (PSE, 10)), ("oh1_b", (1, 10)),
    ("oh2_w", (10, 10)), ("oh2_b", (1, 10)),
    ("oh3_w", (10, 1)), ("oh3_b", (1, 1)),
]


def _round8(r):
    return -(-r // 8) * 8


def _round_up(x, m):
    return -(-x // m) * m


def _build_layout():
    layout, off = {}, 0
    for name, (r, c) in PACKED_SPECS:
        layout[name] = (off, r, c)
        off += _round8(r)
    return layout, off


PACK_LAYOUT, PACK_ROWS = _build_layout()


def _trim_matrix():
    """(P, W) column-selection matrix: token @ T == trim_token(token)."""
    m = np.zeros((PLAYER_TOKEN_LENGTH, WEAPON_TOKEN_LENGTH), np.float32)
    for j, idx in enumerate(PLAYER_TRIM_INDICES):
        m[idx, j] = 1.0
    return jnp.asarray(m)


def _head_pool(embed, heads):
    """(embed, heads) one-hot: column h selects head h's contiguous lanes."""
    hd = embed // heads
    m = (np.arange(embed)[:, None] // hd == np.arange(heads)[None, :])
    return jnp.asarray(m.astype(np.float32))


def _prep_params(p):
    """Fuse / fold raw module parameters into the kernel's packed layout."""
    s_w = 1.0 / math.sqrt(WE // WEAPON_HEADS)   # weapon attn head dim 3
    s_x = 1.0 / math.sqrt(W // PLAYER_HEADS)    # player_to_weapon head dim 3
    s_p = 1.0 / math.sqrt(PSE // PLAYER_HEADS)  # player self-attn head dim 4
    T = _trim_matrix()
    out = {}

    # ---- weapon self + cross attention: fused [Qs|Ks|Vs|Qc] on the x tokens
    w_x_all = jnp.concatenate(
        [p["wsa_qw"] * s_w, p["wsa_kw"], p["wsa_vw"], p["w2p_qw"] * s_w], axis=1)
    b_x_all = jnp.concatenate(
        [p["wsa_qb"] * s_w, p["wsa_kb"], p["wsa_vb"], p["w2p_qb"] * s_w], axis=1)
    out["w_x_w"] = w_x_all[:W, :]                          # weapon-token rows
    out["w_x_b"] = p["wpos"] @ w_x_all[W:, :] + b_x_all    # pos rows folded
    out["w_p_kv_w"] = jnp.concatenate([p["w2p_kw"], p["w2p_vw"]], axis=1)
    out["w_p_kv_b"] = jnp.concatenate([p["w2p_kb"], p["w2p_vb"]], axis=1)

    # ---- head pooling constants
    out["pool9"] = _head_pool(WE, WEAPON_HEADS)
    out["pool9T"] = out["pool9"].T
    out["pool6"] = _head_pool(W, PLAYER_HEADS)
    out["pool6T"] = out["pool6"].T
    out["pool8"] = _head_pool(PSE, PLAYER_HEADS)
    out["pool8T"] = out["pool8"].T

    # ---- weapon MLP layer 1 split by input block [x | sa | ca | actions];
    # attention OUTPUT projections folded into the sa / ca weight blocks.
    w1 = p["wmlp_w1"]
    out["wm1_wt"] = w1[0:W, :]
    out["wm1_sa"] = p["wsa_ow"] @ w1[WE:2 * WE, :]
    out["wm1_ca"] = p["w2p_ow"] @ w1[2 * WE:3 * WE, :]
    out["wm1_b"] = (p["wpos"] @ w1[W:WE, :] + p["wmlp_b1"]
                    + p["wsa_ob"] @ w1[WE:2 * WE, :]
                    + p["w2p_ob"] @ w1[2 * WE:3 * WE, :])   # per-token (2, 15)
    wm1_act = w1[3 * WE:, :]                                # (4, 15)

    # ---- weapon MLP layer 2, block-diagonalized for both weapon tokens
    wm2 = p["wmlp_w2"]                                      # (15, 6)
    z = jnp.zeros_like(wm2)
    out["wm2_bd"] = jnp.concatenate(
        [jnp.concatenate([wm2, z], axis=1),
         jnp.concatenate([z, wm2], axis=1)], axis=0)        # (30, 12)
    out["wm2_bd_b"] = jnp.concatenate([p["wmlp_b2"], p["wmlp_b2"]], axis=1)

    # ---- player MLP
    pw1 = p["pmlp_w1"]
    out["pm1_tok"], out["pm1_b"] = pw1[:P, :], p["pmlp_b1"]
    pm1_act = pw1[P:, :]                                    # (4, 15)
    out["pm2_w"], out["pm2_b"] = p["pmlp_w2"], p["pmlp_b2"]
    out["pm3_w"], out["pm3_b"] = p["pmlp_w3"], p["pmlp_b3"]

    # ---- opponent-health cross attention (trim folded into Q projection)
    # TODO(synk): reference calls weapon_to_player_attn here with mismatched
    # dims; we use player_to_weapon_attn (query = trimmed opponent token,
    # keys/values = weapon tokens), the only dimensionally valid reading.
    out["ohx_qw"] = T @ (p["p2w_qw"] * s_x)
    out["ohx_qb"] = p["p2w_qb"] * s_x
    out["ohx_kv_w"] = jnp.concatenate([p["p2w_kw"], p["p2w_vw"]], axis=1)
    out["ohx_kv_b"] = jnp.concatenate([p["p2w_kb"], p["p2w_vb"]], axis=1)

    # ---- player self-attention (trim + player pos embedding folded)
    psa_qkv_w = jnp.concatenate([p["psa_qw"] * s_p, p["psa_kw"], p["psa_vw"]], axis=1)
    psa_qkv_b = jnp.concatenate([p["psa_qb"] * s_p, p["psa_kb"], p["psa_vb"]], axis=1)
    out["psa_w"] = T @ psa_qkv_w[:W, :]
    out["psa_b"] = p["ppos"] @ psa_qkv_w[W:, :] + psa_qkv_b   # (2, 24), row / seq pos

    # ---- opponent health MLP layer 1 split [cross | self_mean | actions];
    # attention output projections (and the 0.5 mean) folded host-side.
    ow1 = p["oh_w1"]
    out["oh1_cross"] = p["p2w_ow"] @ ow1[:W, :]
    out["oh1_self"] = 0.5 * (p["psa_ow"] @ ow1[W:W + PSE, :])
    out["oh1_b"] = (p["oh_b1"] + p["p2w_ob"] @ ow1[:W, :]
                    + p["psa_ob"] @ ow1[W:W + PSE, :])
    oh1_act = ow1[W + PSE:, :]                               # (4, 10)
    out["oh2_w"], out["oh2_b"] = p["oh_w2"], p["oh_b2"]
    out["oh3_w"], out["oh3_b"] = p["oh_w3"], p["oh_b3"]

    # ---- fused action-side layer-1 weight: one matmul per tile for all heads
    out["act1_w"] = jnp.concatenate([wm1_act, wm1_act, pm1_act, oh1_act], axis=1)
    return out


def pack_params(params):
    """Fuse + pack all module parameters into one (PACK_ROWS, PACK_W) f32 blob."""
    # TODO(synk): a bf16 blob (keeping f32 accumulation in the dots) halves the
    # DMA on v6e/v7x; kept f32 here for bit-parity with the reference.
    prepped = _prep_params(params)
    blocks = []
    for name, (r, c) in PACKED_SPECS:
        a = jnp.asarray(prepped[name], jnp.float32)
        assert a.shape == (r, c), (name, a.shape, (r, c))
        blocks.append(jnp.pad(a, ((0, _round8(r) - r), (0, PACK_W - c))))
    packed = jnp.concatenate(blocks, axis=0)
    assert packed.shape == (PACK_ROWS, PACK_W)
    return packed


# ---------------------------------------------------------------------------
# In-kernel helpers (traced inside the Pallas kernel body).
# ---------------------------------------------------------------------------
def _mm(a, b):
    return jnp.dot(a, b, preferred_element_type=jnp.float32)


def _argmax_one_hot(logits):
    # argmax over the last axis -> one-hot (search mode only).
    bsz, k = logits.shape
    am = jnp.argmax(logits, axis=-1, keepdims=True)             # (B, 1)
    iota = jax.lax.broadcasted_iota(jnp.int32, (bsz, k), 1)     # (B, K)
    return (iota == am).astype(logits.dtype)


def _attn_over_2(q, k, v, pool, poolT):
    """Multi-head attention of `q` (T, E) over exactly two key/value rows.

    k, v: (2, E).  pool: (E, H) head-membership one-hot; poolT: its transpose.
    The 1/sqrt(head_dim) scale is already folded into the Q projection, and
    the OUTPUT projection is folded into downstream weights by the caller.
    Heads stay in their contiguous lane chunks: no per-head slicing, no
    transposes, no cross-lane reductions beyond the tiny pool matmuls.
    """
    k0, k1 = k[0:1, :], k[1:2, :]
    v0, v1 = v[0:1, :], v[1:2, :]
    s0 = _mm(q * k0, pool)          # (T, H): per-head score vs key 0
    s1 = _mm(q * k1, pool)          # (T, H): per-head score vs key 1
    m = jnp.maximum(s0, s1)
    e0 = jnp.exp(s0 - m)
    e1 = jnp.exp(s1 - m)
    inv = pl.reciprocal(e0 + e1, approx=True)   # EUP slot, ~free
    a0 = _mm(e0 * inv, poolT)       # (T, E): weight broadcast over head lanes
    a1 = _mm(e1 * inv, poolT)
    return a0 * v0 + a1 * v1


# ---------------------------------------------------------------------------
# The Pallas kernel: the whole Evolver.forward for one block of action rows.
# ---------------------------------------------------------------------------
def _make_kernel(search_mode):
    def kernel(states_ref, actions_ref, params_ref, out_ref):
        def g(name):
            off, r, c = PACK_LAYOUT[name]
            return params_ref[off:off + r, 0:c]

        states = states_ref[...]        # (1, 50)  -- n == 1 state row
        actions = actions_ref[...]      # (rows, 4)
        rows = actions.shape[0]

        player_health = states[:, 0:1]
        player_token = states[:, 1:1 + P]
        opp_health = states[:, HALF_DIM:HALF_DIM + 1]
        opp_token = states[:, HALF_DIM + 1:HALF_DIM + 1 + P]
        opp_passthrough = states[:, HALF_DIM + 1:]              # opp token + weapons

        # weapon tokens stacked along rows; player/opponent tokens stacked along rows
        WT = jnp.concatenate([states[:, 13:19], states[:, 19:25]], axis=0)   # (2, 6)
        P2 = jnp.concatenate([player_token, opp_token], axis=0)              # (2, 12)

        pool9, pool9T = g("pool9"), g("pool9T")
        pool6, pool6T = g("pool6"), g("pool6T")
        pool8, pool8T = g("pool8"), g("pool8T")

        # ================= state-only prologue (row-count independent) ========
        # weapon self + cross attention (output projections folded downstream)
        A = _mm(WT, g("w_x_w")) + g("w_x_b")            # (2, 36) = [Qs|Ks|Vs|Qc]
        KVp = _mm(P2, g("w_p_kv_w")) + g("w_p_kv_b")    # (2, 18) = [Kc|Vc]
        SA = _attn_over_2(A[:, 0:WE], A[:, WE:2 * WE], A[:, 2 * WE:3 * WE],
                          pool9, pool9T)                                    # (2, 9)
        CA = _attn_over_2(A[:, 3 * WE:4 * WE], KVp[:, 0:WE], KVp[:, WE:2 * WE],
                          pool9, pool9T)                                    # (2, 9)
        ST = (_mm(WT, g("wm1_wt")) + _mm(SA, g("wm1_sa")) + _mm(CA, g("wm1_ca"))
              + g("wm1_b"))                              # (2, 15) per weapon token
        st_w = jnp.concatenate([ST[0:1, :], ST[1:2, :]], axis=1)            # (1, 30)

        # player MLP state term
        st_p = _mm(player_token, g("pm1_tok")) + g("pm1_b")                 # (1, 15)

        # opponent-health attentions (output projections + 0.5 mean folded)
        q1 = _mm(opp_token, g("ohx_qw")) + g("ohx_qb")                      # (1, 6)
        KVx = _mm(WT, g("ohx_kv_w")) + g("ohx_kv_b")                        # (2, 12)
        cross = _attn_over_2(q1, KVx[:, 0:W], KVx[:, W:2 * W], pool6, pool6T)
        QKV2 = _mm(P2, g("psa_w")) + g("psa_b")                             # (2, 24)
        so = _attn_over_2(QKV2[:, 0:PSE], QKV2[:, PSE:2 * PSE],
                          QKV2[:, 2 * PSE:3 * PSE], pool8, pool8T)          # (2, 8)
        self_sum = so[0:1, :] + so[1:2, :]                                  # (1, 8)
        st_oh = (_mm(cross, g("oh1_cross")) + _mm(self_sum, g("oh1_self"))
                 + g("oh1_b"))                                              # (1, 10)

        # ================= per-row (action-dependent) path =====================
        act1 = _mm(actions, g("act1_w"))                 # (rows, 55) fused layer 1

        # weapon MLP (both weapon tokens via block-diag layer 2)
        h_w = jnp.maximum(act1[:, ACT_W0:ACT_PL] + st_w, 0.0)      # (rows, 30)
        o01 = _mm(h_w, g("wm2_bd")) + g("wm2_bd_b")                # (rows, 12)

        # player MLP
        h_p = jnp.maximum(act1[:, ACT_PL:ACT_OH] + st_p, 0.0)
        h_p = jnp.maximum(_mm(h_p, g("pm2_w")) + g("pm2_b"), 0.0)
        ptok = _mm(h_p, g("pm3_w")) + g("pm3_b")                   # (rows, 12)

        # opponent health MLP
        h_o = jnp.maximum(act1[:, ACT_OH:ACT_COLS] + st_oh, 0.0)
        h_o = jnp.maximum(_mm(h_o, g("oh2_w")) + g("oh2_b"), 0.0)
        oh_pred = opp_health + (_mm(h_o, g("oh3_w")) + g("oh3_b"))  # (rows, 1)

        if search_mode:
            ptok = jnp.concatenate(
                [ptok[:, :P - NUM_PLAYER_MODES],
                 _argmax_one_hot(ptok[:, P - NUM_PLAYER_MODES:])], axis=1)
            o01 = jnp.concatenate(
                [o01[:, 0:W - NUM_WEAPON_TYPES],
                 _argmax_one_hot(o01[:, W - NUM_WEAPON_TYPES:W]),
                 o01[:, W:2 * W - NUM_WEAPON_TYPES],
                 _argmax_one_hot(o01[:, 2 * W - NUM_WEAPON_TYPES:2 * W])], axis=1)

        # -------- assemble the full 50-lane row and store it ONCE ---------------
        out_ref[...] = jnp.concatenate(
            [jnp.broadcast_to(player_health, (rows, 1)),
             ptok,
             o01,
             oh_pred,
             jnp.broadcast_to(opp_passthrough, (rows, STATE_DIM - 26))], axis=1)

    return kernel


# ---------------------------------------------------------------------------
# Wrapper
# ---------------------------------------------------------------------------
MAX_BLOCK_ROWS = 2048   # knee of the tile sweep; VMEM per tile is only ~KBs
MIN_GRID_STEPS = 2      # let ("parallel",) shard rows over v7x's two TensorCores


def evolver_forward(states, actions, packed_params, *, misaligned_dims,
                    is_adversary_step, mode):
    assert mode in (SEARCH_MODE, BACKPROP_MODE)
    n, nb = states.shape[0], actions.shape[0]
    assert states.shape == (n, STATE_DIM)
    assert actions.shape == (nb, ACTION_DIM)
    assert misaligned_dims or nb == n
    assert nb % n == 0
    # TODO(synk): the reference's opponent_health_forward (cat with the 2-row
    # player pos embedding) is only well-formed for a single state row.
    assert n == 1, "kernel implemented for a single state row (n == 1)"
    assert packed_params.shape == (PACK_ROWS, PACK_W)

    states = jnp.asarray(states, jnp.float32)
    actions = jnp.asarray(actions, jnp.float32)

    # flip_state is a pure lane permute -> do it in XLA around the kernel.
    if is_adversary_step:
        states = jnp.concatenate([states[:, HALF_DIM:], states[:, :HALF_DIM]], axis=1)

    # Row tiling: 8-aligned tiles, capped at MAX_BLOCK_ROWS, and at least two
    # grid steps whenever there is enough work so both v7x TensorCores get rows.
    # Actions / output are zero-padded so every tile is full; padding is sliced
    # off afterwards (garbage rows never affect real rows).
    nb8 = _round_up(nb, 8)
    steps = max(pl.cdiv(nb8, MAX_BLOCK_ROWS), MIN_GRID_STEPS if nb8 >= 16 else 1)
    block_rows = _round_up(pl.cdiv(nb8, steps), 8)
    steps = pl.cdiv(nb8, block_rows)
    padded_nb = steps * block_rows
    if padded_nb != nb:
        actions = jnp.pad(actions, ((0, padded_nb - nb), (0, 0)))

    out = pl.pallas_call(
        _make_kernel(mode == SEARCH_MODE),
        out_shape=jax.ShapeDtypeStruct((padded_nb, STATE_DIM), jnp.float32),
        grid=(steps,),
        in_specs=[
            pl.BlockSpec((1, STATE_DIM), lambda i: (0, 0)),
            pl.BlockSpec((block_rows, ACTION_DIM), lambda i: (i, 0)),
            pl.BlockSpec((PACK_ROWS, PACK_W), lambda i: (0, 0)),
        ],
        out_specs=pl.BlockSpec((block_rows, STATE_DIM), lambda i: (i, 0)),
        compiler_params=pltpu.CompilerParams(dimension_semantics=("parallel",)),
    )(states, actions, packed_params)

    out = out[:nb]
    if is_adversary_step:
        out = jnp.concatenate([out[:, HALF_DIM:], out[:, :HALF_DIM]], axis=1)
    return out


def init_params(key):
    params = {}
    for i, (name, shape) in enumerate(PARAM_SPECS):
        k = jax.random.fold_in(key, i)
        params[name] = 0.2 * jax.random.normal(k, shape, dtype=jnp.float32)
    return params


# TODO(synk): loss(), weighted_L2_loss(), compute_*_loss() and
# extract_mutable_state() are training utilities, not part of forward();
# they are not implemented here.

if __name__ == "__main__":
    key = jax.random.PRNGKey(0)
    k_s1, k_a1, k_s2, k_a2 = jax.random.split(key, 4)

    params = init_params(jax.random.PRNGKey(1))
    packed = pack_params(params)      # fuse/fold once, single VMEM blob

    # Case 1: backprop mode, 1 state x 8 candidate actions (single tile).
    states = jax.random.normal(k_s1, (1, STATE_DIM), dtype=jnp.float32)
    actions = jax.random.normal(k_a1, (8, ACTION_DIM), dtype=jnp.float32)
    out = evolver_forward(states, actions, packed, misaligned_dims=True,
                          is_adversary_step=False, mode=BACKPROP_MODE)
    out = jax.block_until_ready(out)
    assert out.shape == (8, STATE_DIM) and out.dtype == jnp.float32
    assert bool(jnp.all(jnp.isfinite(out)))

    # Case 2: search mode + adversary flip, 24 actions -> padded 2-step grid.
    states2 = jax.random.normal(k_s2, (1, STATE_DIM), dtype=jnp.float32)
    actions2 = jax.random.normal(k_a2, (24, ACTION_DIM), dtype=jnp.float32)
    out2 = evolver_forward(states2, actions2, packed, misaligned_dims=True,
                           is_adversary_step=True, mode=SEARCH_MODE)
    out2 = jax.block_until_ready(out2)
    assert out2.shape == (24, STATE_DIM) and out2.dtype == jnp.float32
    assert bool(jnp.all(jnp.isfinite(out2)))

    print("KERNEL_OK")
</pallas_src>

<mosaic_0001>
module attributes {stable_mosaic.version = 11 : i64} {
  func.func @kernel(%arg0: i32, %arg1: memref<1x50xf32, #tpu.memory_space<vmem>>, %arg2: memref<8x4xf32, #tpu.memory_space<vmem>>, %arg3: memref<400x55xf32, #tpu.memory_space<vmem>>, %arg4: memref<8x50xf32, #tpu.memory_space<vmem>>) attributes {dimension_semantics = [#tpu.dimension_semantics<parallel>], iteration_bounds = array<i64: 1>, scalar_prefetch = 0 : i64, scratch_operands = 0 : i64, tpu.core_type = #tpu.core_type<tc>, window_params = [{pipeline_mode = #tpu.pipeline_mode<synchronous>, transform_indices = @transform_0, window_bounds = array<i64: 1, 50>}, {transform_indices = @transform_1, window_bounds = array<i64: 8, 4>}, {pipeline_mode = #tpu.pipeline_mode<synchronous>, transform_indices = @transform_2, window_bounds = array<i64: 400, 55>}, {transform_indices = @transform_3, window_bounds = array<i64: 8, 50>}]} {
    %c0 = arith.constant 0 : index
    %c0_0 = arith.constant 0 : index
    %0 = vector.load %arg1[%c0, %c0_0] : memref<1x50xf32, #tpu.memory_space<vmem>>, vector<1x50xf32>
    %c0_1 = arith.constant 0 : index
    %c0_2 = arith.constant 0 : index
    %1 = vector.load %arg2[%c0_1, %c0_2] : memref<8x4xf32, #tpu.memory_space<vmem>>, vector<8x4xf32>
    %2 = vector.extract_strided_slice %0 {offsets = [0, 0], sizes = [1, 1], strides = [1, 1]} : vector<1x50xf32> to vector<1x1xf32>
    %3 = vector.extract_strided_slice %0 {offsets = [0, 1], sizes = [1, 12], strides = [1, 1]} : vector<1x50xf32> to vector<1x12xf32>
    %4 = vector.extract_strided_slice %0 {offsets = [0, 25], sizes = [1, 1], strides = [1, 1]} : vector<1x50xf32> to vector<1x1xf32>
    %5 = vector.extract_strided_slice %0 {offsets = [0, 26], sizes = [1, 12], strides = [1, 1]} : vector<1x50xf32> to vector<1x12xf32>
    %6 = vector.extract_strided_slice %0 {offsets = [0, 26], sizes = [1, 24], strides = [1, 1]} : vector<1x50xf32> to vector<1x24xf32>
    %7 = vector.extract_strided_slice %0 {offsets = [0, 13], sizes = [1, 6], strides = [1, 1]} : vector<1x50xf32> to vector<1x6xf32>
    %8 = vector.extract_strided_slice %0 {offsets = [0, 19], sizes = [1, 6], strides = [1, 1]} : vector<1x50xf32> to vector<1x6xf32>
    %9 = tpu.concatenate %7, %8 in 0 : vector<1x6xf32>, vector<1x6xf32> -> vector<2x6xf32>
    %10 = tpu.concatenate %3, %5 in 0 : vector<1x12xf32>, vector<1x12xf32> -> vector<2x12xf32>
    %c40 = arith.constant 40 : index
    %c0_3 = arith.constant 0 : index
    %11 = vector.load %arg3[%c40, %c0_3] : memref<400x55xf32, #tpu.memory_space<vmem>>, vector<9x3xf32>
    %c56 = arith.constant 56 : index
    %c0_4 = arith.constant 0 : index
    %12 = vector.load %arg3[%c56, %c0_4] : memref<400x55xf32, #tpu.memory_space<vmem>>, vector<3x9xf32>
    %c64 = arith.constant 64 : index
    %c0_5 = arith.constant 0 : index
    %13 = vector.load %arg3[%c64, %c0_5] : memref<400x55xf32, #tpu.memory_space<vmem>>, vector<6x2xf32>
    %c72 = arith.constant 72 : index
    %c0_6 = arith.constant 0 : index
    %14 = vector.load %arg3[%c72, %c0_6] : memref<400x55xf32, #tpu.memory_space<vmem>>, vector<2x6xf32>
    %c80 = arith.constant 80 : index
    %c0_7 = arith.constant 0 : index
    %15 = vector.load %arg3[%c80, %c0_7] : memref<400x55xf32, #tpu.memory_space<vmem>>, vector<8x2xf32>
    %c88 = arith.constant 88 : index
    %c0_8 = arith.constant 0 : index
    %16 = vector.load %arg3[%c88, %c0_8] : memref<400x55xf32, #tpu.memory_space<vmem>>, vector<2x8xf32>
    %c0_9 = arith.constant 0 : index
    %c0_10 = arith.constant 0 : index
    %17 = vector.load %arg3[%c0_9, %c0_10] : memref<400x55xf32, #tpu.memory_space<vmem>>, vector<6x36xf32>
    %cst = arith.constant dense<0.000000e+00> : vector<2x36xf32>
    %18 = tpu.matmul %9, %17, %cst {dimension_numbers = #tpu.dot_dimension_numbers<[1], [0], [0], [1], [0, 0, 1, 1], [], []>} : vector<2x6xf32>, vector<6x36xf32>, vector<2x36xf32> -> vector<2x36xf32>
    %c8 = arith.constant 8 : index
    %c0_11 = arith.constant 0 : index
    %19 = vector.load %arg3[%c8, %c0_11] : memref<400x55xf32, #tpu.memory_space<vmem>>, vector<2x36xf32>
    %20 = arith.addf %18, %19 : vector<2x36xf32>
    %c16 = arith.constant 16 : index
    %c0_12 = arith.constant 0 : index
    %21 = vector.load %arg3[%c16, %c0_12] : memref<400x55xf32, #tpu.memory_space<vmem>>, vector<12x18xf32>
    %cst_13 = arith.constant dense<0.000000e+00> : vector<2x18xf32>
    %22 = tpu.matmul %10, %21, %cst_13 {dimension_numbers = #tpu.dot_dimension_numbers<[1], [0], [0], [1], [0, 0, 1, 1], [], []>} : vector<2x12xf32>, vector<12x18xf32>, vector<2x18xf32> -> vector<2x18xf32>
    %c32 = arith.constant 32 : index
    %c0_14 = arith.constant 0 : index
    %23 = vector.load %arg3[%c32, %c0_14] : memref<400x55xf32, #tpu.memory_space<vmem>>, vector<1x18xf32>
    %24 = vector.broadcast %23 : vector<1x18xf32> to vector<2x18xf32>
    %25 = arith.addf %22, %24 : vector<2x18xf32>
    %26 = vector.extract_strided_slice %20 {offsets = [0, 0], sizes = [2, 9], strides = [1, 1]} : vector<2x36xf32> to vector<2x9xf32>
    %27 = vector.extract_strided_slice %20 {offsets = [0, 9], sizes = [2, 9], strides = [1, 1]} : vector<2x36xf32> to vector<2x9xf32>
    %28 = vector.extract_strided_slice %20 {offsets = [0, 18], sizes = [2, 9], strides = [1, 1]} : vector<2x36xf32> to vector<2x9xf32>
    %29 = vector.extract_strided_slice %27 {offsets = [0, 0], sizes = [1, 9], strides = [1, 1]} : vector<2x9xf32> to vector<1x9xf32>
    %30 = vector.extract_strided_slice %27 {offsets = [1, 0], sizes = [1, 9], strides = [1, 1]} : vector<2x9xf32> to vector<1x9xf32>
    %31 = vector.extract_strided_slice %28 {offsets = [0, 0], sizes = [1, 9], strides = [1, 1]} : vector<2x9xf32> to vector<1x9xf32>
    %32 = vector.extract_strided_slice %28 {offsets = [1, 0], sizes = [1, 9], strides = [1, 1]} : vector<2x9xf32> to vector<1x9xf32>
    %33 = vector.broadcast %29 : vector<1x9xf32> to vector<2x9xf32>
    %34 = arith.mulf %26, %33 : vector<2x9xf32>
    %cst_15 = arith.constant dense<0.000000e+00> : vector<2x3xf32>
    %35 = tpu.matmul %34, %11, %cst_15 {dimension_numbers = #tpu.dot_dimension_numbers<[1], [0], [0], [1], [0, 0, 1, 1], [], []>} : vector<2x9xf32>, vector<9x3xf32>, vector<2x3xf32> -> vector<2x3xf32>
    %36 = vector.broadcast %30 : vector<1x9xf32> to vector<2x9xf32>
    %37 = arith.mulf %26, %36 : vector<2x9xf32>
    %cst_16 = arith.constant dense<0.000000e+00> : vector<2x3xf32>
    %38 = tpu.matmul %37, %11, %cst_16 {dimension_numbers = #tpu.dot_dimension_numbers<[1], [0], [0], [1], [0, 0, 1, 1], [], []>} : vector<2x9xf32>, vector<9x3xf32>, vector<2x3xf32> -> vector<2x3xf32>
    %39 = arith.maximumf %35, %38 : vector<2x3xf32>
    %40 = arith.subf %35, %39 : vector<2x3xf32>
    %41 = math.exp %40 : vector<2x3xf32>
    %42 = arith.subf %38, %39 : vector<2x3xf32>
    %43 = math.exp %42 : vector<2x3xf32>
    %44 = arith.addf %41, %43 : vector<2x3xf32>
    %45 = tpu.reciprocal %44 {approx = true} : vector<2x3xf32> -> vector<2x3xf32>
    %46 = arith.mulf %41, %45 : vector<2x3xf32>
    %cst_17 = arith.constant dense<0.000000e+00> : vector<2x9xf32>
    %47 = tpu.matmul %46, %12, %cst_17 {dimension_numbers = #tpu.dot_dimension_numbers<[1], [0], [0], [1], [0, 0, 1, 1], [], []>} : vector<2x3xf32>, vector<3x9xf32>, vector<2x9xf32> -> vector<2x9xf32>
    %48 = arith.mulf %43, %45 : vector<2x3xf32>
    %cst_18 = arith.constant dense<0.000000e+00> : vector<2x9xf32>
    %49 = tpu.matmul %48, %12, %cst_18 {dimension_numbers = #tpu.dot_dimension_numbers<[1], [0], [0], [1], [0, 0, 1, 1], [], []>} : vector<2x3xf32>, vector<3x9xf32>, vector<2x9xf32> -> vector<2x9xf32>
    %50 = vector.broadcast %31 : vector<1x9xf32> to vector<2x9xf32>
    %51 = arith.mulf %47, %50 : vector<2x9xf32>
    %52 = vector.broadcast %32 : vector<1x9xf32> to vector<2x9xf32>
    %53 = arith.mulf %49, %52 : vector<2x9xf32>
    %54 = arith.addf %51, %53 : vector<2x9xf32>
    %55 = vector.extract_strided_slice %20 {offsets = [0, 27], sizes = [2, 9], strides = [1, 1]} : vector<2x36xf32> to vector<2x9xf32>
    %56 = vector.extract_strided_slice %25 {offsets = [0, 0], sizes = [2, 9], strides = [1, 1]} : vector<2x18xf32> to vector<2x9xf32>
    %57 = vector.extract_strided_slice %25 {offsets = [0, 9], sizes = [2, 9], strides = [1, 1]} : vector<2x18xf32> to vector<2x9xf32>
    %58 = vector.extract_strided_slice %56 {offsets = [0, 0], sizes = [1, 9], strides = [1, 1]} : vector<2x9xf32> to vector<1x9xf32>
    %59 = vector.extract_strided_slice %56 {offsets = [1, 0], sizes = [1, 9], strides = [1, 1]} : vector<2x9xf32> to vector<1x9xf32>
    %60 = vector.extract_strided_slice %57 {offsets = [0, 0], sizes = [1, 9], strides = [1, 1]} : vector<2x9xf32> to vector<1x9xf32>
    %61 = vector.extract_strided_slice %57 {offsets = [1, 0], sizes = [1, 9], strides = [1, 1]} : vector<2x9xf32> to vector<1x9xf32>
    %62 = vector.broadcast %58 : vector<1x9xf32> to vector<2x9xf32>
    %63 = arith.mulf %55, %62 : vector<2x9xf32>
    %cst_19 = arith.constant dense<0.000000e+00> : vector<2x3xf32>
    %64 = tpu.matmul %63, %11, %cst_19 {dimension_numbers = #tpu.dot_dimension_numbers<[1], [0], [0], [1], [0, 0, 1, 1], [], []>} : vector<2x9xf32>, vector<9x3xf32>, vector<2x3xf32> -> vector<2x3xf32>
    %65 = vector.broadcast %59 : vector<1x9xf32> to vector<2x9xf32>
    %66 = arith.mulf %55, %65 : vector<2x9xf32>
    %cst_20 = arith.constant dense<0.000000e+00> : vector<2x3xf32>
    %67 = tpu.matmul %66, %11, %cst_20 {dimension_numbers = #tpu.dot_dimension_numbers<[1], [0], [0], [1], [0, 0, 1, 1], [], []>} : vector<2x9xf32>, vector<9x3xf32>, vector<2x3xf32> -> vector<2x3xf32>
    %68 = arith.maximumf %64, %67 : vector<2x3xf32>
    %69 = arith.subf %64, %68 : vector<2x3xf32>
    %70 = math.exp %69 : vector<2x3xf32>
    %71 = arith.subf %67, %68 : vector<2x3xf32>
    %72 = math.exp %71 : vector<2x3xf32>
    %73 = arith.addf %70, %72 : vector<2x3xf32>
    %74 = tpu.reciprocal %73 {approx = true} : vector<2x3xf32> -> vector<2x3xf32>
    %75 = arith.mulf %70, %74 : vector<2x3xf32>
    %cst_21 = arith.constant dense<0.000000e+00> : vector<2x9xf32>
    %76 = tpu.matmul %75, %12, %cst_21 {dimension_numbers = #tpu.dot_dimension_numbers<[1], [0], [0], [1], [0, 0, 1, 1], [], []>} : vector<2x3xf32>, vector<3x9xf32>, vector<2x9xf32> -> vector<2x9xf32>
    %77 = arith.mulf %72, %74 : vector<2x3xf32>
    %cst_22 = arith.constant dense<0.000000e+00> : vector<2x9xf32>
    %78 = tpu.matmul %77, %12, %cst_22 {dimension_numbers = #tpu.dot_dimension_numbers<[1], [0], [0], [1], [0, 0, 1, 1], [], []>} : vector<2x3xf32>, vector<3x9xf32>, vector<2x9xf32> -> vector<2x9xf32>
    %79 = vector.broadcast %60 : vector<1x9xf32> to vector<2x9xf32>
    %80 = arith.mulf %76, %79 : vector<2x9xf32>
    %81 = vector.broadcast %61 : vector<1x9xf32> to vector<2x9xf32>
    %82 = arith.mulf %78, %81 : vector<2x9xf32>
    %83 = arith.addf %80, %82 : vector<2x9xf32>
    %c96 = arith.constant 96 : index
    %c0_23 = arith.constant 0 : index
    %84 = vector.load %arg3[%c96, %c0_23] : memref<400x55xf32, #tpu.memory_space<vmem>>, vector<6x15xf32>
    %cst_24 = arith.constant dense<0.000000e+00> : vector<2x15xf32>
    %85 = tpu.matmul %9, %84, %cst_24 {dimension_numbers = #tpu.dot_dimension_numbers<[1], [0], [0], [1], [0, 0, 1, 1], [], []>} : vector<2x6xf32>, vector<6x15xf32>, vector<2x15xf32> -> vector<2x15xf32>
    %c104 = arith.constant 104 : index
    %c0_25 = arith.constant 0 : index
    %86 = vector.load %arg3[%c104, %c0_25] : memref<400x55xf32, #tpu.memory_space<vmem>>, vector<9x15xf32>
    %cst_26 = arith.constant dense<0.000000e+00> : vector<2x15xf32>
    %87 = tpu.matmul %54, %86, %cst_26 {dimension_numbers = #tpu.dot_dimension_numbers<[1], [0], [0], [1], [0, 0, 1, 1], [], []>} : vector<2x9xf32>, vector<9x15xf32>, vector<2x15xf32> -> vector<2x15xf32>
    %88 = arith.addf %85, %87 : vector<2x15xf32>
    %c120 = arith.constant 120 : index
    %c0_27 = arith.constant 0 : index
    %89 = vector.load %arg3[%c120, %c0_27] : memref<400x55xf32, #tpu.memory_space<vmem>>, vector<9x15xf32>
    %cst_28 = arith.constant dense<0.000000e+00> : vector<2x15xf32>
    %90 = tpu.matmul %83, %89, %cst_28 {dimension_numbers = #tpu.dot_dimension_numbers<[1], [0], [0], [1], [0, 0, 1, 1], [], []>} : vector<2x9xf32>, vector<9x15xf32>, vector<2x15xf32> -> vector<2x15xf32>
    %91 = arith.addf %88, %90 : vector<2x15xf32>
    %c136 = arith.constant 136 : index
    %c0_29 = arith.constant 0 : index
    %92 = vector.load %arg3[%c136, %c0_29] : memref<400x55xf32, #tpu.memory_space<vmem>>, vector<2x15xf32>
    %93 = arith.addf %91, %92 : vector<2x15xf32>
    %94 = vector.extract_strided_slice %93 {offsets = [0, 0], sizes = [1, 15], strides = [1, 1]} : vector<2x15xf32> to vector<1x15xf32>
    %95 = vector.extract_strided_slice %93 {offsets = [1, 0], sizes = [1, 15], strides = [1, 1]} : vector<2x15xf32> to vector<1x15xf32>
    %96 = tpu.concatenate %94, %95 in 1 : vector<1x15xf32>, vector<1x15xf32> -> vector<1x30xf32>
    %c192 = arith.constant 192 : index
    %c0_30 = arith.constant 0 : index
    %97 = vector.load %arg3[%c192, %c0_30] : memref<400x55xf32, #tpu.memory_space<vmem>>, vector<12x15xf32>
    %cst_31 = arith.constant dense<0.000000e+00> : vector<1x15xf32>
    %98 = tpu.matmul %3, %97, %cst_31 {dimension_numbers = #tpu.dot_dimension_numbers<[1], [0], [0], [1], [0, 0, 1, 1], [], []>} : vector<1x12xf32>, vector<12x15xf32>, vector<1x15xf32> -> vector<1x15xf32>
    %c208 = arith.constant 208 : index
    %c0_32 = arith.constant 0 : index
    %99 = vector.load %arg3[%c208, %c0_32] : memref<400x55xf32, #tpu.memory_space<vmem>>, vector<1x15xf32>
    %100 = arith.addf %98, %99 : vector<1x15xf32>
    %c264 = arith.constant 264 : index
    %c0_33 = arith.constant 0 : index
    %101 = vector.load %arg3[%c264, %c0_33] : memref<400x55xf32, #tpu.memory_space<vmem>>, vector<12x6xf32>
    %cst_34 = arith.constant dense<0.000000e+00> : vector<1x6xf32>
    %102 = tpu.matmul %5, %101, %cst_34 {dimension_numbers = #tpu.dot_dimension_numbers<[1], [0], [0], [1], [0, 0, 1, 1], [], []>} : vector<1x12xf32>, vector<12x6xf32>, vector<1x6xf32> -> vector<1x6xf32>
    %c280 = arith.constant 280 : index
    %c0_35 = arith.constant 0 : index
    %103 = vector.load %arg3[%c280, %c0_35] : memref<400x55xf32, #tpu.memory_space<vmem>>, vector<1x6xf32>
    %104 = arith.addf %102, %103 : vector<1x6xf32>
    %c288 = arith.constant 288 : index
    %c0_36 = arith.constant 0 : index
    %105 = vector.load %arg3[%c288, %c0_36] : memref<400x55xf32, #tpu.memory_space<vmem>>, vector<6x12xf32>
    %cst_37 = arith.constant dense<0.000000e+00> : vector<2x12xf32>
    %106 = tpu.matmul %9, %105, %cst_37 {dimension_numbers = #tpu.dot_dimension_numbers<[1], [0], [0], [1], [0, 0, 1, 1], [], []>} : vector<2x6xf32>, vector<6x12xf32>, vector<2x12xf32> -> vector<2x12xf32>
    %c296 = arith.constant 296 : index
    %c0_38 = arith.constant 0 : index
    %107 = vector.load %arg3[%c296, %c0_38] : memref<400x55xf32, #tpu.memory_space<vmem>>, vector<1x12xf32>
    %108 = vector.broadcast %107 : vector<1x12xf32> to vector<2x12xf32>
    %109 = arith.addf %106, %108 : vector<2x12xf32>
    %110 = vector.extract_strided_slice %109 {offsets = [0, 0], sizes = [2, 6], strides = [1, 1]} : vector<2x12xf32> to vector<2x6xf32>
    %111 = vector.extract_strided_slice %109 {offsets = [0, 6], sizes = [2, 6], strides = [1, 1]} : vector<2x12xf32> to vector<2x6xf32>
    %112 = vector.extract_strided_slice %110 {offsets = [0, 0], sizes = [1, 6], strides = [1, 1]} : vector<2x6xf32> to vector<1x6xf32>
    %113 = vector.extract_strided_slice %110 {offsets = [1, 0], sizes = [1, 6], strides = [1, 1]} : vector<2x6xf32> to vector<1x6xf32>
    %114 = vector.extract_strided_slice %111 {offsets = [0, 0], sizes = [1, 6], strides = [1, 1]} : vector<2x6xf32> to vector<1x6xf32>
    %115 = vector.extract_strided_slice %111 {offsets = [1, 0], sizes = [1, 6], strides = [1, 1]} : vector<2x6xf32> to vector<1x6xf32>
    %116 = arith.mulf %104, %112 : vector<1x6xf32>
    %cst_39 = arith.constant dense<0.000000e+00> : vector<1x2xf32>
    %117 = tpu.matmul %116, %13, %cst_39 {dimension_numbers = #tpu.dot_dimension_numbers<[1], [0], [0], [1], [0, 0, 1, 1], [], []>} : vector<1x6xf32>, vector<6x2xf32>, vector<1x2xf32> -> vector<1x2xf32>
    %118 = arith.mulf %104, %113 : vector<1x6xf32>
    %cst_40 = arith.constant dense<0.000000e+00> : vector<1x2xf32>
    %119 = tpu.matmul %118, %13, %cst_40 {dimension_numbers = #tpu.dot_dimension_numbers<[1], [0], [0], [1], [0, 0, 1, 1], [], []>} : vector<1x6xf32>, vector<6x2xf32>, vector<1x2xf32> -> vector<1x2xf32>
    %120 = arith.maximumf %117, %119 : vector<1x2xf32>
    %121 = arith.subf %117, %120 : vector<1x2xf32>
    %122 = math.exp %121 : vector<1x2xf32>
    %123 = arith.subf %119, %120 : vector<1x2xf32>
    %124 = math.exp %123 : vector<1x2xf32>
    %125 = arith.addf %122, %124 : vector<1x2xf32>
    %126 = tpu.reciprocal %125 {approx = true} : vector<1x2xf32> -> vector<1x2xf32>
    %127 = arith.mulf %122, %126 : vector<1x2xf32>
    %cst_41 = arith.constant dense<0.000000e+00> : vector<1x6xf32>
    %128 = tpu.matmul %127, %14, %cst_41 {dimension_numbers = #tpu.dot_dimension_numbers<[1], [0], [0], [1], [0, 0, 1, 1], [], []>} : vector<1x2xf32>, vector<2x6xf32>, vector<1x6xf32> -> vector<1x6xf32>
    %129 = arith.mulf %124, %126 : vector<1x2xf32>
    %cst_42 = arith.constant dense<0.000000e+00> : vector<1x6xf32>
    %130 = tpu.matmul %129, %14, %cst_42 {dimension_numbers = #tpu.dot_dimension_numbers<[1], [0], [0], [1], [0, 0, 1, 1], [], []>} : vector<1x2xf32>, vector<2x6xf32>, vector<1x6xf32> -> vector<1x6xf32>
    %131 = arith.mulf %128, %114 : vector<1x6xf32>
    %132 = arith.mulf %130, %115 : vector<1x6xf32>
    %133 = arith.addf %131, %132 : vector<1x6xf32>
    %c304 = arith.constant 304 : index
    %c0_43 = arith.constant 0 : index
    %134 = vector.load %arg3[%c304, %c0_43] : memref<400x55xf32, #tpu.memory_space<vmem>>, vector<12x24xf32>
    %cst_44 = arith.constant dense<0.000000e+00> : vector<2x24xf32>
    %135 = tpu.matmul %10, %134, %cst_44 {dimension_numbers = #tpu.dot_dimension_numbers<[1], [0], [0], [1], [0, 0, 1, 1], [], []>} : vector<2x12xf32>, vector<12x24xf32>, vector<2x24xf32> -> vector<2x24xf32>
    %c320 = arith.constant 320 : index
    %c0_45 = arith.constant 0 : index
    %136 = vector.load %arg3[%c320, %c0_45] : memref<400x55xf32, #tpu.memory_space<vmem>>, vector<2x24xf32>
    %137 = arith.addf %135, %136 : vector<2x24xf32>
    %138 = vector.extract_strided_slice %137 {offsets = [0, 0], sizes = [2, 8], strides = [1, 1]} : vector<2x24xf32> to vector<2x8xf32>
    %139 = vector.extract_strided_slice %137 {offsets = [0, 8], sizes = [2, 8], strides = [1, 1]} : vector<2x24xf32> to vector<2x8xf32>
    %140 = vector.extract_strided_slice %137 {offsets = [0, 16], sizes = [2, 8], strides = [1, 1]} : vector<2x24xf32> to vector<2x8xf32>
    %141 = vector.extract_strided_slice %139 {offsets = [0, 0], sizes = [1, 8], strides = [1, 1]} : vector<2x8xf32> to vector<1x8xf32>
    %142 = vector.extract_strided_slice %139 {offsets = [1, 0], sizes = [1, 8], strides = [1, 1]} : vector<2x8xf32> to vector<1x8xf32>
    %143 = vector.extract_strided_slice %140 {offsets = [0, 0], sizes = [1, 8], strides = [1, 1]} : vector<2x8xf32> to vector<1x8xf32>
    %144 = vector.extract_strided_slice %140 {offsets = [1, 0], sizes = [1, 8], strides = [1, 1]} : vector<2x8xf32> to vector<1x8xf32>
    %145 = vector.broadcast %141 : vector<1x8xf32> to vector<2x8xf32>
    %146 = arith.mulf %138, %145 : vector<2x8xf32>
    %cst_46 = arith.constant dense<0.000000e+00> : vector<2x2xf32>
    %147 = tpu.matmul %146, %15, %cst_46 {dimension_numbers = #tpu.dot_dimension_numbers<[1], [0], [0], [1], [0, 0, 1, 1], [], []>} : vector<2x8xf32>, vector<8x2xf32>, vector<2x2xf32> -> vector<2x2xf32>
    %148 = vector.broadcast %142 : vector<1x8xf32> to vector<2x8xf32>
    %149 = arith.mulf %138, %148 : vector<2x8xf32>
    %cst_47 = arith.constant dense<0.000000e+00> : vector<2x2xf32>
    %150 = tpu.matmul %149, %15, %cst_47 {dimension_numbers = #tpu.dot_dimension_numbers<[1], [0], [0], [1], [0, 0, 1, 1], [], []>} : vector<2x8xf32>, vector<8x2xf32>, vector<2x2xf32> -> vector<2x2xf32>
    %151 = arith.maximumf %147, %150 : vector<2x2xf32>
    %152 = arith.subf %147, %151 : vector<2x2xf32>
    %153 = math.exp %152 : vector<2x2xf32>
    %154 = arith.subf %150, %151 : vector<2x2xf32>
    %155 = math.exp %154 : vector<2x2xf32>
    %156 = arith.addf %153, %155 : vector<2x2xf32>
    %157 = tpu.reciprocal %156 {approx = true} : vector<2x2xf32> -> vector<2x2xf32>
    %158 = arith.mulf %153, %157 : vector<2x2xf32>
    %cst_48 = arith.constant dense<0.000000e+00> : vector<2x8xf32>
    %159 = tpu.matmul %158, %16, %cst_48 {dimension_numbers = #tpu.dot_dimension_numbers<[1], [0], [0], [1], [0, 0, 1, 1], [], []>} : vector<2x2xf32>, vector<2x8xf32>, vector<2x8xf32> -> vector<2x8xf32>
    %160 = arith.mulf %155, %157 : vector<2x2xf32>
    %cst_49 = arith.constant dense<0.000000e+00> : vector<2x8xf32>
    %161 = tpu.matmul %160, %16, %cst_49 {dimension_numbers = #tpu.dot_dimension_numbers<[1], [0], [0], [1], [0, 0, 1, 1], [], []>} : vector<2x2xf32>, vector<2x8xf32>, vector<2x8xf32> -> vector<2x8xf32>
    %162 = vector.broadcast %143 : vector<1x8xf32> to vector<2x8xf32>
    %163 = arith.mulf %159, %162 : vector<2x8xf32>
    %164 = vector.broadcast %144 : vector<1x8xf32> to vector<2x8xf32>
    %165 = arith.mulf %161, %164 : vector<2x8xf32>
    %166 = arith.addf %163, %165 : vector<2x8xf32>
    %167 = vector.extract_strided_slice %166 {offsets = [0, 0], sizes = [1, 8], strides = [1, 1]} : vector<2x8xf32> to vector<1x8xf32>
    %168 = vector.extract_strided_slice %166 {offsets = [1, 0], sizes = [1, 8], strides = [1, 1]} : vector<2x8xf32> to vector<1x8xf32>
    %169 = arith.addf %167, %168 : vector<1x8xf32>
    %c328 = arith.constant 328 : index
    %c0_50 = arith.constant 0 : index
    %170 = vector.load %arg3[%c328, %c0_50] : memref<400x55xf32, #tpu.memory_space<vmem>>, vector<6x10xf32>
    %cst_51 = arith.constant dense<0.000000e+00> : vector<1x10xf32>
    %171 = tpu.matmul %133, %170, %cst_51 {dimension_numbers = #tpu.dot_dimension_numbers<[1], [0], [0], [1], [0, 0, 1, 1], [], []>} : vector<1x6xf32>, vector<6x10xf32>, vector<1x10xf32> -> vector<1x10xf32>
    %c336 = arith.constant 336 : index
    %c0_52 = arith.constant 0 : index
    %172 = vector.load %arg3[%c336, %c0_52] : memref<400x55xf32, #tpu.memory_space<vmem>>, vector<8x10xf32>
    %cst_53 = arith.constant dense<0.000000e+00> : vector<1x10xf32>
    %173 = tpu.matmul %169, %172, %cst_53 {dimension_numbers = #tpu.dot_dimension_numbers<[1], [0], [0], [1], [0, 0, 1, 1], [], []>} : vector<1x8xf32>, vector<8x10xf32>, vector<1x10xf32> -> vector<1x10xf32>
    %174 = arith.addf %171, %173 : vector<1x10xf32>
    %c344 = arith.constant 344 : index
    %c0_54 = arith.constant 0 : index
    %175 = vector.load %arg3[%c344, %c0_54] : memref<400x55xf32, #tpu.memory_space<vmem>>, vector<1x10xf32>
    %176 = arith.addf %174, %175 : vector<1x10xf32>
    %c144 = arith.constant 144 : index
    %c0_55 = arith.constant 0 : index
    %177 = vector.load %arg3[%c144, %c0_55] : memref<400x55xf32, #tpu.memory_space<vmem>>, vector<4x55xf32>
    %cst_56 = arith.constant dense<0.000000e+00> : vector<8x55xf32>
    %178 = tpu.matmul %1, %177, %cst_56 {dimension_numbers = #tpu.dot_dimension_numbers<[1], [0], [0], [1], [0, 0, 1, 1], [], []>} : vector<8x4xf32>, vector<4x55xf32>, vector<8x55xf32> -> vector<8x55xf32>
    %179 = vector.extract_strided_slice %178 {offsets = [0, 0], sizes = [8, 30], strides = [1, 1]} : vector<8x55xf32> to vector<8x30xf32>
    %180 = vector.broadcast %96 : vector<1x30xf32> to vector<8x30xf32>
    %181 = arith.addf %179, %180 : vector<8x30xf32>
    %cst_57 = arith.constant 0.000000e+00 : f32
    %182 = vector.broadcast %cst_57 : f32 to vector<8x30xf32>
    %183 = arith.maximumf %181, %182 : vector<8x30xf32>
    %c152 = arith.constant 152 : index
    %c0_58 = arith.constant 0 : index
    %184 = vector.load %arg3[%c152, %c0_58] : memref<400x55xf32, #tpu.memory_space<vmem>>, vector<30x12xf32>
    %cst_59 = arith.constant dense<0.000000e+00> : vector<8x12xf32>
    %185 = tpu.matmul %183, %184, %cst_59 {dimension_numbers = #tpu.dot_dimension_numbers<[1], [0], [0], [1], [0, 0, 1, 1], [], []>} : vector<8x30xf32>, vector<30x12xf32>, vector<8x12xf32> -> vector<8x12xf32>
    %c184 = arith.constant 184 : index
    %c0_60 = arith.constant 0 : index
    %186 = vector.load %arg3[%c184, %c0_60] : memref<400x55xf32, #tpu.memory_space<vmem>>, vector<1x12xf32>
    %187 = vector.broadcast %186 : vector<1x12xf32> to vector<8x12xf32>
    %188 = arith.addf %185, %187 : vector<8x12xf32>
    %189 = vector.extract_strided_slice %178 {offsets = [0, 30], sizes = [8, 15], strides = [1, 1]} : vector<8x55xf32> to vector<8x15xf32>
    %190 = vector.broadcast %100 : vector<1x15xf32> to vector<8x15xf32>
    %191 = arith.addf %189, %190 : vector<8x15xf32>
    %cst_61 = arith.constant 0.000000e+00 : f32
    %192 = vector.broadcast %cst_61 : f32 to vector<8x15xf32>
    %193 = arith.maximumf %191, %192 : vector<8x15xf32>
    %c216 = arith.constant 216 : index
    %c0_62 = arith.constant 0 : index
    %194 = vector.load %arg3[%c216, %c0_62] : memref<400x55xf32, #tpu.memory_space<vmem>>, vector<15x12xf32>
    %cst_63 = arith.constant dense<0.000000e+00> : vector<8x12xf32>
    %195 = tpu.matmul %193, %194, %cst_63 {dimension_numbers = #tpu.dot_dimension_numbers<[1], [0], [0], [1], [0, 0, 1, 1], [], []>} : vector<8x15xf32>, vector<15x12xf32>, vector<8x12xf32> -> vector<8x12xf32>
    %c232 = arith.constant 232 : index
    %c0_64 = arith.constant 0 : index
    %196 = vector.load %arg3[%c232, %c0_64] : memref<400x55xf32, #tpu.memory_space<vmem>>, vector<1x12xf32>
    %197 = vector.broadcast %196 : vector<1x12xf32> to vector<8x12xf32>
    %198 = arith.addf %195, %197 : vector<8x12xf32>
    %cst_65 = arith.constant 0.000000e+00 : f32
    %199 = vector.broadcast %cst_65 : f32 to vector<8x12xf32>
    %200 = arith.maximumf %198, %199 : vector<8x12xf32>
    %c240 = arith.constant 240 : index
    %c0_66 = arith.constant 0 : index
    %201 = vector.load %arg3[%c240, %c0_66] : memref<400x55xf32, #tpu.memory_space<vmem>>, vector<12x12xf32>
    %cst_67 = arith.constant dense<0.000000e+00> : vector<8x12xf32>
    %202 = tpu.matmul %200, %201, %cst_67 {dimension_numbers = #tpu.dot_dimension_numbers<[1], [0], [0], [1], [0, 0, 1, 1], [], []>} : vector<8x12xf32>, vector<12x12xf32>, vector<8x12xf32> -> vector<8x12xf32>
    %c256 = arith.constant 256 : index
    %c0_68 = arith.constant 0 : index
    %203 = vector.load %arg3[%c256, %c0_68] : memref<400x55xf32, #tpu.memory_space<vmem>>, vector<1x12xf32>
    %204 = vector.broadcast %203 : vector<1x12xf32> to vector<8x12xf32>
    %205 = arith.addf %202, %204 : vector<8x12xf32>
    %206 = vector.extract_strided_slice %178 {offsets = [0, 45], sizes = [8, 10], strides = [1, 1]} : vector<8x55xf32> to vector<8x10xf32>
    %207 = vector.broadcast %176 : vector<1x10xf32> to vector<8x10xf32>
    %208 = arith.addf %206, %207 : vector<8x10xf32>
    %cst_69 = arith.constant 0.000000e+00 : f32
    %209 = vector.broadcast %cst_69 : f32 to vector<8x10xf32>
    %210 = arith.maximumf %208, %209 : vector<8x10xf32>
    %c352 = arith.constant 352 : index
    %c0_70 = arith.constant 0 : index
    %211 = vector.load %arg3[%c352, %c0_70] : memref<400x55xf32, #tpu.memory_space<vmem>>, vector<10x10xf32>
    %cst_71 = arith.constant dense<0.000000e+00> : vector<8x10xf32>
    %212 = tpu.matmul %210, %211, %cst_71 {dimension_numbers = #tpu.dot_dimension_numbers<[1], [0], [0], [1], [0, 0, 1, 1], [], []>} : vector<8x10xf32>, vector<10x10xf32>, vector<8x10xf32> -> vector<8x10xf32>
    %c368 = arith.constant 368 : index
    %c0_72 = arith.constant 0 : index
    %213 = vector.load %arg3[%c368, %c0_72] : memref<400x55xf32, #tpu.memory_space<vmem>>, vector<1x10xf32>
    %214 = vector.broadcast %213 : vector<1x10xf32> to vector<8x10xf32>
    %215 = arith.addf %212, %214 : vector<8x10xf32>
    %cst_73 = arith.constant 0.000000e+00 : f32
    %216 = vector.broadcast %cst_73 : f32 to vector<8x10xf32>
    %217 = arith.maximumf %215, %216 : vector<8x10xf32>
    %c376 = arith.constant 376 : index
    %c0_74 = arith.constant 0 : index
    %218 = vector.load %arg3[%c376, %c0_74] : memref<400x55xf32, #tpu.memory_space<vmem>>, vector<10x1xf32>
    %cst_75 = arith.constant dense<0.000000e+00> : vector<8x1xf32>
    %219 = tpu.matmul %217, %218, %cst_75 {dimension_numbers = #tpu.dot_dimension_numbers<[1], [0], [0], [1], [0, 0, 1, 1], [], []>} : vector<8x10xf32>, vector<10x1xf32>, vector<8x1xf32> -> vector<8x1xf32>
    %c392 = arith.constant 392 : index
    %c0_76 = arith.constant 0 : index
    %220 = vector.load %arg3[%c392, %c0_76] : memref<400x55xf32, #tpu.memory_space<vmem>>, vector<1x1xf32>
    %221 = vector.broadcast %220 : vector<1x1xf32> to vector<8x1xf32>
    %222 = arith.addf %219, %221 : vector<8x1xf32>
    %223 = vector.broadcast %4 : vector<1x1xf32> to vector<8x1xf32>
    %224 = arith.addf %223, %222 : vector<8x1xf32>
    %225 = vector.shape_cast %2 : vector<1x1xf32> to vector<1x1xf32>
    %226 = vector.broadcast %225 : vector<1x1xf32> to vector<8x1xf32>
    %227 = vector.shape_cast %6 : vector<1x24xf32> to vector<1x24xf32>
    %228 = vector.broadcast %227 : vector<1x24xf32> to vector<8x24xf32>
    %229 = tpu.concatenate %226, %205, %188, %224, %228 in 1 : vector<8x1xf32>, vector<8x12xf32>, vector<8x12xf32>, vector<8x1xf32>, vector<8x24xf32> -> vector<8x50xf32>
    %c0_77 = arith.constant 0 : index
    %c0_78 = arith.constant 0 : index
    %230 = vector.load %arg4[%c0_77, %c0_78] : memref<8x50xf32, #tpu.memory_space<vmem>>, vector<8x50xf32>
    tpu.vector_store %arg4[%c0_77, %c0_78], %229 {strides = array<i32>} : memref<8x50xf32, #tpu.memory_space<vmem>>, vector<8x50xf32>,
    return
  }
  func.func @transform_0(%arg0: i32) -> (i32, i32) {
    %c0_i32 = arith.constant 0 : i32
    %c0_i32_0 = arith.constant 0 : i32
    %c0_i32_1 = arith.constant 0 : i32
    return %c0_i32, %c0_i32_0 : i32, i32
  }
  func.func @transform_1(%arg0: i32) -> (i32, i32) {
    %c0_i32 = arith.constant 0 : i32
    %c0_i32_0 = arith.constant 0 : i32
    return %arg0, %c0_i32 : i32, i32
  }
  func.func @transform_2(%arg0: i32) -> (i32, i32) {
    %c0_i32 = arith.constant 0 : i32
    %c0_i32_0 = arith.constant 0 : i32
    %c0_i32_1 = arith.constant 0 : i32
    return %c0_i32, %c0_i32_0 : i32, i32
  }
  func.func @transform_3(%arg0: i32) -> (i32, i32) {
    %c0_i32 = arith.constant 0 : i32
    %c0_i32_0 = arith.constant 0 : i32
    return %arg0, %c0_i32 : i32, i32
  }
}

</mosaic_0001>

<llo_original>
// kernel: tpu_custom_call.1
$region0: #{tpu_custom_call.1}
  #allocation0 [shape = 'u32[]', space=smem, size = 0x4, offset = 0x4, fixed_abs, tag = 'smem constant byte address 0x4 - core index']
  #allocation1 [shape = 'u32[144,128]{1,0:T(1,128)}', space=vmem, size = 0x12000, scoped, tag = 'internal scratch']
  %s0 = inlined_call_operand.vmem [shape: f32[1,50], index: 0, kind: input, shape index: {}]
  %s1 = inlined_call_operand.vmem [shape: f32[8,4], index: 1, kind: input, shape index: {}]
  %s2 = inlined_call_operand.vmem [shape: f32[400,55], index: 2, kind: input, shape index: {}]
  %s3 = inlined_call_operand.hbm [shape: f32[8,50], index: 3, kind: output, shape index: {}]
  %s4 = sld [smem:[#allocation0]]
  $region22: #{tpu_custom_call.1} parent=0
    _
  %s6 = ssub.s32 1, %s4
  %s7 = scalar_select 0, %s6, %s4
  $region1: #{tpu_custom_call.1} parent=0
    #allocation2 [shape = 'u8[4096]{0}', space=vmem, size = 0x1000, scoped, tag = 'output window, operand 0, single buffered']
    #allocation3 [shape = 's32[1]{0}', space=sflag, size = 0x4, scoped, tag = 'scoped memory for tpu_custom_call.1']
    %8 = vsyncpa [#allocation3], 0
    // Predicated region
    $region2: #{tpu_custom_call.1} parent=1 // pred_check
      _
    $region3: #{tpu_custom_call.1} parent=1 // pred_check_branch
      %10 = sbr.rel (0) target = $region5
    $region4: #{tpu_custom_call.1} parent=1 // pred_region
      _
    $region5: #{tpu_custom_call.1} parent=1 // pred_fallthru
      _
    // Predicated region
    $region6: #{tpu_custom_call.1} parent=1 // pred_check
      _
    $region7: #{tpu_custom_call.1} parent=1 // pred_check_branch
      %12 = sbr.rel (0) target = $region9
    $region8: #{tpu_custom_call.1} parent=1 // pred_region
      _
    $region9: #{tpu_custom_call.1} parent=1 // pred_fallthru
      _
    // Predicated region
    $region10: #{tpu_custom_call.1} parent=1 // pred_check
      _
    $region11: #{tpu_custom_call.1} parent=1 // pred_check_branch
      %14 = sbr.rel (0) target = $region13
    $region12: #{tpu_custom_call.1} parent=1 // pred_region
      _
    $region13: #{tpu_custom_call.1} parent=1 // pred_fallthru
      _
    %v15 = vld [vmem:[%s0] sm:$0x1]
    %v16 = vld [vmem:[%s1] sm:$0xff]
    %v18 = vlaneseq
    %v19 = vshrl.u32 %v18, 7
    %v20 = vsub.s32 0, %v19
    %v21 = vrot.slane %v15, %v20
    %22 = vrot.lane.b32.xlu0 %v21, 122
    %v23 = vpop.permute.xlu0 %22
    %vm25 = vcmask 1040384
    %v26 = vsel %vm25, %v15, %v23
    %27 = vrot.lane.b32.xlu0 %v21, 103
    %v28 = vpop.permute.xlu0 %27
    %v30 = vsel %vm25, %v15, %v28
    %v31 = vld [vmem:[%s2 + $0x28] sm:$0xff]
    %v32 = vld [vmem:[%s2 + $0x30] sm:$0x1]
    %v33 = vld [vmem:[%s2 + $0x38] sm:$0x7]
    %v34 = vld [vmem:[%s2 + $0x40] sm:$0x3f]
    %v35 = vld [vmem:[%s2 + $0x48] sm:$0x3]
    %v36 = vld [vmem:[%s2 + $0x50] sm:$0xff]
    %v37 = vld [vmem:[%s2 + $0x58] sm:$0x3]
    %v38 = vld [vmem:[%s2] sm:$0x3f]
    %v39 = vld [vmem:[%s2 + $0x8] sm:$0x3]
    %41 = vrot.lane.b32.xlu0 %v26, 115
    %v42 = vpop.permute.xlu0 %41
    %vm43 = vcmask 48128
    %v44 = vsel %vm43, %v42, 0
    %vm46 = vcmask 1045504
    %v48 = vsel %vm46, %v38, 0
    %50 = vmatprep.subr.mxu0 0.0
    %51 = vmatpush1.msra.mxu0 %v48
    %52 = vmatprep.subr.mxu0 0.0
    %53 = vmatpush1.msra.mxu0 0.0
    %54 = vmatprep.subr.mxu0 0.0
    %55 = vmatpush1.msra.mxu0 0.0
    %56 = vmatprep.subr.mxu0 0.0
    %57 = vmatpush1.msra.mxu0 0.0
    %58 = vmatprep.subr.mxu0 0.0
    %59 = vmatpush1.msra.mxu0 0.0
    %60 = vmatprep.subr.mxu0 0.0
    %61 = vmatpush1.msra.mxu0 0.0
    %62 = vmatprep.subr.mxu0 0.0
    %63 = vmatpush1.msra.mxu0 0.0
    %64 = vmatprep.subr.mxu0 0.0
    %65 = vmatpush1.msra.mxu0 0.0
    %66 = vmatprep.subr.mxu0 0.0
    %67 = vmatpush1.msra.mxu0 0.0
    %68 = vmatprep.subr.mxu0 0.0
    %69 = vmatpush1.msra.mxu0 0.0
    %70 = vmatprep.subr.mxu0 0.0
    %71 = vmatpush1.msra.mxu0 0.0
    %72 = vmatprep.subr.mxu0 0.0
    %73 = vmatpush1.msra.mxu0 0.0
    %74 = vmatprep.subr.mxu0 0.0
    %75 = vmatpush1.msra.mxu0 0.0
    %76 = vmatprep.subr.mxu0 0.0
    %77 = vmatpush1.msra.mxu0 0.0
    %78 = vmatprep.subr.mxu0 0.0
    %79 = vmatpush1.msra.mxu0 0.0
    %80 = vmatprep.subr.mxu0 0.0
    %81 = vmatpush1.msra.mxu0 0.0
    %82 = vmatprep.subr.mxu0 0.0
    %83 = vmatpush1.msra.mxu0 0.0
    %84 = vmatprep.subr.mxu0 0.0
    %85 = vmatpush1.msra.mxu0 0.0
    %86 = vmatprep.subr.mxu0 0.0
    %87 = vmatpush1.msra.mxu0 0.0
    %88 = vmatprep.subr.mxu0 0.0
    %89 = vmatpush1.msra.mxu0 0.0
    %90 = vmatprep.subr.mxu0 0.0
    %91 = vmatpush1.msra.mxu0 0.0
    %92 = vmatprep.subr.mxu0 0.0
    %93 = vmatpush1.msra.mxu0 0.0
    %94 = vmatprep.subr.mxu0 0.0
    %95 = vmatpush1.msra.mxu0 0.0
    %96 = vmatprep.subr.mxu0 0.0
    %97 = vmatpush1.msra.mxu0 0.0
    %98 = vmatprep.subr.mxu0 0.0
    %99 = vmatpush1.msra.mxu0 0.0
    %100 = vmatprep.subr.mxu0 0.0
    %101 = vmatpush1.msra.mxu0 0.0
    %102 = vmatprep.subr.mxu0 0.0
    %103 = vmatpush1.msra.mxu0 0.0
    %104 = vmatprep.subr.mxu0 0.0
    %105 = vmatpush1.msra.mxu0 0.0
    %106 = vmatprep.subr.mxu0 0.0
    %107 = vmatpush1.msra.mxu0 0.0
    %108 = vmatprep.subr.mxu0 0.0
    %109 = vmatpush1.msra.mxu0 0.0
    %110 = vmatprep.subr.mxu0 0.0
    %111 = vmatpush1.msra.mxu0 0.0
    %112 = vmatprep.subr.mxu0 0.0
    %113 = vmatpush1.msra.mxu0 0.0
    %114 = vmatprep.mubr.f32.mxu0 0.0
    %115 = vmatmul.mubr.f32.gmra.mrb[0].mxu0 %v44
    %v116 = vpop.f32.mrb[0].mxu0
    %v117 = vadd.f32 %v39, %v116
    %v118 = vpop.f32.mrb[0].mxu0
    %119 = vdwg.mxu0
    %v120 = vld [vmem:[%s2 + $0x10] sm:$0xff]
    %v121 = vld [vmem:[%s2 + $0x18] sm:$0xf]
    %v122 = vld [vmem:[%s2 + $0x20] sm:$0x1]
    %v123 = vlaneseq
    %v124 = vshrl.u32 %v123, 7
    %v125 = vsub.s32 0, %v124
    %v126 = vrot.slane %v122, %v125
    %128 = vrot.lane.b32.xlu0 %v30, 127
    %v129 = vpop.permute.xlu0 %128
    %vm130 = vcmask 97280
    %v131 = vsel %vm130, %v129, 0
    %vm133 = vcmask 1043456
    %v135 = vsel %vm133, %v121, 0
    %137 = vmatprep.subr.mxu0 0.0
    %138 = vmatpush1.msra.mxu0 %v120
    %139 = vmatprep.subr.mxu0 0.0
    %140 = vmatpush1.msra.mxu0 %v135
    %141 = vmatprep.subr.mxu0 0.0
    %142 = vmatpush1.msra.mxu0 0.0
    %143 = vmatprep.subr.mxu0 0.0
    %144 = vmatpush1.msra.mxu0 0.0
    %145 = vmatprep.subr.mxu0 0.0
    %146 = vmatpush1.msra.mxu0 0.0
    %147 = vmatprep.subr.mxu0 0.0
    %148 = vmatpush1.msra.mxu0 0.0
    %149 = vmatprep.subr.mxu0 0.0
    %150 = vmatpush1.msra.mxu0 0.0
    %151 = vmatprep.subr.mxu0 0.0
    %152 = vmatpush1.msra.mxu0 0.0
    %153 = vmatprep.subr.mxu0 0.0
    %154 = vmatpush1.msra.mxu0 0.0
    %155 = vmatprep.subr.mxu0 0.0
    %156 = vmatpush1.msra.mxu0 0.0
    %157 = vmatprep.subr.mxu0 0.0
    %158 = vmatpush1.msra.mxu0 0.0
    %159 = vmatprep.subr.mxu0 0.0
    %160 = vmatpush1.msra.mxu0 0.0
    %161 = vmatprep.subr.mxu0 0.0
    %162 = vmatpush1.msra.mxu0 0.0
    %163 = vmatprep.subr.mxu0 0.0
    %164 = vmatpush1.msra.mxu0 0.0
    %165 = vmatprep.subr.mxu0 0.0
    %166 = vmatpush1.msra.mxu0 0.0
    %167 = vmatprep.subr.mxu0 0.0
    %168 = vmatpush1.msra.mxu0 0.0
    %169 = vmatprep.subr.mxu0 0.0
    %170 = vmatpush1.msra.mxu0 0.0
    %171 = vmatprep.subr.mxu0 0.0
    %172 = vmatpush1.msra.mxu0 0.0
    %173 = vmatprep.subr.mxu0 0.0
    %174 = vmatpush1.msra.mxu0 0.0
    %175 = vmatprep.subr.mxu0 0.0
    %176 = vmatpush1.msra.mxu0 0.0
    %177 = vmatprep.subr.mxu0 0.0
    %178 = vmatpush1.msra.mxu0 0.0
    %179 = vmatprep.subr.mxu0 0.0
    %180 = vmatpush1.msra.mxu0 0.0
    %181 = vmatprep.subr.mxu0 0.0
    %182 = vmatpush1.msra.mxu0 0.0
    %183 = vmatprep.subr.mxu0 0.0
    %184 = vmatpush1.msra.mxu0 0.0
    %185 = vmatprep.subr.mxu0 0.0
    %186 = vmatpush1.msra.mxu0 0.0
    %187 = vmatprep.subr.mxu0 0.0
    %188 = vmatpush1.msra.mxu0 0.0
    %189 = vmatprep.subr.mxu0 0.0
    %190 = vmatpush1.msra.mxu0 0.0
    %191 = vmatprep.subr.mxu0 0.0
    %192 = vmatpush1.msra.mxu0 0.0
    %193 = vmatprep.subr.mxu0 0.0
    %194 = vmatpush1.msra.mxu0 0.0
    %195 = vmatprep.subr.mxu0 0.0
    %196 = vmatpush1.msra.mxu0 0.0
    %197 = vmatprep.subr.mxu0 0.0
    %198 = vmatpush1.msra.mxu0 0.0
    %199 = vmatprep.subr.mxu0 0.0
    %200 = vmatpush1.msra.mxu0 0.0
    %201 = vmatprep.mubr.f32.mxu0 0.0
    %202 = vmatmul.mubr.f32.gmra.mrb[0].mxu0 %v131
    %v203 = vpop.f32.mrb[0].mxu0
    %v204 = vadd.f32 %v126, %v203
    %v205 = vpop.f32.mrb[0].mxu0
    %206 = vdwg.mxu0
    %v207 = vlaneseq
    %v208 = vshrl.u32 %v207, 7
    %v209 = vsub.s32 0, %v208
    %v210 = vrot.slane %v117, %v209
    %212 = vrot.lane.b32.xlu0 %v210, 119
    %v213 = vpop.permute.xlu0 %212
    %v215 = vmul.f32 %v117, %v213
    %vm216 = vcmask 72704
    %v218 = vsel %vm216, %v215, 0
    %v221 = vsel %vm25, %v32, 0
    %223 = vmatprep.subr.mxu0 0.0
    %224 = vmatpush1.msra.mxu0 %v31
    %225 = vmatprep.subr.mxu0 0.0
    %226 = vmatpush1.msra.mxu0 %v221
    %227 = vmatprep.subr.mxu0 0.0
    %228 = vmatpush1.msra.mxu0 0.0
    %229 = vmatprep.subr.mxu0 0.0
    %230 = vmatpush1.msra.mxu0 0.0
    %231 = vmatprep.subr.mxu0 0.0
    %232 = vmatpush1.msra.mxu0 0.0
    %233 = vmatprep.subr.mxu0 0.0
    %234 = vmatpush1.msra.mxu0 0.0
    %235 = vmatprep.subr.mxu0 0.0
    %236 = vmatpush1.msra.mxu0 0.0
    %237 = vmatprep.subr.mxu0 0.0
    %238 = vmatpush1.msra.mxu0 0.0
    %239 = vmatprep.subr.mxu0 0.0
    %240 = vmatpush1.msra.mxu0 0.0
    %241 = vmatprep.subr.mxu0 0.0
    %242 = vmatpush1.msra.mxu0 0.0
    %243 = vmatprep.subr.mxu0 0.0
    %244 = vmatpush1.msra.mxu0 0.0
    %245 = vmatprep.subr.mxu0 0.0
    %246 = vmatpush1.msra.mxu0 0.0
    %247 = vmatprep.subr.mxu0 0.0
    %248 = vmatpush1.msra.mxu0 0.0
    %249 = vmatprep.subr.mxu0 0.0
    %250 = vmatpush1.msra.mxu0 0.0
    %251 = vmatprep.subr.mxu0 0.0
    %252 = vmatpush1.msra.mxu0 0.0
    %253 = vmatprep.subr.mxu0 0.0
    %254 = vmatpush1.msra.mxu0 0.0
    %255 = vmatprep.subr.mxu0 0.0
    %256 = vmatpush1.msra.mxu0 0.0
    %257 = vmatprep.subr.mxu0 0.0
    %258 = vmatpush1.msra.mxu0 0.0
    %259 = vmatprep.subr.mxu0 0.0
    %260 = vmatpush1.msra.mxu0 0.0
    %261 = vmatprep.subr.mxu0 0.0
    %262 = vmatpush1.msra.mxu0 0.0
    %263 = vmatprep.subr.mxu0 0.0
    %264 = vmatpush1.msra.mxu0 0.0
    %265 = vmatprep.subr.mxu0 0.0
    %266 = vmatpush1.msra.mxu0 0.0
    %267 = vmatprep.subr.mxu0 0.0
    %268 = vmatpush1.msra.mxu0 0.0
    %269 = vmatprep.subr.mxu0 0.0
    %270 = vmatpush1.msra.mxu0 0.0
    %271 = vmatprep.subr.mxu0 0.0
    %272 = vmatpush1.msra.mxu0 0.0
    %273 = vmatprep.subr.mxu0 0.0
    %274 = vmatpush1.msra.mxu0 0.0
    %275 = vmatprep.subr.mxu0 0.0
    %276 = vmatpush1.msra.mxu0 0.0
    %277 = vmatprep.subr.mxu0 0.0
    %278 = vmatpush1.msra.mxu0 0.0
    %279 = vmatprep.subr.mxu0 0.0
    %280 = vmatpush1.msra.mxu0 0.0
    %281 = vmatprep.subr.mxu0 0.0
    %282 = vmatpush1.msra.mxu0 0.0
    %283 = vmatprep.subr.mxu0 0.0
    %284 = vmatpush1.msra.mxu0 0.0
    %285 = vmatprep.subr.mxu0 0.0
    %286 = vmatpush1.msra.mxu0 0.0
    %287 = vmatprep.mubr.f32.mxu0 0.0
    %288 = vmatmul.mubr.f32.gmra.mrb[0].mxu0 %v218
    %v289 = vpop.f32.mrb[0].mxu0
    %v290 = vadd.f32 0.0, %v289
    %v291 = vpop.f32.mrb[0].mxu0
    %292 = vdwg.mxu0
    %v293 = vlaneseq
    %v294 = vshrl.u32 %v293, 7
    %v295 = vsub.s32 1, %v294
    %v296 = vrot.slane %v117, %v295
    %298 = vrot.lane.b32.xlu0 %v296, 119
    %v299 = vpop.permute.xlu0 %298
    %v301 = vmul.f32 %v117, %v299
    %v303 = vsel %vm216, %v301, 0
    %305 = vmatprep.subr.mxu0 0.0
    %306 = vmatpush1.msra.mxu0 %v31
    %307 = vmatprep.subr.mxu0 0.0
    %308 = vmatpush1.msra.mxu0 %v221
    %309 = vmatprep.subr.mxu0 0.0
    %310 = vmatpush1.msra.mxu0 0.0
    %311 = vmatprep.subr.mxu0 0.0
    %312 = vmatpush1.msra.mxu0 0.0
    %313 = vmatprep.subr.mxu0 0.0
    %314 = vmatpush1.msra.mxu0 0.0
    %315 = vmatprep.subr.mxu0 0.0
    %316 = vmatpush1.msra.mxu0 0.0
    %317 = vmatprep.subr.mxu0 0.0
    %318 = vmatpush1.msra.mxu0 0.0
    %319 = vmatprep.subr.mxu0 0.0
    %320 = vmatpush1.msra.mxu0 0.0
    %321 = vmatprep.subr.mxu0 0.0
    %322 = vmatpush1.msra.mxu0 0.0
    %323 = vmatprep.subr.mxu0 0.0
    %324 = vmatpush1.msra.mxu0 0.0
    %325 = vmatprep.subr.mxu0 0.0
    %326 = vmatpush1.msra.mxu0 0.0
    %327 = vmatprep.subr.mxu0 0.0
    %328 = vmatpush1.msra.mxu0 0.0
    %329 = vmatprep.subr.mxu0 0.0
    %330 = vmatpush1.msra.mxu0 0.0
    %331 = vmatprep.subr.mxu0 0.0
    %332 = vmatpush1.msra.mxu0 0.0
    %333 = vmatprep.subr.mxu0 0.0
    %334 = vmatpush1.msra.mxu0 0.0
    %335 = vmatprep.subr.mxu0 0.0
    %336 = vmatpush1.msra.mxu0 0.0
    %337 = vmatprep.subr.mxu0 0.0
    %338 = vmatpush1.msra.mxu0 0.0
    %339 = vmatprep.subr.mxu0 0.0
    %340 = vmatpush1.msra.mxu0 0.0
    %341 = vmatprep.subr.mxu0 0.0
    %342 = vmatpush1.msra.mxu0 0.0
    %343 = vmatprep.subr.mxu0 0.0
    %344 = vmatpush1.msra.mxu0 0.0
    %345 = vmatprep.subr.mxu0 0.0
    %346 = vmatpush1.msra.mxu0 0.0
    %347 = vmatprep.subr.mxu0 0.0
    %348 = vmatpush1.msra.mxu0 0.0
    %349 = vmatprep.subr.mxu0 0.0
    %350 = vmatpush1.msra.mxu0 0.0
    %351 = vmatprep.subr.mxu0 0.0
    %352 = vmatpush1.msra.mxu0 0.0
    %353 = vmatprep.subr.mxu0 0.0
    %354 = vmatpush1.msra.mxu0 0.0
    %355 = vmatprep.subr.mxu0 0.0
    %356 = vmatpush1.msra.mxu0 0.0
    %357 = vmatprep.subr.mxu0 0.0
    %358 = vmatpush1.msra.mxu0 0.0
    %359 = vmatprep.subr.mxu0 0.0
    %360 = vmatpush1.msra.mxu0 0.0
    %361 = vmatprep.subr.mxu0 0.0
    %362 = vmatpush1.msra.mxu0 0.0
    %363 = vmatprep.subr.mxu0 0.0
    %364 = vmatpush1.msra.mxu0 0.0
    %365 = vmatprep.subr.mxu0 0.0
    %366 = vmatpush1.msra.mxu0 0.0
    %367 = vmatprep.subr.mxu0 0.0
    %368 = vmatpush1.msra.mxu0 0.0
    %369 = vmatprep.mubr.f32.mxu0 0.0
    %370 = vmatmul.mubr.f32.gmra.mrb[0].mxu0 %v303
    %v371 = vpop.f32.mrb[0].mxu0
    %v372 = vadd.f32 0.0, %v371
    %v373 = vpop.f32.mrb[0].mxu0
    %374 = vdwg.mxu0
    %v375 = vmax.f32 %v290, %v372
    %v376 = vsub.f32 %v290, %v375
    %v377 = vmul.f32 %v376, 1.442695
    %v378 = vpow.pop %v377
    %v379 = vsub.f32 %v372, %v375
    %v380 = vmul.f32 %v379, 1.442695
    %v381 = vpow.pop %v380
    %v382 = vadd.f32 %v378, %v381
    %v383 = vrcp.pop %v382
    %v384 = vmul.f32 %v378, %v383
    %vm385 = vcmask 23552
    %v387 = vsel %vm385, %v384, 0
    %vm389 = vcmask 1042432
    %v391 = vsel %vm389, %v33, 0
    %393 = vmatprep.subr.mxu0 0.0
    %394 = vmatpush1.msra.mxu0 %v391
    %395 = vmatprep.subr.mxu0 0.0
    %396 = vmatpush1.msra.mxu0 0.0
    %397 = vmatprep.subr.mxu0 0.0
    %398 = vmatpush1.msra.mxu0 0.0
    %399 = vmatprep.subr.mxu0 0.0
    %400 = vmatpush1.msra.mxu0 0.0
    %401 = vmatprep.subr.mxu0 0.0
    %402 = vmatpush1.msra.mxu0 0.0
    %403 = vmatprep.subr.mxu0 0.0
    %404 = vmatpush1.msra.mxu0 0.0
    %405 = vmatprep.subr.mxu0 0.0
    %406 = vmatpush1.msra.mxu0 0.0
    %407 = vmatprep.subr.mxu0 0.0
    %408 = vmatpush1.msra.mxu0 0.0
    %409 = vmatprep.subr.mxu0 0.0
    %410 = vmatpush1.msra.mxu0 0.0
    %411 = vmatprep.subr.mxu0 0.0
    %412 = vmatpush1.msra.mxu0 0.0
    %413 = vmatprep.subr.mxu0 0.0
    %414 = vmatpush1.msra.mxu0 0.0
    %415 = vmatprep.subr.mxu0 0.0
    %416 = vmatpush1.msra.mxu0 0.0
    %417 = vmatprep.subr.mxu0 0.0
    %418 = vmatpush1.msra.mxu0 0.0
    %419 = vmatprep.subr.mxu0 0.0
    %420 = vmatpush1.msra.mxu0 0.0
    %421 = vmatprep.subr.mxu0 0.0
    %422 = vmatpush1.msra.mxu0 0.0
    %423 = vmatprep.subr.mxu0 0.0
    %424 = vmatpush1.msra.mxu0 0.0
    %425 = vmatprep.subr.mxu0 0.0
    %426 = vmatpush1.msra.mxu0 0.0
    %427 = vmatprep.subr.mxu0 0.0
    %428 = vmatpush1.msra.mxu0 0.0
    %429 = vmatprep.subr.mxu0 0.0
    %430 = vmatpush1.msra.mxu0 0.0
    %431 = vmatprep.subr.mxu0 0.0
    %432 = vmatpush1.msra.mxu0 0.0
    %433 = vmatprep.subr.mxu0 0.0
    %434 = vmatpush1.msra.mxu0 0.0
    %435 = vmatprep.subr.mxu0 0.0
    %436 = vmatpush1.msra.mxu0 0.0
    %437 = vmatprep.subr.mxu0 0.0
    %438 = vmatpush1.msra.mxu0 0.0
    %439 = vmatprep.subr.mxu0 0.0
    %440 = vmatpush1.msra.mxu0 0.0
    %441 = vmatprep.subr.mxu0 0.0
    %442 = vmatpush1.msra.mxu0 0.0
    %443 = vmatprep.subr.mxu0 0.0
    %444 = vmatpush1.msra.mxu0 0.0
    %445 = vmatprep.subr.mxu0 0.0
    %446 = vmatpush1.msra.mxu0 0.0
    %447 = vmatprep.subr.mxu0 0.0
    %448 = vmatpush1.msra.mxu0 0.0
    %449 = vmatprep.subr.mxu0 0.0
    %450 = vmatpush1.msra.mxu0 0.0
    %451 = vmatprep.subr.mxu0 0.0
    %452 = vmatpush1.msra.mxu0 0.0
    %453 = vmatprep.subr.mxu0 0.0
    %454 = vmatpush1.msra.mxu0 0.0
    %455 = vmatprep.subr.mxu0 0.0
    %456 = vmatpush1.msra.mxu0 0.0
    %457 = vmatprep.mubr.f32.mxu0 0.0
    %458 = vmatmul.mubr.f32.gmra.mrb[0].mxu0 %v387
    %v459 = vpop.f32.mrb[0].mxu0
    %v460 = vadd.f32 0.0, %v459
    %v461 = vpop.f32.mrb[0].mxu0
    %462 = vdwg.mxu0
    %v463 = vmul.f32 %v381, %v383
    %v465 = vsel %vm385, %v463, 0
    %467 = vmatprep.subr.mxu0 0.0
    %468 = vmatpush1.msra.mxu0 %v391
    %469 = vmatprep.subr.mxu0 0.0
    %470 = vmatpush1.msra.mxu0 0.0
    %471 = vmatprep.subr.mxu0 0.0
    %472 = vmatpush1.msra.mxu0 0.0
    %473 = vmatprep.subr.mxu0 0.0
    %474 = vmatpush1.msra.mxu0 0.0
    %475 = vmatprep.subr.mxu0 0.0
    %476 = vmatpush1.msra.mxu0 0.0
    %477 = vmatprep.subr.mxu0 0.0
    %478 = vmatpush1.msra.mxu0 0.0
    %479 = vmatprep.subr.mxu0 0.0
    %480 = vmatpush1.msra.mxu0 0.0
    %481 = vmatprep.subr.mxu0 0.0
    %482 = vmatpush1.msra.mxu0 0.0
    %483 = vmatprep.subr.mxu0 0.0
    %484 = vmatpush1.msra.mxu0 0.0
    %485 = vmatprep.subr.mxu0 0.0
    %486 = vmatpush1.msra.mxu0 0.0
    %487 = vmatprep.subr.mxu0 0.0
    %488 = vmatpush1.msra.mxu0 0.0
    %489 = vmatprep.subr.mxu0 0.0
    %490 = vmatpush1.msra.mxu0 0.0
    %491 = vmatprep.subr.mxu0 0.0
    %492 = vmatpush1.msra.mxu0 0.0
    %493 = vmatprep.subr.mxu0 0.0
    %494 = vmatpush1.msra.mxu0 0.0
    %495 = vmatprep.subr.mxu0 0.0
    %496 = vmatpush1.msra.mxu0 0.0
    %497 = vmatprep.subr.mxu0 0.0
    %498 = vmatpush1.msra.mxu0 0.0
    %499 = vmatprep.subr.mxu0 0.0
    %500 = vmatpush1.msra.mxu0 0.0
    %501 = vmatprep.subr.mxu0 0.0
    %502 = vmatpush1.msra.mxu0 0.0
    %503 = vmatprep.subr.mxu0 0.0
    %504 = vmatpush1.msra.mxu0 0.0
    %505 = vmatprep.subr.mxu0 0.0
    %506 = vmatpush1.msra.mxu0 0.0
    %507 = vmatprep.subr.mxu0 0.0
    %508 = vmatpush1.msra.mxu0 0.0
    %509 = vmatprep.subr.mxu0 0.0
    %510 = vmatpush1.msra.mxu0 0.0
    %511 = vmatprep.subr.mxu0 0.0
    %512 = vmatpush1.msra.mxu0 0.0
    %513 = vmatprep.subr.mxu0 0.0
    %514 = vmatpush1.msra.mxu0 0.0
    %515 = vmatprep.subr.mxu0 0.0
    %516 = vmatpush1.msra.mxu0 0.0
    %517 = vmatprep.subr.mxu0 0.0
    %518 = vmatpush1.msra.mxu0 0.0
    %519 = vmatprep.subr.mxu0 0.0
    %520 = vmatpush1.msra.mxu0 0.0
    %521 = vmatprep.subr.mxu0 0.0
    %522 = vmatpush1.msra.mxu0 0.0
    %523 = vmatprep.subr.mxu0 0.0
    %524 = vmatpush1.msra.mxu0 0.0
    %525 = vmatprep.subr.mxu0 0.0
    %526 = vmatpush1.msra.mxu0 0.0
    %527 = vmatprep.subr.mxu0 0.0
    %528 = vmatpush1.msra.mxu0 0.0
    %529 = vmatprep.subr.mxu0 0.0
    %530 = vmatpush1.msra.mxu0 0.0
    %531 = vmatprep.mubr.f32.mxu0 0.0
    %532 = vmatmul.mubr.f32.gmra.mrb[0].mxu0 %v465
    %v533 = vpop.f32.mrb[0].mxu0
    %v534 = vadd.f32 0.0, %v533
    %v535 = vpop.f32.mrb[0].mxu0
    %536 = vdwg.mxu0
    %537 = vrot.lane.b32.xlu0 %v210, 110
    %v538 = vpop.permute.xlu0 %537
    %v540 = vmul.f32 %v460, %v538
    %541 = vrot.lane.b32.xlu0 %v296, 110
    %v542 = vpop.permute.xlu0 %541
    %v544 = vmul.f32 %v534, %v542
    %v545 = vadd.f32 %v540, %v544
    %v546 = vlaneseq
    %v547 = vshrl.u32 %v546, 7
    %v548 = vsub.s32 0, %v547
    %v549 = vrot.slane %v204, %v548
    %551 = vrot.lane.b32.xlu0 %v549, 27
    %v552 = vpop.permute.xlu0 %551
    %v554 = vmul.f32 %v117, %v552
    %556 = vrot.lane.b32.xlu0 %v554, 101
    %v557 = vpop.permute.xlu0 %556
    %v558 = vsel %vm216, %v557, 0
    %560 = vmatprep.subr.mxu0 0.0
    %561 = vmatpush1.msra.mxu0 %v31
    %562 = vmatprep.subr.mxu0 0.0
    %563 = vmatpush1.msra.mxu0 %v221
    %564 = vmatprep.subr.mxu0 0.0
    %565 = vmatpush1.msra.mxu0 0.0
    %566 = vmatprep.subr.mxu0 0.0
    %567 = vmatpush1.msra.mxu0 0.0
    %568 = vmatprep.subr.mxu0 0.0
    %569 = vmatpush1.msra.mxu0 0.0
    %570 = vmatprep.subr.mxu0 0.0
    %571 = vmatpush1.msra.mxu0 0.0
    %572 = vmatprep.subr.mxu0 0.0
    %573 = vmatpush1.msra.mxu0 0.0
    %574 = vmatprep.subr.mxu0 0.0
    %575 = vmatpush1.msra.mxu0 0.0
    %576 = vmatprep.subr.mxu0 0.0
    %577 = vmatpush1.msra.mxu0 0.0
    %578 = vmatprep.subr.mxu0 0.0
    %579 = vmatpush1.msra.mxu0 0.0
    %580 = vmatprep.subr.mxu0 0.0
    %581 = vmatpush1.msra.mxu0 0.0
    %582 = vmatprep.subr.mxu0 0.0
    %583 = vmatpush1.msra.mxu0 0.0
    %584 = vmatprep.subr.mxu0 0.0
    %585 = vmatpush1.msra.mxu0 0.0
    %586 = vmatprep.subr.mxu0 0.0
    %587 = vmatpush1.msra.mxu0 0.0
    %588 = vmatprep.subr.mxu0 0.0
    %589 = vmatpush1.msra.mxu0 0.0
    %590 = vmatprep.subr.mxu0 0.0
    %591 = vmatpush1.msra.mxu0 0.0
    %592 = vmatprep.subr.mxu0 0.0
    %593 = vmatpush1.msra.mxu0 0.0
    %594 = vmatprep.subr.mxu0 0.0
    %595 = vmatpush1.msra.mxu0 0.0
    %596 = vmatprep.subr.mxu0 0.0
    %597 = vmatpush1.msra.mxu0 0.0
    %598 = vmatprep.subr.mxu0 0.0
    %599 = vmatpush1.msra.mxu0 0.0
    %600 = vmatprep.subr.mxu0 0.0
    %601 = vmatpush1.msra.mxu0 0.0
    %602 = vmatprep.subr.mxu0 0.0
    %603 = vmatpush1.msra.mxu0 0.0
    %604 = vmatprep.subr.mxu0 0.0
    %605 = vmatpush1.msra.mxu0 0.0
    %606 = vmatprep.subr.mxu0 0.0
    %607 = vmatpush1.msra.mxu0 0.0
    %608 = vmatprep.subr.mxu0 0.0
    %609 = vmatpush1.msra.mxu0 0.0
    %610 = vmatprep.subr.mxu0 0.0
    %611 = vmatpush1.msra.mxu0 0.0
    %612 = vmatprep.subr.mxu0 0.0
    %613 = vmatpush1.msra.mxu0 0.0
    %614 = vmatprep.subr.mxu0 0.0
    %615 = vmatpush1.msra.mxu0 0.0
    %616 = vmatprep.subr.mxu0 0.0
    %617 = vmatpush1.msra.mxu0 0.0
    %618 = vmatprep.subr.mxu0 0.0
    %619 = vmatpush1.msra.mxu0 0.0
    %620 = vmatprep.subr.mxu0 0.0
    %621 = vmatpush1.msra.mxu0 0.0
    %622 = vmatprep.subr.mxu0 0.0
    %623 = vmatpush1.msra.mxu0 0.0
    %624 = vmatprep.mubr.f32.mxu0 0.0
    %625 = vmatmul.mubr.f32.gmra.mrb[0].mxu0 %v558
    %v626 = vpop.f32.mrb[0].mxu0
    %v627 = vadd.f32 0.0, %v626
    %v628 = vpop.f32.mrb[0].mxu0
    %629 = vdwg.mxu0
    %v630 = vlaneseq
    %v631 = vshrl.u32 %v630, 7
    %v632 = vsub.s32 1, %v631
    %v633 = vrot.slane %v204, %v632
    %635 = vrot.lane.b32.xlu0 %v633, 27
    %v636 = vpop.permute.xlu0 %635
    %v638 = vmul.f32 %v117, %v636
    %640 = vrot.lane.b32.xlu0 %v638, 101
    %v641 = vpop.permute.xlu0 %640
    %v642 = vsel %vm216, %v641, 0
    %644 = vmatprep.subr.mxu0 0.0
    %645 = vmatpush1.msra.mxu0 %v31
    %646 = vmatprep.subr.mxu0 0.0
    %647 = vmatpush1.msra.mxu0 %v221
    %648 = vmatprep.subr.mxu0 0.0
    %649 = vmatpush1.msra.mxu0 0.0
    %650 = vmatprep.subr.mxu0 0.0
    %651 = vmatpush1.msra.mxu0 0.0
    %652 = vmatprep.subr.mxu0 0.0
    %653 = vmatpush1.msra.mxu0 0.0
    %654 = vmatprep.subr.mxu0 0.0
    %655 = vmatpush1.msra.mxu0 0.0
    %656 = vmatprep.subr.mxu0 0.0
    %657 = vmatpush1.msra.mxu0 0.0
    %658 = vmatprep.subr.mxu0 0.0
    %659 = vmatpush1.msra.mxu0 0.0
    %660 = vmatprep.subr.mxu0 0.0
    %661 = vmatpush1.msra.mxu0 0.0
    %662 = vmatprep.subr.mxu0 0.0
    %663 = vmatpush1.msra.mxu0 0.0
    %664 = vmatprep.subr.mxu0 0.0
    %665 = vmatpush1.msra.mxu0 0.0
    %666 = vmatprep.subr.mxu0 0.0
    %667 = vmatpush1.msra.mxu0 0.0
    %668 = vmatprep.subr.mxu0 0.0
    %669 = vmatpush1.msra.mxu0 0.0
    %670 = vmatprep.subr.mxu0 0.0
    %671 = vmatpush1.msra.mxu0 0.0
    %672 = vmatprep.subr.mxu0 0.0
    %673 = vmatpush1.msra.mxu0 0.0
    %674 = vmatprep.subr.mxu0 0.0
    %675 = vmatpush1.msra.mxu0 0.0
    %676 = vmatprep.subr.mxu0 0.0
    %677 = vmatpush1.msra.mxu0 0.0
    %678 = vmatprep.subr.mxu0 0.0
    %679 = vmatpush1.msra.mxu0 0.0
    %680 = vmatprep.subr.mxu0 0.0
    %681 = vmatpush1.msra.mxu0 0.0
    %682 = vmatprep.subr.mxu0 0.0
    %683 = vmatpush1.msra.mxu0 0.0
    %684 = vmatprep.subr.mxu0 0.0
    %685 = vmatpush1.msra.mxu0 0.0
    %686 = vmatprep.subr.mxu0 0.0
    %687 = vmatpush1.msra.mxu0 0.0
    %688 = vmatprep.subr.mxu0 0.0
    %689 = vmatpush1.msra.mxu0 0.0
    %690 = vmatprep.subr.mxu0 0.0
    %691 = vmatpush1.msra.mxu0 0.0
    %692 = vmatprep.subr.mxu0 0.0
    %693 = vmatpush1.msra.mxu0 0.0
    %694 = vmatprep.subr.mxu0 0.0
    %695 = vmatpush1.msra.mxu0 0.0
    %696 = vmatprep.subr.mxu0 0.0
    %697 = vmatpush1.msra.mxu0 0.0
    %698 = vmatprep.subr.mxu0 0.0
    %699 = vmatpush1.msra.mxu0 0.0
    %700 = vmatprep.subr.mxu0 0.0
    %701 = vmatpush1.msra.mxu0 0.0
    %702 = vmatprep.subr.mxu0 0.0
    %703 = vmatpush1.msra.mxu0 0.0
    %704 = vmatprep.subr.mxu0 0.0
    %705 = vmatpush1.msra.mxu0 0.0
    %706 = vmatprep.subr.mxu0 0.0
    %707 = vmatpush1.msra.mxu0 0.0
    %708 = vmatprep.mubr.f32.mxu0 0.0
    %709 = vmatmul.mubr.f32.gmra.mrb[0].mxu0 %v642
    %v710 = vpop.f32.mrb[0].mxu0
    %v711 = vadd.f32 0.0, %v710
    %v712 = vpop.f32.mrb[0].mxu0
    %713 = vdwg.mxu0
    %v714 = vmax.f32 %v627, %v711
    %v715 = vsub.f32 %v627, %v714
    %v716 = vmul.f32 %v715, 1.442695
    %v717 = vpow.pop %v716
    %v718 = vsub.f32 %v711, %v714
    %v719 = vmul.f32 %v718, 1.442695
    %v720 = vpow.pop %v719
    %v721 = vadd.f32 %v717, %v720
    %v722 = vrcp.pop %v721
    %v723 = vmul.f32 %v717, %v722
    %v725 = vsel %vm385, %v723, 0
    %727 = vmatprep.subr.mxu0 0.0
    %728 = vmatpush1.msra.mxu0 %v391
    %729 = vmatprep.subr.mxu0 0.0
    %730 = vmatpush1.msra.mxu0 0.0
    %731 = vmatprep.subr.mxu0 0.0
    %732 = vmatpush1.msra.mxu0 0.0
    %733 = vmatprep.subr.mxu0 0.0
    %734 = vmatpush1.msra.mxu0 0.0
    %735 = vmatprep.subr.mxu0 0.0
    %736 = vmatpush1.msra.mxu0 0.0
    %737 = vmatprep.subr.mxu0 0.0
    %738 = vmatpush1.msra.mxu0 0.0
    %739 = vmatprep.subr.mxu0 0.0
    %740 = vmatpush1.msra.mxu0 0.0
    %741 = vmatprep.subr.mxu0 0.0
    %742 = vmatpush1.msra.mxu0 0.0
    %743 = vmatprep.subr.mxu0 0.0
    %744 = vmatpush1.msra.mxu0 0.0
    %745 = vmatprep.subr.mxu0 0.0
    %746 = vmatpush1.msra.mxu0 0.0
    %747 = vmatprep.subr.mxu0 0.0
    %748 = vmatpush1.msra.mxu0 0.0
    %749 = vmatprep.subr.mxu0 0.0
    %750 = vmatpush1.msra.mxu0 0.0
    %751 = vmatprep.subr.mxu0 0.0
    %752 = vmatpush1.msra.mxu0 0.0
    %753 = vmatprep.subr.mxu0 0.0
    %754 = vmatpush1.msra.mxu0 0.0
    %755 = vmatprep.subr.mxu0 0.0
    %756 = vmatpush1.msra.mxu0 0.0
    %757 = vmatprep.subr.mxu0 0.0
    %758 = vmatpush1.msra.mxu0 0.0
    %759 = vmatprep.subr.mxu0 0.0
    %760 = vmatpush1.msra.mxu0 0.0
    %761 = vmatprep.subr.mxu0 0.0
    %762 = vmatpush1.msra.mxu0 0.0
    %763 = vmatprep.subr.mxu0 0.0
    %764 = vmatpush1.msra.mxu0 0.0
    %765 = vmatprep.subr.mxu0 0.0
    %766 = vmatpush1.msra.mxu0 0.0
    %767 = vmatprep.subr.mxu0 0.0
    %768 = vmatpush1.msra.mxu0 0.0
    %769 = vmatprep.subr.mxu0 0.0
    %770 = vmatpush1.msra.mxu0 0.0
    %771 = vmatprep.subr.mxu0 0.0
    %772 = vmatpush1.msra.mxu0 0.0
    %773 = vmatprep.subr.mxu0 0.0
    %774 = vmatpush1.msra.mxu0 0.0
    %775 = vmatprep.subr.mxu0 0.0
    %776 = vmatpush1.msra.mxu0 0.0
    %777 = vmatprep.subr.mxu0 0.0
    %778 = vmatpush1.msra.mxu0 0.0
    %779 = vmatprep.subr.mxu0 0.0
    %780 = vmatpush1.msra.mxu0 0.0
    %781 = vmatprep.subr.mxu0 0.0
    %782 = vmatpush1.msra.mxu0 0.0
    %783 = vmatprep.subr.mxu0 0.0
    %784 = vmatpush1.msra.mxu0 0.0
    %785 = vmatprep.subr.mxu0 0.0
    %786 = vmatpush1.msra.mxu0 0.0
    %787 = vmatprep.subr.mxu0 0.0
    %788 = vmatpush1.msra.mxu0 0.0
    %789 = vmatprep.subr.mxu0 0.0
    %790 = vmatpush1.msra.mxu0 0.0
    %791 = vmatprep.mubr.f32.mxu0 0.0
    %792 = vmatmul.mubr.f32.gmra.mrb[0].mxu0 %v725
    %v793 = vpop.f32.mrb[0].mxu0
    %v794 = vadd.f32 0.0, %v793
    %v795 = vpop.f32.mrb[0].mxu0
    %796 = vdwg.mxu0
    %v797 = vmul.f32 %v720, %v722
    %v799 = vsel %vm385, %v797, 0
    %801 = vmatprep.subr.mxu0 0.0
    %802 = vmatpush1.msra.mxu0 %v391
    %803 = vmatprep.subr.mxu0 0.0
    %804 = vmatpush1.msra.mxu0 0.0
    %805 = vmatprep.subr.mxu0 0.0
    %806 = vmatpush1.msra.mxu0 0.0
    %807 = vmatprep.subr.mxu0 0.0
    %808 = vmatpush1.msra.mxu0 0.0
    %809 = vmatprep.subr.mxu0 0.0
    %810 = vmatpush1.msra.mxu0 0.0
    %811 = vmatprep.subr.mxu0 0.0
    %812 = vmatpush1.msra.mxu0 0.0
    %813 = vmatprep.subr.mxu0 0.0
    %814 = vmatpush1.msra.mxu0 0.0
    %815 = vmatprep.subr.mxu0 0.0
    %816 = vmatpush1.msra.mxu0 0.0
    %817 = vmatprep.subr.mxu0 0.0
    %818 = vmatpush1.msra.mxu0 0.0
    %819 = vmatprep.subr.mxu0 0.0
    %820 = vmatpush1.msra.mxu0 0.0
    %821 = vmatprep.subr.mxu0 0.0
    %822 = vmatpush1.msra.mxu0 0.0
    %823 = vmatprep.subr.mxu0 0.0
    %824 = vmatpush1.msra.mxu0 0.0
    %825 = vmatprep.subr.mxu0 0.0
    %826 = vmatpush1.msra.mxu0 0.0
    %827 = vmatprep.subr.mxu0 0.0
    %828 = vmatpush1.msra.mxu0 0.0
    %829 = vmatprep.subr.mxu0 0.0
    %830 = vmatpush1.msra.mxu0 0.0
    %831 = vmatprep.subr.mxu0 0.0
    %832 = vmatpush1.msra.mxu0 0.0
    %833 = vmatprep.subr.mxu0 0.0
    %834 = vmatpush1.msra.mxu0 0.0
    %835 = vmatprep.subr.mxu0 0.0
    %836 = vmatpush1.msra.mxu0 0.0
    %837 = vmatprep.subr.mxu0 0.0
    %838 = vmatpush1.msra.mxu0 0.0
    %839 = vmatprep.subr.mxu0 0.0
    %840 = vmatpush1.msra.mxu0 0.0
    %841 = vmatprep.subr.mxu0 0.0
    %842 = vmatpush1.msra.mxu0 0.0
    %843 = vmatprep.subr.mxu0 0.0
    %844 = vmatpush1.msra.mxu0 0.0
    %845 = vmatprep.subr.mxu0 0.0
    %846 = vmatpush1.msra.mxu0 0.0
    %847 = vmatprep.subr.mxu0 0.0
    %848 = vmatpush1.msra.mxu0 0.0
    %849 = vmatprep.subr.mxu0 0.0
    %850 = vmatpush1.msra.mxu0 0.0
    %851 = vmatprep.subr.mxu0 0.0
    %852 = vmatpush1.msra.mxu0 0.0
    %853 = vmatprep.subr.mxu0 0.0
    %854 = vmatpush1.msra.mxu0 0.0
    %855 = vmatprep.subr.mxu0 0.0
    %856 = vmatpush1.msra.mxu0 0.0
    %857 = vmatprep.subr.mxu0 0.0
    %858 = vmatpush1.msra.mxu0 0.0
    %859 = vmatprep.subr.mxu0 0.0
    %860 = vmatpush1.msra.mxu0 0.0
    %861 = vmatprep.subr.mxu0 0.0
    %862 = vmatpush1.msra.mxu0 0.0
    %863 = vmatprep.subr.mxu0 0.0
    %864 = vmatpush1.msra.mxu0 0.0
    %865 = vmatprep.mubr.f32.mxu0 0.0
    %866 = vmatmul.mubr.f32.gmra.mrb[0].mxu0 %v799
    %v867 = vpop.f32.mrb[0].mxu0
    %v868 = vadd.f32 0.0, %v867
    %v869 = vpop.f32.mrb[0].mxu0
    %870 = vdwg.mxu0
    %871 = vrot.lane.b32.xlu0 %v549, 119
    %v872 = vpop.permute.xlu0 %871
    %v874 = vmul.f32 %v794, %v872
    %875 = vrot.lane.b32.xlu0 %v633, 119
    %v876 = vpop.permute.xlu0 %875
    %v878 = vmul.f32 %v868, %v876
    %v879 = vadd.f32 %v874, %v878
    %v880 = vld [vmem:[%s2 + $0x60] sm:$0x3f]
    %v881 = vld [vmem:[%s2 + $0x68] sm:$0xff]
    %v882 = vld [vmem:[%s2 + $0x70] sm:$0x1]
    %v884 = vsel %vm216, %v545, 0
    %v887 = vsel %vm25, %v882, 0
    %889 = vmatprep.subr.mxu0 0.0
    %890 = vmatpush1.msra.mxu0 %v881
    %891 = vmatprep.subr.mxu0 0.0
    %892 = vmatpush1.msra.mxu0 %v887
    %893 = vmatprep.subr.mxu0 0.0
    %894 = vmatpush1.msra.mxu0 0.0
    %895 = vmatprep.subr.mxu0 0.0
    %896 = vmatpush1.msra.mxu0 0.0
    %897 = vmatprep.subr.mxu0 0.0
    %898 = vmatpush1.msra.mxu0 0.0
    %899 = vmatprep.subr.mxu0 0.0
    %900 = vmatpush1.msra.mxu0 0.0
    %901 = vmatprep.subr.mxu0 0.0
    %902 = vmatpush1.msra.mxu0 0.0
    %903 = vmatprep.subr.mxu0 0.0
    %904 = vmatpush1.msra.mxu0 0.0
    %905 = vmatprep.subr.mxu0 0.0
    %906 = vmatpush1.msra.mxu0 0.0
    %907 = vmatprep.subr.mxu0 0.0
    %908 = vmatpush1.msra.mxu0 0.0
    %909 = vmatprep.subr.mxu0 0.0
    %910 = vmatpush1.msra.mxu0 0.0
    %911 = vmatprep.subr.mxu0 0.0
    %912 = vmatpush1.msra.mxu0 0.0
    %913 = vmatprep.subr.mxu0 0.0
    %914 = vmatpush1.msra.mxu0 0.0
    %915 = vmatprep.subr.mxu0 0.0
    %916 = vmatpush1.msra.mxu0 0.0
    %917 = vmatprep.subr.mxu0 0.0
    %918 = vmatpush1.msra.mxu0 0.0
    %919 = vmatprep.subr.mxu0 0.0
    %920 = vmatpush1.msra.mxu0 0.0
    %921 = vmatprep.subr.mxu0 0.0
    %922 = vmatpush1.msra.mxu0 0.0
    %923 = vmatprep.subr.mxu0 0.0
    %924 = vmatpush1.msra.mxu0 0.0
    %925 = vmatprep.subr.mxu0 0.0
    %926 = vmatpush1.msra.mxu0 0.0
    %927 = vmatprep.subr.mxu0 0.0
    %928 = vmatpush1.msra.mxu0 0.0
    %929 = vmatprep.subr.mxu0 0.0
    %930 = vmatpush1.msra.mxu0 0.0
    %931 = vmatprep.subr.mxu0 0.0
    %932 = vmatpush1.msra.mxu0 0.0
    %933 = vmatprep.subr.mxu0 0.0
    %934 = vmatpush1.msra.mxu0 0.0
    %935 = vmatprep.subr.mxu0 0.0
    %936 = vmatpush1.msra.mxu0 0.0
    %937 = vmatprep.subr.mxu0 0.0
    %938 = vmatpush1.msra.mxu0 0.0
    %939 = vmatprep.subr.mxu0 0.0
    %940 = vmatpush1.msra.mxu0 0.0
    %941 = vmatprep.subr.mxu0 0.0
    %942 = vmatpush1.msra.mxu0 0.0
    %943 = vmatprep.subr.mxu0 0.0
    %944 = vmatpush1.msra.mxu0 0.0
    %945 = vmatprep.subr.mxu0 0.0
    %946 = vmatpush1.msra.mxu0 0.0
    %947 = vmatprep.subr.mxu0 0.0
    %948 = vmatpush1.msra.mxu0 0.0
    %949 = vmatprep.subr.mxu0 0.0
    %950 = vmatpush1.msra.mxu0 0.0
    %951 = vmatprep.subr.mxu0 0.0
    %952 = vmatpush1.msra.mxu0 0.0
    %953 = vmatprep.mubr.f32.mxu0 0.0
    %954 = vmatmul.mubr.f32.gmra.mrb[0].mxu0 %v884
    %v955 = vpop.f32.mrb[0].mxu0
    %v956 = vadd.f32 0.0, %v955
    %v957 = vpop.f32.mrb[0].mxu0
    %958 = vdwg.mxu0
    %v960 = vsel %vm46, %v880, 0
    %962 = vmatprep.subr.mxu0 0.0
    %963 = vmatpush1.msra.mxu0 %v960
    %964 = vmatprep.subr.mxu0 0.0
    %965 = vmatpush1.msra.mxu0 0.0
    %966 = vmatprep.subr.mxu0 0.0
    %967 = vmatpush1.msra.mxu0 0.0
    %968 = vmatprep.subr.mxu0 0.0
    %969 = vmatpush1.msra.mxu0 0.0
    %970 = vmatprep.subr.mxu0 0.0
    %971 = vmatpush1.msra.mxu0 0.0
    %972 = vmatprep.subr.mxu0 0.0
    %973 = vmatpush1.msra.mxu0 0.0
    %974 = vmatprep.subr.mxu0 0.0
    %975 = vmatpush1.msra.mxu0 0.0
    %976 = vmatprep.subr.mxu0 0.0
    %977 = vmatpush1.msra.mxu0 0.0
    %978 = vmatprep.subr.mxu0 0.0
    %979 = vmatpush1.msra.mxu0 0.0
    %980 = vmatprep.subr.mxu0 0.0
    %981 = vmatpush1.msra.mxu0 0.0
    %982 = vmatprep.subr.mxu0 0.0
    %983 = vmatpush1.msra.mxu0 0.0
    %984 = vmatprep.subr.mxu0 0.0
    %985 = vmatpush1.msra.mxu0 0.0
    %986 = vmatprep.subr.mxu0 0.0
    %987 = vmatpush1.msra.mxu0 0.0
    %988 = vmatprep.subr.mxu0 0.0
    %989 = vmatpush1.msra.mxu0 0.0
    %990 = vmatprep.subr.mxu0 0.0
    %991 = vmatpush1.msra.mxu0 0.0
    %992 = vmatprep.subr.mxu0 0.0
    %993 = vmatpush1.msra.mxu0 0.0
    %994 = vmatprep.subr.mxu0 0.0
    %995 = vmatpush1.msra.mxu0 0.0
    %996 = vmatprep.subr.mxu0 0.0
    %997 = vmatpush1.msra.mxu0 0.0
    %998 = vmatprep.subr.mxu0 0.0
    %999 = vmatpush1.msra.mxu0 0.0
    %1000 = vmatprep.subr.mxu0 0.0
    %1001 = vmatpush1.msra.mxu0 0.0
    %1002 = vmatprep.subr.mxu0 0.0
    %1003 = vmatpush1.msra.mxu0 0.0
    %1004 = vmatprep.subr.mxu0 0.0
    %1005 = vmatpush1.msra.mxu0 0.0
    %1006 = vmatprep.subr.mxu0 0.0
    %1007 = vmatpush1.msra.mxu0 0.0
    %1008 = vmatprep.subr.mxu0 0.0
    %1009 = vmatpush1.msra.mxu0 0.0
    %1010 = vmatprep.subr.mxu0 0.0
    %1011 = vmatpush1.msra.mxu0 0.0
    %1012 = vmatprep.subr.mxu0 0.0
    %1013 = vmatpush1.msra.mxu0 0.0
    %1014 = vmatprep.subr.mxu0 0.0
    %1015 = vmatpush1.msra.mxu0 0.0
    %1016 = vmatprep.subr.mxu0 0.0
    %1017 = vmatpush1.msra.mxu0 0.0
    %1018 = vmatprep.subr.mxu0 0.0
    %1019 = vmatpush1.msra.mxu0 0.0
    %1020 = vmatprep.subr.mxu0 0.0
    %1021 = vmatpush1.msra.mxu0 0.0
    %1022 = vmatprep.subr.mxu0 0.0
    %1023 = vmatpush1.msra.mxu0 0.0
    %1024 = vmatprep.subr.mxu0 0.0
    %1025 = vmatpush1.msra.mxu0 0.0
    %1026 = vmatprep.mubr.f32.mxu0 0.0
    %1027 = vmatmul.mubr.f32.gmra.mrb[0].mxu0 %v44
    %v1028 = vpop.f32.mrb[0].mxu0
    %v1029 = vadd.f32 %v956, %v1028
    %v1030 = vpop.f32.mrb[0].mxu0
    %1031 = vdwg.mxu0
    %v1032 = vld [vmem:[%s2 + $0x78] sm:$0xff]
    %v1033 = vld [vmem:[%s2 + $0x80] sm:$0x1]
    %v1035 = vsel %vm216, %v879, 0
    %v1038 = vsel %vm25, %v1033, 0
    %1040 = vmatprep.subr.mxu0 0.0
    %1041 = vmatpush1.msra.mxu0 %v1032
    %1042 = vmatprep.subr.mxu0 0.0
    %1043 = vmatpush1.msra.mxu0 %v1038
    %1044 = vmatprep.subr.mxu0 0.0
    %1045 = vmatpush1.msra.mxu0 0.0
    %1046 = vmatprep.subr.mxu0 0.0
    %1047 = vmatpush1.msra.mxu0 0.0
    %1048 = vmatprep.subr.mxu0 0.0
    %1049 = vmatpush1.msra.mxu0 0.0
    %1050 = vmatprep.subr.mxu0 0.0
    %1051 = vmatpush1.msra.mxu0 0.0
    %1052 = vmatprep.subr.mxu0 0.0
    %1053 = vmatpush1.msra.mxu0 0.0
    %1054 = vmatprep.subr.mxu0 0.0
    %1055 = vmatpush1.msra.mxu0 0.0
    %1056 = vmatprep.subr.mxu0 0.0
    %1057 = vmatpush1.msra.mxu0 0.0
    %1058 = vmatprep.subr.mxu0 0.0
    %1059 = vmatpush1.msra.mxu0 0.0
    %1060 = vmatprep.subr.mxu0 0.0
    %1061 = vmatpush1.msra.mxu0 0.0
    %1062 = vmatprep.subr.mxu0 0.0
    %1063 = vmatpush1.msra.mxu0 0.0
    %1064 = vmatprep.subr.mxu0 0.0
    %1065 = vmatpush1.msra.mxu0 0.0
    %1066 = vmatprep.subr.mxu0 0.0
    %1067 = vmatpush1.msra.mxu0 0.0
    %1068 = vmatprep.subr.mxu0 0.0
    %1069 = vmatpush1.msra.mxu0 0.0
    %1070 = vmatprep.subr.mxu0 0.0
    %1071 = vmatpush1.msra.mxu0 0.0
    %1072 = vmatprep.subr.mxu0 0.0
    %1073 = vmatpush1.msra.mxu0 0.0
    %1074 = vmatprep.subr.mxu0 0.0
    %1075 = vmatpush1.msra.mxu0 0.0
    %1076 = vmatprep.subr.mxu0 0.0
    %1077 = vmatpush1.msra.mxu0 0.0
    %1078 = vmatprep.subr.mxu0 0.0
    %1079 = vmatpush1.msra.mxu0 0.0
    %1080 = vmatprep.subr.mxu0 0.0
    %1081 = vmatpush1.msra.mxu0 0.0
    %1082 = vmatprep.subr.mxu0 0.0
    %1083 = vmatpush1.msra.mxu0 0.0
    %1084 = vmatprep.subr.mxu0 0.0
    %1085 = vmatpush1.msra.mxu0 0.0
    %1086 = vmatprep.subr.mxu0 0.0
    %1087 = vmatpush1.msra.mxu0 0.0
    %1088 = vmatprep.subr.mxu0 0.0
    %1089 = vmatpush1.msra.mxu0 0.0
    %1090 = vmatprep.subr.mxu0 0.0
    %1091 = vmatpush1.msra.mxu0 0.0
    %1092 = vmatprep.subr.mxu0 0.0
    %1093 = vmatpush1.msra.mxu0 0.0
    %1094 = vmatprep.subr.mxu0 0.0
    %1095 = vmatpush1.msra.mxu0 0.0
    %1096 = vmatprep.subr.mxu0 0.0
    %1097 = vmatpush1.msra.mxu0 0.0
    %1098 = vmatprep.subr.mxu0 0.0
    %1099 = vmatpush1.msra.mxu0 0.0
    %1100 = vmatprep.subr.mxu0 0.0
    %1101 = vmatpush1.msra.mxu0 0.0
    %1102 = vmatprep.subr.mxu0 0.0
    %1103 = vmatpush1.msra.mxu0 0.0
    %1104 = vmatprep.mubr.f32.mxu0 0.0
    %1105 = vmatmul.mubr.f32.gmra.mrb[0].mxu0 %v1035
    %v1106 = vpop.f32.mrb[0].mxu0
    %v1107 = vadd.f32 0.0, %v1106
    %v1108 = vpop.f32.mrb[0].mxu0
    %1109 = vdwg.mxu0
    %v1110 = vadd.f32 %v1029, %v1107
    %v1111 = vld [vmem:[%s2 + $0x88] sm:$0x3]
    %v1112 = vadd.f32 %v1110, %v1111
    %v1114 = vrot.slane %v1112, 1
    %1115 = vrot.lane.b32.xlu0 %v1114, 15
    %v1116 = vpop.permute.xlu0 %1115
    %vm1118 = vcmask 121856
    %v1119 = vsel %vm1118, %v1112, %v1116
    %v1120 = vld [vmem:[%s2 + $0xc0] sm:$0xff]
    %v1121 = vld [vmem:[%s2 + $0xc8] sm:$0xf]
    %v1122 = vld [vmem:[%s2 + $0xd0] sm:$0x1]
    %1123 = vrot.lane.b32.xlu0 %v21, 127
    %v1124 = vpop.permute.xlu0 %1123
    %v1125 = vsel %vm130, %v1124, 0
    %v1128 = vsel %vm133, %v1121, 0
    %1130 = vmatprep.subr.mxu0 0.0
    %1131 = vmatpush1.msra.mxu0 %v1120
    %1132 = vmatprep.subr.mxu0 0.0
    %1133 = vmatpush1.msra.mxu0 %v1128
    %1134 = vmatprep.subr.mxu0 0.0
    %1135 = vmatpush1.msra.mxu0 0.0
    %1136 = vmatprep.subr.mxu0 0.0
    %1137 = vmatpush1.msra.mxu0 0.0
    %1138 = vmatprep.subr.mxu0 0.0
    %1139 = vmatpush1.msra.mxu0 0.0
    %1140 = vmatprep.subr.mxu0 0.0
    %1141 = vmatpush1.msra.mxu0 0.0
    %1142 = vmatprep.subr.mxu0 0.0
    %1143 = vmatpush1.msra.mxu0 0.0
    %1144 = vmatprep.subr.mxu0 0.0
    %1145 = vmatpush1.msra.mxu0 0.0
    %1146 = vmatprep.subr.mxu0 0.0
    %1147 = vmatpush1.msra.mxu0 0.0
    %1148 = vmatprep.subr.mxu0 0.0
    %1149 = vmatpush1.msra.mxu0 0.0
    %1150 = vmatprep.subr.mxu0 0.0
    %1151 = vmatpush1.msra.mxu0 0.0
    %1152 = vmatprep.subr.mxu0 0.0
    %1153 = vmatpush1.msra.mxu0 0.0
    %1154 = vmatprep.subr.mxu0 0.0
    %1155 = vmatpush1.msra.mxu0 0.0
    %1156 = vmatprep.subr.mxu0 0.0
    %1157 = vmatpush1.msra.mxu0 0.0
    %1158 = vmatprep.subr.mxu0 0.0
    %1159 = vmatpush1.msra.mxu0 0.0
    %1160 = vmatprep.subr.mxu0 0.0
    %1161 = vmatpush1.msra.mxu0 0.0
    %1162 = vmatprep.subr.mxu0 0.0
    %1163 = vmatpush1.msra.mxu0 0.0
    %1164 = vmatprep.subr.mxu0 0.0
    %1165 = vmatpush1.msra.mxu0 0.0
    %1166 = vmatprep.subr.mxu0 0.0
    %1167 = vmatpush1.msra.mxu0 0.0
    %1168 = vmatprep.subr.mxu0 0.0
    %1169 = vmatpush1.msra.mxu0 0.0
    %1170 = vmatprep.subr.mxu0 0.0
    %1171 = vmatpush1.msra.mxu0 0.0
    %1172 = vmatprep.subr.mxu0 0.0
    %1173 = vmatpush1.msra.mxu0 0.0
    %1174 = vmatprep.subr.mxu0 0.0
    %1175 = vmatpush1.msra.mxu0 0.0
    %1176 = vmatprep.subr.mxu0 0.0
    %1177 = vmatpush1.msra.mxu0 0.0
    %1178 = vmatprep.subr.mxu0 0.0
    %1179 = vmatpush1.msra.mxu0 0.0
    %1180 = vmatprep.subr.mxu0 0.0
    %1181 = vmatpush1.msra.mxu0 0.0
    %1182 = vmatprep.subr.mxu0 0.0
    %1183 = vmatpush1.msra.mxu0 0.0
    %1184 = vmatprep.subr.mxu0 0.0
    %1185 = vmatpush1.msra.mxu0 0.0
    %1186 = vmatprep.subr.mxu0 0.0
    %1187 = vmatpush1.msra.mxu0 0.0
    %1188 = vmatprep.subr.mxu0 0.0
    %1189 = vmatpush1.msra.mxu0 0.0
    %1190 = vmatprep.subr.mxu0 0.0
    %1191 = vmatpush1.msra.mxu0 0.0
    %1192 = vmatprep.subr.mxu0 0.0
    %1193 = vmatpush1.msra.mxu0 0.0
    %1194 = vmatprep.mubr.f32.mxu0 0.0
    %1195 = vmatmul.mubr.f32.gmra.mrb[0].mxu0 %v1125
    %v1196 = vpop.f32.mrb[0].mxu0
    %v1197 = vadd.f32 %v1122, %v1196
    %v1198 = vpop.f32.mrb[0].mxu0
    %1199 = vdwg.mxu0
    %v1200 = vld [vmem:[%s2 + $0x108] sm:$0xff]
    %v1201 = vld [vmem:[%s2 + $0x110] sm:$0xf]
    %v1202 = vld [vmem:[%s2 + $0x118] sm:$0x1]
    %1203 = vrot.lane.b32.xlu0 %v21, 102
    %v1204 = vpop.permute.xlu0 %1203
    %v1205 = vsel %vm130, %v1204, 0
    %v1208 = vsel %vm133, %v1201, 0
    %1210 = vmatprep.subr.mxu0 0.0
    %1211 = vmatpush1.msra.mxu0 %v1200
    %1212 = vmatprep.subr.mxu0 0.0
    %1213 = vmatpush1.msra.mxu0 %v1208
    %1214 = vmatprep.subr.mxu0 0.0
    %1215 = vmatpush1.msra.mxu0 0.0
    %1216 = vmatprep.subr.mxu0 0.0
    %1217 = vmatpush1.msra.mxu0 0.0
    %1218 = vmatprep.subr.mxu0 0.0
    %1219 = vmatpush1.msra.mxu0 0.0
    %1220 = vmatprep.subr.mxu0 0.0
    %1221 = vmatpush1.msra.mxu0 0.0
    %1222 = vmatprep.subr.mxu0 0.0
    %1223 = vmatpush1.msra.mxu0 0.0
    %1224 = vmatprep.subr.mxu0 0.0
    %1225 = vmatpush1.msra.mxu0 0.0
    %1226 = vmatprep.subr.mxu0 0.0
    %1227 = vmatpush1.msra.mxu0 0.0
    %1228 = vmatprep.subr.mxu0 0.0
    %1229 = vmatpush1.msra.mxu0 0.0
    %1230 = vmatprep.subr.mxu0 0.0
    %1231 = vmatpush1.msra.mxu0 0.0
    %1232 = vmatprep.subr.mxu0 0.0
    %1233 = vmatpush1.msra.mxu0 0.0
    %1234 = vmatprep.subr.mxu0 0.0
    %1235 = vmatpush1.msra.mxu0 0.0
    %1236 = vmatprep.subr.mxu0 0.0
    %1237 = vmatpush1.msra.mxu0 0.0
    %1238 = vmatprep.subr.mxu0 0.0
    %1239 = vmatpush1.msra.mxu0 0.0
    %1240 = vmatprep.subr.mxu0 0.0
    %1241 = vmatpush1.msra.mxu0 0.0
    %1242 = vmatprep.subr.mxu0 0.0
    %1243 = vmatpush1.msra.mxu0 0.0
    %1244 = vmatprep.subr.mxu0 0.0
    %1245 = vmatpush1.msra.mxu0 0.0
    %1246 = vmatprep.subr.mxu0 0.0
    %1247 = vmatpush1.msra.mxu0 0.0
    %1248 = vmatprep.subr.mxu0 0.0
    %1249 = vmatpush1.msra.mxu0 0.0
    %1250 = vmatprep.subr.mxu0 0.0
    %1251 = vmatpush1.msra.mxu0 0.0
    %1252 = vmatprep.subr.mxu0 0.0
    %1253 = vmatpush1.msra.mxu0 0.0
    %1254 = vmatprep.subr.mxu0 0.0
    %1255 = vmatpush1.msra.mxu0 0.0
    %1256 = vmatprep.subr.mxu0 0.0
    %1257 = vmatpush1.msra.mxu0 0.0
    %1258 = vmatprep.subr.mxu0 0.0
    %1259 = vmatpush1.msra.mxu0 0.0
    %1260 = vmatprep.subr.mxu0 0.0
    %1261 = vmatpush1.msra.mxu0 0.0
    %1262 = vmatprep.subr.mxu0 0.0
    %1263 = vmatpush1.msra.mxu0 0.0
    %1264 = vmatprep.subr.mxu0 0.0
    %1265 = vmatpush1.msra.mxu0 0.0
    %1266 = vmatprep.subr.mxu0 0.0
    %1267 = vmatpush1.msra.mxu0 0.0
    %1268 = vmatprep.subr.mxu0 0.0
    %1269 = vmatpush1.msra.mxu0 0.0
    %1270 = vmatprep.subr.mxu0 0.0
    %1271 = vmatpush1.msra.mxu0 0.0
    %1272 = vmatprep.subr.mxu0 0.0
    %1273 = vmatpush1.msra.mxu0 0.0
    %1274 = vmatprep.mubr.f32.mxu0 0.0
    %1275 = vmatmul.mubr.f32.gmra.mrb[0].mxu0 %v1205
    %v1276 = vpop.f32.mrb[0].mxu0
    %v1277 = vadd.f32 %v1202, %v1276
    %v1278 = vpop.f32.mrb[0].mxu0
    %1279 = vdwg.mxu0
    %v1280 = vld [vmem:[%s2 + $0x120] sm:$0x3f]
    %v1281 = vld [vmem:[%s2 + $0x128] sm:$0x1]
    %v1282 = vlaneseq
    %v1283 = vshrl.u32 %v1282, 7
    %v1284 = vsub.s32 0, %v1283
    %v1285 = vrot.slane %v1281, %v1284
    %v1287 = vsel %vm46, %v1280, 0
    %1289 = vmatprep.subr.mxu0 0.0
    %1290 = vmatpush1.msra.mxu0 %v1287
    %1291 = vmatprep.subr.mxu0 0.0
    %1292 = vmatpush1.msra.mxu0 0.0
    %1293 = vmatprep.subr.mxu0 0.0
    %1294 = vmatpush1.msra.mxu0 0.0
    %1295 = vmatprep.subr.mxu0 0.0
    %1296 = vmatpush1.msra.mxu0 0.0
    %1297 = vmatprep.subr.mxu0 0.0
    %1298 = vmatpush1.msra.mxu0 0.0
    %1299 = vmatprep.subr.mxu0 0.0
    %1300 = vmatpush1.msra.mxu0 0.0
    %1301 = vmatprep.subr.mxu0 0.0
    %1302 = vmatpush1.msra.mxu0 0.0
    %1303 = vmatprep.subr.mxu0 0.0
    %1304 = vmatpush1.msra.mxu0 0.0
    %1305 = vmatprep.subr.mxu0 0.0
    %1306 = vmatpush1.msra.mxu0 0.0
    %1307 = vmatprep.subr.mxu0 0.0
    %1308 = vmatpush1.msra.mxu0 0.0
    %1309 = vmatprep.subr.mxu0 0.0
    %1310 = vmatpush1.msra.mxu0 0.0
    %1311 = vmatprep.subr.mxu0 0.0
    %1312 = vmatpush1.msra.mxu0 0.0
    %1313 = vmatprep.subr.mxu0 0.0
    %1314 = vmatpush1.msra.mxu0 0.0
    %1315 = vmatprep.subr.mxu0 0.0
    %1316 = vmatpush1.msra.mxu0 0.0
    %1317 = vmatprep.subr.mxu0 0.0
    %1318 = vmatpush1.msra.mxu0 0.0
    %1319 = vmatprep.subr.mxu0 0.0
    %1320 = vmatpush1.msra.mxu0 0.0
    %1321 = vmatprep.subr.mxu0 0.0
    %1322 = vmatpush1.msra.mxu0 0.0
    %1323 = vmatprep.subr.mxu0 0.0
    %1324 = vmatpush1.msra.mxu0 0.0
    %1325 = vmatprep.subr.mxu0 0.0
    %1326 = vmatpush1.msra.mxu0 0.0
    %1327 = vmatprep.subr.mxu0 0.0
    %1328 = vmatpush1.msra.mxu0 0.0
    %1329 = vmatprep.subr.mxu0 0.0
    %1330 = vmatpush1.msra.mxu0 0.0
    %1331 = vmatprep.subr.mxu0 0.0
    %1332 = vmatpush1.msra.mxu0 0.0
    %1333 = vmatprep.subr.mxu0 0.0
    %1334 = vmatpush1.msra.mxu0 0.0
    %1335 = vmatprep.subr.mxu0 0.0
    %1336 = vmatpush1.msra.mxu0 0.0
    %1337 = vmatprep.subr.mxu0 0.0
    %1338 = vmatpush1.msra.mxu0 0.0
    %1339 = vmatprep.subr.mxu0 0.0
    %1340 = vmatpush1.msra.mxu0 0.0
    %1341 = vmatprep.subr.mxu0 0.0
    %1342 = vmatpush1.msra.mxu0 0.0
    %1343 = vmatprep.subr.mxu0 0.0
    %1344 = vmatpush1.msra.mxu0 0.0
    %1345 = vmatprep.subr.mxu0 0.0
    %1346 = vmatpush1.msra.mxu0 0.0
    %1347 = vmatprep.subr.mxu0 0.0
    %1348 = vmatpush1.msra.mxu0 0.0
    %1349 = vmatprep.subr.mxu0 0.0
    %1350 = vmatpush1.msra.mxu0 0.0
    %1351 = vmatprep.subr.mxu0 0.0
    %1352 = vmatpush1.msra.mxu0 0.0
    %1353 = vmatprep.mubr.f32.mxu0 0.0
    %1354 = vmatmul.mubr.f32.gmra.mrb[0].mxu0 %v44
    %v1355 = vpop.f32.mrb[0].mxu0
    %v1356 = vadd.f32 %v1285, %v1355
    %v1357 = vpop.f32.mrb[0].mxu0
    %1358 = vdwg.mxu0
    %v1359 = vmul.f32 %v1277, %v1356
    %v1361 = vsel %vm43, %v1359, 0
    %v1364 = vsel %vm46, %v34, 0
    %1366 = vmatprep.subr.mxu0 0.0
    %1367 = vmatpush1.msra.mxu0 %v1364
    %1368 = vmatprep.subr.mxu0 0.0
    %1369 = vmatpush1.msra.mxu0 0.0
    %1370 = vmatprep.subr.mxu0 0.0
    %1371 = vmatpush1.msra.mxu0 0.0
    %1372 = vmatprep.subr.mxu0 0.0
    %1373 = vmatpush1.msra.mxu0 0.0
    %1374 = vmatprep.subr.mxu0 0.0
    %1375 = vmatpush1.msra.mxu0 0.0
    %1376 = vmatprep.subr.mxu0 0.0
    %1377 = vmatpush1.msra.mxu0 0.0
    %1378 = vmatprep.subr.mxu0 0.0
    %1379 = vmatpush1.msra.mxu0 0.0
    %1380 = vmatprep.subr.mxu0 0.0
    %1381 = vmatpush1.msra.mxu0 0.0
    %1382 = vmatprep.subr.mxu0 0.0
    %1383 = vmatpush1.msra.mxu0 0.0
    %1384 = vmatprep.subr.mxu0 0.0
    %1385 = vmatpush1.msra.mxu0 0.0
    %1386 = vmatprep.subr.mxu0 0.0
    %1387 = vmatpush1.msra.mxu0 0.0
    %1388 = vmatprep.subr.mxu0 0.0
    %1389 = vmatpush1.msra.mxu0 0.0
    %1390 = vmatprep.subr.mxu0 0.0
    %1391 = vmatpush1.msra.mxu0 0.0
    %1392 = vmatprep.subr.mxu0 0.0
    %1393 = vmatpush1.msra.mxu0 0.0
    %1394 = vmatprep.subr.mxu0 0.0
    %1395 = vmatpush1.msra.mxu0 0.0
    %1396 = vmatprep.subr.mxu0 0.0
    %1397 = vmatpush1.msra.mxu0 0.0
    %1398 = vmatprep.subr.mxu0 0.0
    %1399 = vmatpush1.msra.mxu0 0.0
    %1400 = vmatprep.subr.mxu0 0.0
    %1401 = vmatpush1.msra.mxu0 0.0
    %1402 = vmatprep.subr.mxu0 0.0
    %1403 = vmatpush1.msra.mxu0 0.0
    %1404 = vmatprep.subr.mxu0 0.0
    %1405 = vmatpush1.msra.mxu0 0.0
    %1406 = vmatprep.subr.mxu0 0.0
    %1407 = vmatpush1.msra.mxu0 0.0
    %1408 = vmatprep.subr.mxu0 0.0
    %1409 = vmatpush1.msra.mxu0 0.0
    %1410 = vmatprep.subr.mxu0 0.0
    %1411 = vmatpush1.msra.mxu0 0.0
    %1412 = vmatprep.subr.mxu0 0.0
    %1413 = vmatpush1.msra.mxu0 0.0
    %1414 = vmatprep.subr.mxu0 0.0
    %1415 = vmatpush1.msra.mxu0 0.0
    %1416 = vmatprep.subr.mxu0 0.0
    %1417 = vmatpush1.msra.mxu0 0.0
    %1418 = vmatprep.subr.mxu0 0.0
    %1419 = vmatpush1.msra.mxu0 0.0
    %1420 = vmatprep.subr.mxu0 0.0
    %1421 = vmatpush1.msra.mxu0 0.0
    %1422 = vmatprep.subr.mxu0 0.0
    %1423 = vmatpush1.msra.mxu0 0.0
    %1424 = vmatprep.subr.mxu0 0.0
    %1425 = vmatpush1.msra.mxu0 0.0
    %1426 = vmatprep.subr.mxu0 0.0
    %1427 = vmatpush1.msra.mxu0 0.0
    %1428 = vmatprep.subr.mxu0 0.0
    %1429 = vmatpush1.msra.mxu0 0.0
    %1430 = vmatprep.mubr.f32.mxu0 0.0
    %1431 = vmatmul.mubr.f32.gmra.mrb[0].mxu0 %v1361
    %v1432 = vpop.f32.mrb[0].mxu0
    %v1433 = vadd.f32 0.0, %v1432
    %v1434 = vpop.f32.mrb[0].mxu0
    %1435 = vdwg.mxu0
    %v1437 = vrot.slane %v1356, 1
    %v1439 = vmul.f32 %v1277, %v1437
    %v1441 = vsel %vm43, %v1439, 0
    %1443 = vmatprep.subr.mxu0 0.0
    %1444 = vmatpush1.msra.mxu0 %v1364
    %1445 = vmatprep.subr.mxu0 0.0
    %1446 = vmatpush1.msra.mxu0 0.0
    %1447 = vmatprep.subr.mxu0 0.0
    %1448 = vmatpush1.msra.mxu0 0.0
    %1449 = vmatprep.subr.mxu0 0.0
    %1450 = vmatpush1.msra.mxu0 0.0
    %1451 = vmatprep.subr.mxu0 0.0
    %1452 = vmatpush1.msra.mxu0 0.0
    %1453 = vmatprep.subr.mxu0 0.0
    %1454 = vmatpush1.msra.mxu0 0.0
    %1455 = vmatprep.subr.mxu0 0.0
    %1456 = vmatpush1.msra.mxu0 0.0
    %1457 = vmatprep.subr.mxu0 0.0
    %1458 = vmatpush1.msra.mxu0 0.0
    %1459 = vmatprep.subr.mxu0 0.0
    %1460 = vmatpush1.msra.mxu0 0.0
    %1461 = vmatprep.subr.mxu0 0.0
    %1462 = vmatpush1.msra.mxu0 0.0
    %1463 = vmatprep.subr.mxu0 0.0
    %1464 = vmatpush1.msra.mxu0 0.0
    %1465 = vmatprep.subr.mxu0 0.0
    %1466 = vmatpush1.msra.mxu0 0.0
    %1467 = vmatprep.subr.mxu0 0.0
    %1468 = vmatpush1.msra.mxu0 0.0
    %1469 = vmatprep.subr.mxu0 0.0
    %1470 = vmatpush1.msra.mxu0 0.0
    %1471 = vmatprep.subr.mxu0 0.0
    %1472 = vmatpush1.msra.mxu0 0.0
    %1473 = vmatprep.subr.mxu0 0.0
    %1474 = vmatpush1.msra.mxu0 0.0
    %1475 = vmatprep.subr.mxu0 0.0
    %1476 = vmatpush1.msra.mxu0 0.0
    %1477 = vmatprep.subr.mxu0 0.0
    %1478 = vmatpush1.msra.mxu0 0.0
    %1479 = vmatprep.subr.mxu0 0.0
    %1480 = vmatpush1.msra.mxu0 0.0
    %1481 = vmatprep.subr.mxu0 0.0
    %1482 = vmatpush1.msra.mxu0 0.0
    %1483 = vmatprep.subr.mxu0 0.0
    %1484 = vmatpush1.msra.mxu0 0.0
    %1485 = vmatprep.subr.mxu0 0.0
    %1486 = vmatpush1.msra.mxu0 0.0
    %1487 = vmatprep.subr.mxu0 0.0
    %1488 = vmatpush1.msra.mxu0 0.0
    %1489 = vmatprep.subr.mxu0 0.0
    %1490 = vmatpush1.msra.mxu0 0.0
    %1491 = vmatprep.subr.mxu0 0.0
    %1492 = vmatpush1.msra.mxu0 0.0
    %1493 = vmatprep.subr.mxu0 0.0
    %1494 = vmatpush1.msra.mxu0 0.0
    %1495 = vmatprep.subr.mxu0 0.0
    %1496 = vmatpush1.msra.mxu0 0.0
    %1497 = vmatprep.subr.mxu0 0.0
    %1498 = vmatpush1.msra.mxu0 0.0
    %1499 = vmatprep.subr.mxu0 0.0
    %1500 = vmatpush1.msra.mxu0 0.0
    %1501 = vmatprep.subr.mxu0 0.0
    %1502 = vmatpush1.msra.mxu0 0.0
    %1503 = vmatprep.subr.mxu0 0.0
    %1504 = vmatpush1.msra.mxu0 0.0
    %1505 = vmatprep.subr.mxu0 0.0
    %1506 = vmatpush1.msra.mxu0 0.0
    %1507 = vmatprep.mubr.f32.mxu0 0.0
    %1508 = vmatmul.mubr.f32.gmra.mrb[0].mxu0 %v1441
    %v1509 = vpop.f32.mrb[0].mxu0
    %v1510 = vadd.f32 0.0, %v1509
    %v1511 = vpop.f32.mrb[0].mxu0
    %1512 = vdwg.mxu0
    %v1513 = vmax.f32 %v1433, %v1510
    %v1514 = vsub.f32 %v1433, %v1513
    %v1515 = vmul.f32 %v1514, 1.442695
    %v1516 = vpow.pop %v1515
    %v1517 = vsub.f32 %v1510, %v1513
    %v1518 = vmul.f32 %v1517, 1.442695
    %v1519 = vpow.pop %v1518
    %v1520 = vadd.f32 %v1516, %v1519
    %v1521 = vrcp.pop %v1520
    %v1522 = vmul.f32 %v1516, %v1521
    %vm1523 = vcmask 15360
    %v1525 = vsel %vm1523, %v1522, 0
    %vm1527 = vcmask 1041408
    %v1529 = vsel %vm1527, %v35, 0
    %1531 = vmatprep.subr.mxu0 0.0
    %1532 = vmatpush1.msra.mxu0 %v1529
    %1533 = vmatprep.subr.mxu0 0.0
    %1534 = vmatpush1.msra.mxu0 0.0
    %1535 = vmatprep.subr.mxu0 0.0
    %1536 = vmatpush1.msra.mxu0 0.0
    %1537 = vmatprep.subr.mxu0 0.0
    %1538 = vmatpush1.msra.mxu0 0.0
    %1539 = vmatprep.subr.mxu0 0.0
    %1540 = vmatpush1.msra.mxu0 0.0
    %1541 = vmatprep.subr.mxu0 0.0
    %1542 = vmatpush1.msra.mxu0 0.0
    %1543 = vmatprep.subr.mxu0 0.0
    %1544 = vmatpush1.msra.mxu0 0.0
    %1545 = vmatprep.subr.mxu0 0.0
    %1546 = vmatpush1.msra.mxu0 0.0
    %1547 = vmatprep.subr.mxu0 0.0
    %1548 = vmatpush1.msra.mxu0 0.0
    %1549 = vmatprep.subr.mxu0 0.0
    %1550 = vmatpush1.msra.mxu0 0.0
    %1551 = vmatprep.subr.mxu0 0.0
    %1552 = vmatpush1.msra.mxu0 0.0
    %1553 = vmatprep.subr.mxu0 0.0
    %1554 = vmatpush1.msra.mxu0 0.0
    %1555 = vmatprep.subr.mxu0 0.0
    %1556 = vmatpush1.msra.mxu0 0.0
    %1557 = vmatprep.subr.mxu0 0.0
    %1558 = vmatpush1.msra.mxu0 0.0
    %1559 = vmatprep.subr.mxu0 0.0
    %1560 = vmatpush1.msra.mxu0 0.0
    %1561 = vmatprep.subr.mxu0 0.0
    %1562 = vmatpush1.msra.mxu0 0.0
    %1563 = vmatprep.subr.mxu0 0.0
    %1564 = vmatpush1.msra.mxu0 0.0
    %1565 = vmatprep.subr.mxu0 0.0
    %1566 = vmatpush1.msra.mxu0 0.0
    %1567 = vmatprep.subr.mxu0 0.0
    %1568 = vmatpush1.msra.mxu0 0.0
    %1569 = vmatprep.subr.mxu0 0.0
    %1570 = vmatpush1.msra.mxu0 0.0
    %1571 = vmatprep.subr.mxu0 0.0
    %1572 = vmatpush1.msra.mxu0 0.0
    %1573 = vmatprep.subr.mxu0 0.0
    %1574 = vmatpush1.msra.mxu0 0.0
    %1575 = vmatprep.subr.mxu0 0.0
    %1576 = vmatpush1.msra.mxu0 0.0
    %1577 = vmatprep.subr.mxu0 0.0
    %1578 = vmatpush1.msra.mxu0 0.0
    %1579 = vmatprep.subr.mxu0 0.0
    %1580 = vmatpush1.msra.mxu0 0.0
    %1581 = vmatprep.subr.mxu0 0.0
    %1582 = vmatpush1.msra.mxu0 0.0
    %1583 = vmatprep.subr.mxu0 0.0
    %1584 = vmatpush1.msra.mxu0 0.0
    %1585 = vmatprep.subr.mxu0 0.0
    %1586 = vmatpush1.msra.mxu0 0.0
    %1587 = vmatprep.subr.mxu0 0.0
    %1588 = vmatpush1.msra.mxu0 0.0
    %1589 = vmatprep.subr.mxu0 0.0
    %1590 = vmatpush1.msra.mxu0 0.0
    %1591 = vmatprep.subr.mxu0 0.0
    %1592 = vmatpush1.msra.mxu0 0.0
    %1593 = vmatprep.subr.mxu0 0.0
    %1594 = vmatpush1.msra.mxu0 0.0
    %1595 = vmatprep.mubr.f32.mxu0 0.0
    %1596 = vmatmul.mubr.f32.gmra.mrb[0].mxu0 %v1525
    %v1597 = vpop.f32.mrb[0].mxu0
    %v1598 = vadd.f32 0.0, %v1597
    %v1599 = vpop.f32.mrb[0].mxu0
    %1600 = vdwg.mxu0
    %v1601 = vmul.f32 %v1519, %v1521
    %v1603 = vsel %vm1523, %v1601, 0
    %1605 = vmatprep.subr.mxu0 0.0
    %1606 = vmatpush1.msra.mxu0 %v1529
    %1607 = vmatprep.subr.mxu0 0.0
    %1608 = vmatpush1.msra.mxu0 0.0
    %1609 = vmatprep.subr.mxu0 0.0
    %1610 = vmatpush1.msra.mxu0 0.0
    %1611 = vmatprep.subr.mxu0 0.0
    %1612 = vmatpush1.msra.mxu0 0.0
    %1613 = vmatprep.subr.mxu0 0.0
    %1614 = vmatpush1.msra.mxu0 0.0
    %1615 = vmatprep.subr.mxu0 0.0
    %1616 = vmatpush1.msra.mxu0 0.0
    %1617 = vmatprep.subr.mxu0 0.0
    %1618 = vmatpush1.msra.mxu0 0.0
    %1619 = vmatprep.subr.mxu0 0.0
    %1620 = vmatpush1.msra.mxu0 0.0
    %1621 = vmatprep.subr.mxu0 0.0
    %1622 = vmatpush1.msra.mxu0 0.0
    %1623 = vmatprep.subr.mxu0 0.0
    %1624 = vmatpush1.msra.mxu0 0.0
    %1625 = vmatprep.subr.mxu0 0.0
    %1626 = vmatpush1.msra.mxu0 0.0
    %1627 = vmatprep.subr.mxu0 0.0
    %1628 = vmatpush1.msra.mxu0 0.0
    %1629 = vmatprep.subr.mxu0 0.0
    %1630 = vmatpush1.msra.mxu0 0.0
    %1631 = vmatprep.subr.mxu0 0.0
    %1632 = vmatpush1.msra.mxu0 0.0
    %1633 = vmatprep.subr.mxu0 0.0
    %1634 = vmatpush1.msra.mxu0 0.0
    %1635 = vmatprep.subr.mxu0 0.0
    %1636 = vmatpush1.msra.mxu0 0.0
    %1637 = vmatprep.subr.mxu0 0.0
    %1638 = vmatpush1.msra.mxu0 0.0
    %1639 = vmatprep.subr.mxu0 0.0
    %1640 = vmatpush1.msra.mxu0 0.0
    %1641 = vmatprep.subr.mxu0 0.0
    %1642 = vmatpush1.msra.mxu0 0.0
    %1643 = vmatprep.subr.mxu0 0.0
    %1644 = vmatpush1.msra.mxu0 0.0
    %1645 = vmatprep.subr.mxu0 0.0
    %1646 = vmatpush1.msra.mxu0 0.0
    %1647 = vmatprep.subr.mxu0 0.0
    %1648 = vmatpush1.msra.mxu0 0.0
    %1649 = vmatprep.subr.mxu0 0.0
    %1650 = vmatpush1.msra.mxu0 0.0
    %1651 = vmatprep.subr.mxu0 0.0
    %1652 = vmatpush1.msra.mxu0 0.0
    %1653 = vmatprep.subr.mxu0 0.0
    %1654 = vmatpush1.msra.mxu0 0.0
    %1655 = vmatprep.subr.mxu0 0.0
    %1656 = vmatpush1.msra.mxu0 0.0
    %1657 = vmatprep.subr.mxu0 0.0
    %1658 = vmatpush1.msra.mxu0 0.0
    %1659 = vmatprep.subr.mxu0 0.0
    %1660 = vmatpush1.msra.mxu0 0.0
    %1661 = vmatprep.subr.mxu0 0.0
    %1662 = vmatpush1.msra.mxu0 0.0
    %1663 = vmatprep.subr.mxu0 0.0
    %1664 = vmatpush1.msra.mxu0 0.0
    %1665 = vmatprep.subr.mxu0 0.0
    %1666 = vmatpush1.msra.mxu0 0.0
    %1667 = vmatprep.subr.mxu0 0.0
    %1668 = vmatpush1.msra.mxu0 0.0
    %1669 = vmatprep.mubr.f32.mxu0 0.0
    %1670 = vmatmul.mubr.f32.gmra.mrb[0].mxu0 %v1603
    %v1671 = vpop.f32.mrb[0].mxu0
    %v1672 = vadd.f32 0.0, %v1671
    %v1673 = vpop.f32.mrb[0].mxu0
    %1674 = vdwg.mxu0
    %1675 = vrot.lane.b32.xlu0 %v1356, 122
    %v1676 = vpop.permute.xlu0 %1675
    %v1678 = vmul.f32 %v1598, %v1676
    %1679 = vrot.lane.b32.xlu0 %v1437, 122
    %v1680 = vpop.permute.xlu0 %1679
    %v1682 = vmul.f32 %v1672, %v1680
    %v1683 = vadd.f32 %v1678, %v1682
    %v1684 = vld [vmem:[%s2 + $0x130] sm:$0xff]
    %v1685 = vld [vmem:[%s2 + $0x138] sm:$0xf]
    %v1686 = vld [vmem:[%s2 + $0x140] sm:$0x3]
    %v1688 = vsel %vm133, %v1685, 0
    %1690 = vmatprep.subr.mxu0 0.0
    %1691 = vmatpush1.msra.mxu0 %v1684
    %1692 = vmatprep.subr.mxu0 0.0
    %1693 = vmatpush1.msra.mxu0 %v1688
    %1694 = vmatprep.subr.mxu0 0.0
    %1695 = vmatpush1.msra.mxu0 0.0
    %1696 = vmatprep.subr.mxu0 0.0
    %1697 = vmatpush1.msra.mxu0 0.0
    %1698 = vmatprep.subr.mxu0 0.0
    %1699 = vmatpush1.msra.mxu0 0.0
    %1700 = vmatprep.subr.mxu0 0.0
    %1701 = vmatpush1.msra.mxu0 0.0
    %1702 = vmatprep.subr.mxu0 0.0
    %1703 = vmatpush1.msra.mxu0 0.0
    %1704 = vmatprep.subr.mxu0 0.0
    %1705 = vmatpush1.msra.mxu0 0.0
    %1706 = vmatprep.subr.mxu0 0.0
    %1707 = vmatpush1.msra.mxu0 0.0
    %1708 = vmatprep.subr.mxu0 0.0
    %1709 = vmatpush1.msra.mxu0 0.0
    %1710 = vmatprep.subr.mxu0 0.0
    %1711 = vmatpush1.msra.mxu0 0.0
    %1712 = vmatprep.subr.mxu0 0.0
    %1713 = vmatpush1.msra.mxu0 0.0
    %1714 = vmatprep.subr.mxu0 0.0
    %1715 = vmatpush1.msra.mxu0 0.0
    %1716 = vmatprep.subr.mxu0 0.0
    %1717 = vmatpush1.msra.mxu0 0.0
    %1718 = vmatprep.subr.mxu0 0.0
    %1719 = vmatpush1.msra.mxu0 0.0
    %1720 = vmatprep.subr.mxu0 0.0
    %1721 = vmatpush1.msra.mxu0 0.0
    %1722 = vmatprep.subr.mxu0 0.0
    %1723 = vmatpush1.msra.mxu0 0.0
    %1724 = vmatprep.subr.mxu0 0.0
    %1725 = vmatpush1.msra.mxu0 0.0
    %1726 = vmatprep.subr.mxu0 0.0
    %1727 = vmatpush1.msra.mxu0 0.0
    %1728 = vmatprep.subr.mxu0 0.0
    %1729 = vmatpush1.msra.mxu0 0.0
    %1730 = vmatprep.subr.mxu0 0.0
    %1731 = vmatpush1.msra.mxu0 0.0
    %1732 = vmatprep.subr.mxu0 0.0
    %1733 = vmatpush1.msra.mxu0 0.0
    %1734 = vmatprep.subr.mxu0 0.0
    %1735 = vmatpush1.msra.mxu0 0.0
    %1736 = vmatprep.subr.mxu0 0.0
    %1737 = vmatpush1.msra.mxu0 0.0
    %1738 = vmatprep.subr.mxu0 0.0
    %1739 = vmatpush1.msra.mxu0 0.0
    %1740 = vmatprep.subr.mxu0 0.0
    %1741 = vmatpush1.msra.mxu0 0.0
    %1742 = vmatprep.subr.mxu0 0.0
    %1743 = vmatpush1.msra.mxu0 0.0
    %1744 = vmatprep.subr.mxu0 0.0
    %1745 = vmatpush1.msra.mxu0 0.0
    %1746 = vmatprep.subr.mxu0 0.0
    %1747 = vmatpush1.msra.mxu0 0.0
    %1748 = vmatprep.subr.mxu0 0.0
    %1749 = vmatpush1.msra.mxu0 0.0
    %1750 = vmatprep.subr.mxu0 0.0
    %1751 = vmatpush1.msra.mxu0 0.0
    %1752 = vmatprep.subr.mxu0 0.0
    %1753 = vmatpush1.msra.mxu0 0.0
    %1754 = vmatprep.mubr.f32.mxu0 0.0
    %1755 = vmatmul.mubr.f32.gmra.mrb[0].mxu0 %v131
    %v1756 = vpop.f32.mrb[0].mxu0
    %v1757 = vadd.f32 %v1686, %v1756
    %v1758 = vpop.f32.mrb[0].mxu0
    %1759 = vdwg.mxu0
    %v1760 = vlaneseq
    %v1761 = vshrl.u32 %v1760, 7
    %v1762 = vsub.s32 0, %v1761
    %v1763 = vrot.slane %v1757, %v1762
    %1765 = vrot.lane.b32.xlu0 %v1763, 120
    %v1766 = vpop.permute.xlu0 %1765
    %v1768 = vmul.f32 %v1757, %v1766
    %vm1769 = vcmask 64512
    %v1771 = vsel %vm1769, %v1768, 0
    %1773 = vmatprep.subr.mxu0 0.0
    %1774 = vmatpush1.msra.mxu0 %v36
    %1775 = vmatprep.subr.mxu0 0.0
    %1776 = vmatpush1.msra.mxu0 0.0
    %1777 = vmatprep.subr.mxu0 0.0
    %1778 = vmatpush1.msra.mxu0 0.0
    %1779 = vmatprep.subr.mxu0 0.0
    %1780 = vmatpush1.msra.mxu0 0.0
    %1781 = vmatprep.subr.mxu0 0.0
    %1782 = vmatpush1.msra.mxu0 0.0
    %1783 = vmatprep.subr.mxu0 0.0
    %1784 = vmatpush1.msra.mxu0 0.0
    %1785 = vmatprep.subr.mxu0 0.0
    %1786 = vmatpush1.msra.mxu0 0.0
    %1787 = vmatprep.subr.mxu0 0.0
    %1788 = vmatpush1.msra.mxu0 0.0
    %1789 = vmatprep.subr.mxu0 0.0
    %1790 = vmatpush1.msra.mxu0 0.0
    %1791 = vmatprep.subr.mxu0 0.0
    %1792 = vmatpush1.msra.mxu0 0.0
    %1793 = vmatprep.subr.mxu0 0.0
    %1794 = vmatpush1.msra.mxu0 0.0
    %1795 = vmatprep.subr.mxu0 0.0
    %1796 = vmatpush1.msra.mxu0 0.0
    %1797 = vmatprep.subr.mxu0 0.0
    %1798 = vmatpush1.msra.mxu0 0.0
    %1799 = vmatprep.subr.mxu0 0.0
    %1800 = vmatpush1.msra.mxu0 0.0
    %1801 = vmatprep.subr.mxu0 0.0
    %1802 = vmatpush1.msra.mxu0 0.0
    %1803 = vmatprep.subr.mxu0 0.0
    %1804 = vmatpush1.msra.mxu0 0.0
    %1805 = vmatprep.subr.mxu0 0.0
    %1806 = vmatpush1.msra.mxu0 0.0
    %1807 = vmatprep.subr.mxu0 0.0
    %1808 = vmatpush1.msra.mxu0 0.0
    %1809 = vmatprep.subr.mxu0 0.0
    %1810 = vmatpush1.msra.mxu0 0.0
    %1811 = vmatprep.subr.mxu0 0.0
    %1812 = vmatpush1.msra.mxu0 0.0
    %1813 = vmatprep.subr.mxu0 0.0
    %1814 = vmatpush1.msra.mxu0 0.0
    %1815 = vmatprep.subr.mxu0 0.0
    %1816 = vmatpush1.msra.mxu0 0.0
    %1817 = vmatprep.subr.mxu0 0.0
    %1818 = vmatpush1.msra.mxu0 0.0
    %1819 = vmatprep.subr.mxu0 0.0
    %1820 = vmatpush1.msra.mxu0 0.0
    %1821 = vmatprep.subr.mxu0 0.0
    %1822 = vmatpush1.msra.mxu0 0.0
    %1823 = vmatprep.subr.mxu0 0.0
    %1824 = vmatpush1.msra.mxu0 0.0
    %1825 = vmatprep.subr.mxu0 0.0
    %1826 = vmatpush1.msra.mxu0 0.0
    %1827 = vmatprep.subr.mxu0 0.0
    %1828 = vmatpush1.msra.mxu0 0.0
    %1829 = vmatprep.subr.mxu0 0.0
    %1830 = vmatpush1.msra.mxu0 0.0
    %1831 = vmatprep.subr.mxu0 0.0
    %1832 = vmatpush1.msra.mxu0 0.0
    %1833 = vmatprep.subr.mxu0 0.0
    %1834 = vmatpush1.msra.mxu0 0.0
    %1835 = vmatprep.subr.mxu0 0.0
    %1836 = vmatpush1.msra.mxu0 0.0
    %1837 = vmatprep.mubr.f32.mxu0 0.0
    %1838 = vmatmul.mubr.f32.gmra.mrb[0].mxu0 %v1771
    %v1839 = vpop.f32.mrb[0].mxu0
    %v1840 = vadd.f32 0.0, %v1839
    %v1841 = vpop.f32.mrb[0].mxu0
    %1842 = vdwg.mxu0
    %v1843 = vlaneseq
    %v1844 = vshrl.u32 %v1843, 7
    %v1845 = vsub.s32 1, %v1844
    %v1846 = vrot.slane %v1757, %v1845
    %1848 = vrot.lane.b32.xlu0 %v1846, 120
    %v1849 = vpop.permute.xlu0 %1848
    %v1851 = vmul.f32 %v1757, %v1849
    %v1853 = vsel %vm1769, %v1851, 0
    %1855 = vmatprep.subr.mxu0 0.0
    %1856 = vmatpush1.msra.mxu0 %v36
    %1857 = vmatprep.subr.mxu0 0.0
    %1858 = vmatpush1.msra.mxu0 0.0
    %1859 = vmatprep.subr.mxu0 0.0
    %1860 = vmatpush1.msra.mxu0 0.0
    %1861 = vmatprep.subr.mxu0 0.0
    %1862 = vmatpush1.msra.mxu0 0.0
    %1863 = vmatprep.subr.mxu0 0.0
    %1864 = vmatpush1.msra.mxu0 0.0
    %1865 = vmatprep.subr.mxu0 0.0
    %1866 = vmatpush1.msra.mxu0 0.0
    %1867 = vmatprep.subr.mxu0 0.0
    %1868 = vmatpush1.msra.mxu0 0.0
    %1869 = vmatprep.subr.mxu0 0.0
    %1870 = vmatpush1.msra.mxu0 0.0
    %1871 = vmatprep.subr.mxu0 0.0
    %1872 = vmatpush1.msra.mxu0 0.0
    %1873 = vmatprep.subr.mxu0 0.0
    %1874 = vmatpush1.msra.mxu0 0.0
    %1875 = vmatprep.subr.mxu0 0.0
    %1876 = vmatpush1.msra.mxu0 0.0
    %1877 = vmatprep.subr.mxu0 0.0
    %1878 = vmatpush1.msra.mxu0 0.0
    %1879 = vmatprep.subr.mxu0 0.0
    %1880 = vmatpush1.msra.mxu0 0.0
    %1881 = vmatprep.subr.mxu0 0.0
    %1882 = vmatpush1.msra.mxu0 0.0
    %1883 = vmatprep.subr.mxu0 0.0
    %1884 = vmatpush1.msra.mxu0 0.0
    %1885 = vmatprep.subr.mxu0 0.0
    %1886 = vmatpush1.msra.mxu0 0.0
    %1887 = vmatprep.subr.mxu0 0.0
    %1888 = vmatpush1.msra.mxu0 0.0
    %1889 = vmatprep.subr.mxu0 0.0
    %1890 = vmatpush1.msra.mxu0 0.0
    %1891 = vmatprep.subr.mxu0 0.0
    %1892 = vmatpush1.msra.mxu0 0.0
    %1893 = vmatprep.subr.mxu0 0.0
    %1894 = vmatpush1.msra.mxu0 0.0
    %1895 = vmatprep.subr.mxu0 0.0
    %1896 = vmatpush1.msra.mxu0 0.0
    %1897 = vmatprep.subr.mxu0 0.0
    %1898 = vmatpush1.msra.mxu0 0.0
    %1899 = vmatprep.subr.mxu0 0.0
    %1900 = vmatpush1.msra.mxu0 0.0
    %1901 = vmatprep.subr.mxu0 0.0
    %1902 = vmatpush1.msra.mxu0 0.0
    %1903 = vmatprep.subr.mxu0 0.0
    %1904 = vmatpush1.msra.mxu0 0.0
    %1905 = vmatprep.subr.mxu0 0.0
    %1906 = vmatpush1.msra.mxu0 0.0
    %1907 = vmatprep.subr.mxu0 0.0
    %1908 = vmatpush1.msra.mxu0 0.0
    %1909 = vmatprep.subr.mxu0 0.0
    %1910 = vmatpush1.msra.mxu0 0.0
    %1911 = vmatprep.subr.mxu0 0.0
    %1912 = vmatpush1.msra.mxu0 0.0
    %1913 = vmatprep.subr.mxu0 0.0
    %1914 = vmatpush1.msra.mxu0 0.0
    %1915 = vmatprep.subr.mxu0 0.0
    %1916 = vmatpush1.msra.mxu0 0.0
    %1917 = vmatprep.subr.mxu0 0.0
    %1918 = vmatpush1.msra.mxu0 0.0
    %1919 = vmatprep.mubr.f32.mxu0 0.0
    %1920 = vmatmul.mubr.f32.gmra.mrb[0].mxu0 %v1853
    %v1921 = vpop.f32.mrb[0].mxu0
    %v1922 = vadd.f32 0.0, %v1921
    %v1923 = vpop.f32.mrb[0].mxu0
    %1924 = vdwg.mxu0
    %v1925 = vmax.f32 %v1840, %v1922
    %v1926 = vsub.f32 %v1840, %v1925
    %v1927 = vmul.f32 %v1926, 1.442695
    %v1928 = vpow.pop %v1927
    %v1929 = vsub.f32 %v1922, %v1925
    %v1930 = vmul.f32 %v1929, 1.442695
    %v1931 = vpow.pop %v1930
    %v1932 = vadd.f32 %v1928, %v1931
    %v1933 = vrcp.pop %v1932
    %v1934 = vmul.f32 %v1928, %v1933
    %v1936 = vsel %vm1523, %v1934, 0
    %v1939 = vsel %vm1527, %v37, 0
    %1941 = vmatprep.subr.mxu0 0.0
    %1942 = vmatpush1.msra.mxu0 %v1939
    %1943 = vmatprep.subr.mxu0 0.0
    %1944 = vmatpush1.msra.mxu0 0.0
    %1945 = vmatprep.subr.mxu0 0.0
    %1946 = vmatpush1.msra.mxu0 0.0
    %1947 = vmatprep.subr.mxu0 0.0
    %1948 = vmatpush1.msra.mxu0 0.0
    %1949 = vmatprep.subr.mxu0 0.0
    %1950 = vmatpush1.msra.mxu0 0.0
    %1951 = vmatprep.subr.mxu0 0.0
    %1952 = vmatpush1.msra.mxu0 0.0
    %1953 = vmatprep.subr.mxu0 0.0
    %1954 = vmatpush1.msra.mxu0 0.0
    %1955 = vmatprep.subr.mxu0 0.0
    %1956 = vmatpush1.msra.mxu0 0.0
    %1957 = vmatprep.subr.mxu0 0.0
    %1958 = vmatpush1.msra.mxu0 0.0
    %1959 = vmatprep.subr.mxu0 0.0
    %1960 = vmatpush1.msra.mxu0 0.0
    %1961 = vmatprep.subr.mxu0 0.0
    %1962 = vmatpush1.msra.mxu0 0.0
    %1963 = vmatprep.subr.mxu0 0.0
    %1964 = vmatpush1.msra.mxu0 0.0
    %1965 = vmatprep.subr.mxu0 0.0
    %1966 = vmatpush1.msra.mxu0 0.0
    %1967 = vmatprep.subr.mxu0 0.0
    %1968 = vmatpush1.msra.mxu0 0.0
    %1969 = vmatprep.subr.mxu0 0.0
    %1970 = vmatpush1.msra.mxu0 0.0
    %1971 = vmatprep.subr.mxu0 0.0
    %1972 = vmatpush1.msra.mxu0 0.0
    %1973 = vmatprep.subr.mxu0 0.0
    %1974 = vmatpush1.msra.mxu0 0.0
    %1975 = vmatprep.subr.mxu0 0.0
    %1976 = vmatpush1.msra.mxu0 0.0
    %1977 = vmatprep.subr.mxu0 0.0
    %1978 = vmatpush1.msra.mxu0 0.0
    %1979 = vmatprep.subr.mxu0 0.0
    %1980 = vmatpush1.msra.mxu0 0.0
    %1981 = vmatprep.subr.mxu0 0.0
    %1982 = vmatpush1.msra.mxu0 0.0
    %1983 = vmatprep.subr.mxu0 0.0
    %1984 = vmatpush1.msra.mxu0 0.0
    %1985 = vmatprep.subr.mxu0 0.0
    %1986 = vmatpush1.msra.mxu0 0.0
    %1987 = vmatprep.subr.mxu0 0.0
    %1988 = vmatpush1.msra.mxu0 0.0
    %1989 = vmatprep.subr.mxu0 0.0
    %1990 = vmatpush1.msra.mxu0 0.0
    %1991 = vmatprep.subr.mxu0 0.0
    %1992 = vmatpush1.msra.mxu0 0.0
    %1993 = vmatprep.subr.mxu0 0.0
    %1994 = vmatpush1.msra.mxu0 0.0
    %1995 = vmatprep.subr.mxu0 0.0
    %1996 = vmatpush1.msra.mxu0 0.0
    %1997 = vmatprep.subr.mxu0 0.0
    %1998 = vmatpush1.msra.mxu0 0.0
    %1999 = vmatprep.subr.mxu0 0.0
    %2000 = vmatpush1.msra.mxu0 0.0
    %2001 = vmatprep.subr.mxu0 0.0
    %2002 = vmatpush1.msra.mxu0 0.0
    %2003 = vmatprep.subr.mxu0 0.0
    %2004 = vmatpush1.msra.mxu0 0.0
    %2005 = vmatprep.mubr.f32.mxu0 0.0
    %2006 = vmatmul.mubr.f32.gmra.mrb[0].mxu0 %v1936
    %v2007 = vpop.f32.mrb[0].mxu0
    %v2008 = vadd.f32 0.0, %v2007
    %v2009 = vpop.f32.mrb[0].mxu0
    %2010 = vdwg.mxu0
    %v2011 = vmul.f32 %v1931, %v1933
    %v2013 = vsel %vm1523, %v2011, 0
    %2015 = vmatprep.subr.mxu0 0.0
    %2016 = vmatpush1.msra.mxu0 %v1939
    %2017 = vmatprep.subr.mxu0 0.0
    %2018 = vmatpush1.msra.mxu0 0.0
    %2019 = vmatprep.subr.mxu0 0.0
    %2020 = vmatpush1.msra.mxu0 0.0
    %2021 = vmatprep.subr.mxu0 0.0
    %2022 = vmatpush1.msra.mxu0 0.0
    %2023 = vmatprep.subr.mxu0 0.0
    %2024 = vmatpush1.msra.mxu0 0.0
    %2025 = vmatprep.subr.mxu0 0.0
    %2026 = vmatpush1.msra.mxu0 0.0
    %2027 = vmatprep.subr.mxu0 0.0
    %2028 = vmatpush1.msra.mxu0 0.0
    %2029 = vmatprep.subr.mxu0 0.0
    %2030 = vmatpush1.msra.mxu0 0.0
    %2031 = vmatprep.subr.mxu0 0.0
    %2032 = vmatpush1.msra.mxu0 0.0
    %2033 = vmatprep.subr.mxu0 0.0
    %2034 = vmatpush1.msra.mxu0 0.0
    %2035 = vmatprep.subr.mxu0 0.0
    %2036 = vmatpush1.msra.mxu0 0.0
    %2037 = vmatprep.subr.mxu0 0.0
    %2038 = vmatpush1.msra.mxu0 0.0
    %2039 = vmatprep.subr.mxu0 0.0
    %2040 = vmatpush1.msra.mxu0 0.0
    %2041 = vmatprep.subr.mxu0 0.0
    %2042 = vmatpush1.msra.mxu0 0.0
    %2043 = vmatprep.subr.mxu0 0.0
    %2044 = vmatpush1.msra.mxu0 0.0
    %2045 = vmatprep.subr.mxu0 0.0
    %2046 = vmatpush1.msra.mxu0 0.0
    %2047 = vmatprep.subr.mxu0 0.0
    %2048 = vmatpush1.msra.mxu0 0.0
    %2049 = vmatprep.subr.mxu0 0.0
    %2050 = vmatpush1.msra.mxu0 0.0
    %2051 = vmatprep.subr.mxu0 0.0
    %2052 = vmatpush1.msra.mxu0 0.0
    %2053 = vmatprep.subr.mxu0 0.0
    %2054 = vmatpush1.msra.mxu0 0.0
    %2055 = vmatprep.subr.mxu0 0.0
    %2056 = vmatpush1.msra.mxu0 0.0
    %2057 = vmatprep.subr.mxu0 0.0
    %2058 = vmatpush1.msra.mxu0 0.0
    %2059 = vmatprep.subr.mxu0 0.0
    %2060 = vmatpush1.msra.mxu0 0.0
    %2061 = vmatprep.subr.mxu0 0.0
    %2062 = vmatpush1.msra.mxu0 0.0
    %2063 = vmatprep.subr.mxu0 0.0
    %2064 = vmatpush1.msra.mxu0 0.0
    %2065 = vmatprep.subr.mxu0 0.0
    %2066 = vmatpush1.msra.mxu0 0.0
    %2067 = vmatprep.subr.mxu0 0.0
    %2068 = vmatpush1.msra.mxu0 0.0
    %2069 = vmatprep.subr.mxu0 0.0
    %2070 = vmatpush1.msra.mxu0 0.0
    %2071 = vmatprep.subr.mxu0 0.0
    %2072 = vmatpush1.msra.mxu0 0.0
    %2073 = vmatprep.subr.mxu0 0.0
    %2074 = vmatpush1.msra.mxu0 0.0
    %2075 = vmatprep.subr.mxu0 0.0
    %2076 = vmatpush1.msra.mxu0 0.0
    %2077 = vmatprep.subr.mxu0 0.0
    %2078 = vmatpush1.msra.mxu0 0.0
    %2079 = vmatprep.mubr.f32.mxu0 0.0
    %2080 = vmatmul.mubr.f32.gmra.mrb[0].mxu0 %v2013
    %v2081 = vpop.f32.mrb[0].mxu0
    %v2082 = vadd.f32 0.0, %v2081
    %v2083 = vpop.f32.mrb[0].mxu0
    %2084 = vdwg.mxu0
    %2085 = vrot.lane.b32.xlu0 %v1763, 112
    %v2086 = vpop.permute.xlu0 %2085
    %v2088 = vmul.f32 %v2008, %v2086
    %2089 = vrot.lane.b32.xlu0 %v1846, 112
    %v2090 = vpop.permute.xlu0 %2089
    %v2092 = vmul.f32 %v2082, %v2090
    %v2093 = vadd.f32 %v2088, %v2092
    %v2095 = vrot.slane %v2093, 1
    %v2097 = vadd.f32 %v2093, %v2095
    %v2098 = vld [vmem:[%s2 + $0x148] sm:$0x3f]
    %v2099 = vld [vmem:[%s2 + $0x150] sm:$0xff]
    %v2101 = vsel %vm1769, %v2097, 0
    %2103 = vmatprep.subr.mxu0 0.0
    %2104 = vmatpush1.msra.mxu0 %v2099
    %2105 = vmatprep.subr.mxu0 0.0
    %2106 = vmatpush1.msra.mxu0 0.0
    %2107 = vmatprep.subr.mxu0 0.0
    %2108 = vmatpush1.msra.mxu0 0.0
    %2109 = vmatprep.subr.mxu0 0.0
    %2110 = vmatpush1.msra.mxu0 0.0
    %2111 = vmatprep.subr.mxu0 0.0
    %2112 = vmatpush1.msra.mxu0 0.0
    %2113 = vmatprep.subr.mxu0 0.0
    %2114 = vmatpush1.msra.mxu0 0.0
    %2115 = vmatprep.subr.mxu0 0.0
    %2116 = vmatpush1.msra.mxu0 0.0
    %2117 = vmatprep.subr.mxu0 0.0
    %2118 = vmatpush1.msra.mxu0 0.0
    %2119 = vmatprep.subr.mxu0 0.0
    %2120 = vmatpush1.msra.mxu0 0.0
    %2121 = vmatprep.subr.mxu0 0.0
    %2122 = vmatpush1.msra.mxu0 0.0
    %2123 = vmatprep.subr.mxu0 0.0
    %2124 = vmatpush1.msra.mxu0 0.0
    %2125 = vmatprep.subr.mxu0 0.0
    %2126 = vmatpush1.msra.mxu0 0.0
    %2127 = vmatprep.subr.mxu0 0.0
    %2128 = vmatpush1.msra.mxu0 0.0
    %2129 = vmatprep.subr.mxu0 0.0
    %2130 = vmatpush1.msra.mxu0 0.0
    %2131 = vmatprep.subr.mxu0 0.0
    %2132 = vmatpush1.msra.mxu0 0.0
    %2133 = vmatprep.subr.mxu0 0.0
    %2134 = vmatpush1.msra.mxu0 0.0
    %2135 = vmatprep.subr.mxu0 0.0
    %2136 = vmatpush1.msra.mxu0 0.0
    %2137 = vmatprep.subr.mxu0 0.0
    %2138 = vmatpush1.msra.mxu0 0.0
    %2139 = vmatprep.subr.mxu0 0.0
    %2140 = vmatpush1.msra.mxu0 0.0
    %2141 = vmatprep.subr.mxu0 0.0
    %2142 = vmatpush1.msra.mxu0 0.0
    %2143 = vmatprep.subr.mxu0 0.0
    %2144 = vmatpush1.msra.mxu0 0.0
    %2145 = vmatprep.subr.mxu0 0.0
    %2146 = vmatpush1.msra.mxu0 0.0
    %2147 = vmatprep.subr.mxu0 0.0
    %2148 = vmatpush1.msra.mxu0 0.0
    %2149 = vmatprep.subr.mxu0 0.0
    %2150 = vmatpush1.msra.mxu0 0.0
    %2151 = vmatprep.subr.mxu0 0.0
    %2152 = vmatpush1.msra.mxu0 0.0
    %2153 = vmatprep.subr.mxu0 0.0
    %2154 = vmatpush1.msra.mxu0 0.0
    %2155 = vmatprep.subr.mxu0 0.0
    %2156 = vmatpush1.msra.mxu0 0.0
    %2157 = vmatprep.subr.mxu0 0.0
    %2158 = vmatpush1.msra.mxu0 0.0
    %2159 = vmatprep.subr.mxu0 0.0
    %2160 = vmatpush1.msra.mxu0 0.0
    %2161 = vmatprep.subr.mxu0 0.0
    %2162 = vmatpush1.msra.mxu0 0.0
    %2163 = vmatprep.subr.mxu0 0.0
    %2164 = vmatpush1.msra.mxu0 0.0
    %2165 = vmatprep.subr.mxu0 0.0
    %2166 = vmatpush1.msra.mxu0 0.0
    %2167 = vmatprep.mubr.f32.mxu0 0.0
    %2168 = vmatmul.mubr.f32.gmra.mrb[0].mxu0 %v2101
    %v2169 = vpop.f32.mrb[0].mxu0
    %v2170 = vadd.f32 0.0, %v2169
    %v2171 = vpop.f32.mrb[0].mxu0
    %2172 = vdwg.mxu0
    %v2174 = vsel %vm43, %v1683, 0
    %v2177 = vsel %vm46, %v2098, 0
    %2179 = vmatprep.subr.mxu0 0.0
    %2180 = vmatpush1.msra.mxu0 %v2177
    %2181 = vmatprep.subr.mxu0 0.0
    %2182 = vmatpush1.msra.mxu0 0.0
    %2183 = vmatprep.subr.mxu0 0.0
    %2184 = vmatpush1.msra.mxu0 0.0
    %2185 = vmatprep.subr.mxu0 0.0
    %2186 = vmatpush1.msra.mxu0 0.0
    %2187 = vmatprep.subr.mxu0 0.0
    %2188 = vmatpush1.msra.mxu0 0.0
    %2189 = vmatprep.subr.mxu0 0.0
    %2190 = vmatpush1.msra.mxu0 0.0
    %2191 = vmatprep.subr.mxu0 0.0
    %2192 = vmatpush1.msra.mxu0 0.0
    %2193 = vmatprep.subr.mxu0 0.0
    %2194 = vmatpush1.msra.mxu0 0.0
    %2195 = vmatprep.subr.mxu0 0.0
    %2196 = vmatpush1.msra.mxu0 0.0
    %2197 = vmatprep.subr.mxu0 0.0
    %2198 = vmatpush1.msra.mxu0 0.0
    %2199 = vmatprep.subr.mxu0 0.0
    %2200 = vmatpush1.msra.mxu0 0.0
    %2201 = vmatprep.subr.mxu0 0.0
    %2202 = vmatpush1.msra.mxu0 0.0
    %2203 = vmatprep.subr.mxu0 0.0
    %2204 = vmatpush1.msra.mxu0 0.0
    %2205 = vmatprep.subr.mxu0 0.0
    %2206 = vmatpush1.msra.mxu0 0.0
    %2207 = vmatprep.subr.mxu0 0.0
    %2208 = vmatpush1.msra.mxu0 0.0
    %2209 = vmatprep.subr.mxu0 0.0
    %2210 = vmatpush1.msra.mxu0 0.0
    %2211 = vmatprep.subr.mxu0 0.0
    %2212 = vmatpush1.msra.mxu0 0.0
    %2213 = vmatprep.subr.mxu0 0.0
    %2214 = vmatpush1.msra.mxu0 0.0
    %2215 = vmatprep.subr.mxu0 0.0
    %2216 = vmatpush1.msra.mxu0 0.0
    %2217 = vmatprep.subr.mxu0 0.0
    %2218 = vmatpush1.msra.mxu0 0.0
    %2219 = vmatprep.subr.mxu0 0.0
    %2220 = vmatpush1.msra.mxu0 0.0
    %2221 = vmatprep.subr.mxu0 0.0
    %2222 = vmatpush1.msra.mxu0 0.0
    %2223 = vmatprep.subr.mxu0 0.0
    %2224 = vmatpush1.msra.mxu0 0.0
    %2225 = vmatprep.subr.mxu0 0.0
    %2226 = vmatpush1.msra.mxu0 0.0
    %2227 = vmatprep.subr.mxu0 0.0
    %2228 = vmatpush1.msra.mxu0 0.0
    %2229 = vmatprep.subr.mxu0 0.0
    %2230 = vmatpush1.msra.mxu0 0.0
    %2231 = vmatprep.subr.mxu0 0.0
    %2232 = vmatpush1.msra.mxu0 0.0
    %2233 = vmatprep.subr.mxu0 0.0
    %2234 = vmatpush1.msra.mxu0 0.0
    %2235 = vmatprep.subr.mxu0 0.0
    %2236 = vmatpush1.msra.mxu0 0.0
    %2237 = vmatprep.subr.mxu0 0.0
    %2238 = vmatpush1.msra.mxu0 0.0
    %2239 = vmatprep.subr.mxu0 0.0
    %2240 = vmatpush1.msra.mxu0 0.0
    %2241 = vmatprep.subr.mxu0 0.0
    %2242 = vmatpush1.msra.mxu0 0.0
    %2243 = vmatprep.mubr.f32.mxu0 0.0
    %2244 = vmatmul.mubr.f32.gmra.mrb[0].mxu0 %v2174
    %v2245 = vpop.f32.mrb[0].mxu0
    %v2246 = vadd.f32 %v2170, %v2245
    %v2247 = vpop.f32.mrb[0].mxu0
    %2248 = vdwg.mxu0
    %v2249 = vld [vmem:[%s2 + $0x158] sm:$0x1]
    %v2250 = vadd.f32 %v2246, %v2249
    %v2251 = vld [vmem:[%s2 + $0x90] sm:$0xf]
    %vm2252 = vcmask 31744
    %v2254 = vsel %vm2252, %v16, 0
    %v2257 = vsel %vm133, %v2251, 0
    %2259 = vmatprep.subr.mxu0 0.0
    %2260 = vmatpush1.msra.mxu0 %v2257
    %2261 = vmatprep.subr.mxu0 0.0
    %2262 = vmatpush1.msra.mxu0 0.0
    %2263 = vmatprep.subr.mxu0 0.0
    %2264 = vmatpush1.msra.mxu0 0.0
    %2265 = vmatprep.subr.mxu0 0.0
    %2266 = vmatpush1.msra.mxu0 0.0
    %2267 = vmatprep.subr.mxu0 0.0
    %2268 = vmatpush1.msra.mxu0 0.0
    %2269 = vmatprep.subr.mxu0 0.0
    %2270 = vmatpush1.msra.mxu0 0.0
    %2271 = vmatprep.subr.mxu0 0.0
    %2272 = vmatpush1.msra.mxu0 0.0
    %2273 = vmatprep.subr.mxu0 0.0
    %2274 = vmatpush1.msra.mxu0 0.0
    %2275 = vmatprep.subr.mxu0 0.0
    %2276 = vmatpush1.msra.mxu0 0.0
    %2277 = vmatprep.subr.mxu0 0.0
    %2278 = vmatpush1.msra.mxu0 0.0
    %2279 = vmatprep.subr.mxu0 0.0
    %2280 = vmatpush1.msra.mxu0 0.0
    %2281 = vmatprep.subr.mxu0 0.0
    %2282 = vmatpush1.msra.mxu0 0.0
    %2283 = vmatprep.subr.mxu0 0.0
    %2284 = vmatpush1.msra.mxu0 0.0
    %2285 = vmatprep.subr.mxu0 0.0
    %2286 = vmatpush1.msra.mxu0 0.0
    %2287 = vmatprep.subr.mxu0 0.0
    %2288 = vmatpush1.msra.mxu0 0.0
    %2289 = vmatprep.subr.mxu0 0.0
    %2290 = vmatpush1.msra.mxu0 0.0
    %2291 = vmatprep.subr.mxu0 0.0
    %2292 = vmatpush1.msra.mxu0 0.0
    %2293 = vmatprep.subr.mxu0 0.0
    %2294 = vmatpush1.msra.mxu0 0.0
    %2295 = vmatprep.subr.mxu0 0.0
    %2296 = vmatpush1.msra.mxu0 0.0
    %2297 = vmatprep.subr.mxu0 0.0
    %2298 = vmatpush1.msra.mxu0 0.0
    %2299 = vmatprep.subr.mxu0 0.0
    %2300 = vmatpush1.msra.mxu0 0.0
    %2301 = vmatprep.subr.mxu0 0.0
    %2302 = vmatpush1.msra.mxu0 0.0
    %2303 = vmatprep.subr.mxu0 0.0
    %2304 = vmatpush1.msra.mxu0 0.0
    %2305 = vmatprep.subr.mxu0 0.0
    %2306 = vmatpush1.msra.mxu0 0.0
    %2307 = vmatprep.subr.mxu0 0.0
    %2308 = vmatpush1.msra.mxu0 0.0
    %2309 = vmatprep.subr.mxu0 0.0
    %2310 = vmatpush1.msra.mxu0 0.0
    %2311 = vmatprep.subr.mxu0 0.0
    %2312 = vmatpush1.msra.mxu0 0.0
    %2313 = vmatprep.subr.mxu0 0.0
    %2314 = vmatpush1.msra.mxu0 0.0
    %2315 = vmatprep.subr.mxu0 0.0
    %2316 = vmatpush1.msra.mxu0 0.0
    %2317 = vmatprep.subr.mxu0 0.0
    %2318 = vmatpush1.msra.mxu0 0.0
    %2319 = vmatprep.subr.mxu0 0.0
    %2320 = vmatpush1.msra.mxu0 0.0
    %2321 = vmatprep.subr.mxu0 0.0
    %2322 = vmatpush1.msra.mxu0 0.0
    %2323 = vmatprep.mubr.f32.mxu0 0.0
    %2324 = vmatmul.mubr.f32.gmra.mrb[0].mxu0 %v2254
    %v2325 = vpop.f32.mrb[0].mxu0
    %v2326 = vadd.f32 0.0, %v2325
    %v2327 = vpop.f32.mrb[0].mxu0
    %2328 = vdwg.mxu0
    %v2329 = vlaneseq
    %v2330 = vshrl.u32 %v2329, 7
    %v2331 = vsub.s32 0, %v2330
    %v2332 = vrot.slane %v1119, %v2331
    %v2333 = vadd.f32 %v2326, %v2332
    %v2334 = vmax.f32 %v2333, 0.0
    %v2335 = vld [vmem:[%s2 + $0x98] sm:$0xff]
    %v2336 = vld [vmem:[%s2 + $0xa0] sm:$0xff]
    %v2337 = vld [vmem:[%s2 + $0xa8] sm:$0xff]
    %v2338 = vld [vmem:[%s2 + $0xb0] sm:$0x3f]
    %v2339 = vld [vmem:[%s2 + $0xb8] sm:$0x1]
    %v2340 = vlaneseq
    %v2341 = vshrl.u32 %v2340, 7
    %v2342 = vsub.s32 0, %v2341
    %v2343 = vrot.slane %v2339, %v2342
    %vm2344 = vcmask 244736
    %v2346 = vsel %vm2344, %v2334, 0
    %v2349 = vsel %vm46, %v2338, 0
    %2351 = vmatprep.subr.mxu0 0.0
    %2352 = vmatpush1.msra.mxu0 %v2335
    %2353 = vmatprep.subr.mxu0 0.0
    %2354 = vmatpush1.msra.mxu0 %v2336
    %2355 = vmatprep.subr.mxu0 0.0
    %2356 = vmatpush1.msra.mxu0 %v2337
    %2357 = vmatprep.subr.mxu0 0.0
    %2358 = vmatpush1.msra.mxu0 %v2349
    %2359 = vmatprep.subr.mxu0 0.0
    %2360 = vmatpush1.msra.mxu0 0.0
    %2361 = vmatprep.subr.mxu0 0.0
    %2362 = vmatpush1.msra.mxu0 0.0
    %2363 = vmatprep.subr.mxu0 0.0
    %2364 = vmatpush1.msra.mxu0 0.0
    %2365 = vmatprep.subr.mxu0 0.0
    %2366 = vmatpush1.msra.mxu0 0.0
    %2367 = vmatprep.subr.mxu0 0.0
    %2368 = vmatpush1.msra.mxu0 0.0
    %2369 = vmatprep.subr.mxu0 0.0
    %2370 = vmatpush1.msra.mxu0 0.0
    %2371 = vmatprep.subr.mxu0 0.0
    %2372 = vmatpush1.msra.mxu0 0.0
    %2373 = vmatprep.subr.mxu0 0.0
    %2374 = vmatpush1.msra.mxu0 0.0
    %2375 = vmatprep.subr.mxu0 0.0
    %2376 = vmatpush1.msra.mxu0 0.0
    %2377 = vmatprep.subr.mxu0 0.0
    %2378 = vmatpush1.msra.mxu0 0.0
    %2379 = vmatprep.subr.mxu0 0.0
    %2380 = vmatpush1.msra.mxu0 0.0
    %2381 = vmatprep.subr.mxu0 0.0
    %2382 = vmatpush1.msra.mxu0 0.0
    %2383 = vmatprep.subr.mxu0 0.0
    %2384 = vmatpush1.msra.mxu0 0.0
    %2385 = vmatprep.subr.mxu0 0.0
    %2386 = vmatpush1.msra.mxu0 0.0
    %2387 = vmatprep.subr.mxu0 0.0
    %2388 = vmatpush1.msra.mxu0 0.0
    %2389 = vmatprep.subr.mxu0 0.0
    %2390 = vmatpush1.msra.mxu0 0.0
    %2391 = vmatprep.subr.mxu0 0.0
    %2392 = vmatpush1.msra.mxu0 0.0
    %2393 = vmatprep.subr.mxu0 0.0
    %2394 = vmatpush1.msra.mxu0 0.0
    %2395 = vmatprep.subr.mxu0 0.0
    %2396 = vmatpush1.msra.mxu0 0.0
    %2397 = vmatprep.subr.mxu0 0.0
    %2398 = vmatpush1.msra.mxu0 0.0
    %2399 = vmatprep.subr.mxu0 0.0
    %2400 = vmatpush1.msra.mxu0 0.0
    %2401 = vmatprep.subr.mxu0 0.0
    %2402 = vmatpush1.msra.mxu0 0.0
    %2403 = vmatprep.subr.mxu0 0.0
    %2404 = vmatpush1.msra.mxu0 0.0
    %2405 = vmatprep.subr.mxu0 0.0
    %2406 = vmatpush1.msra.mxu0 0.0
    %2407 = vmatprep.subr.mxu0 0.0
    %2408 = vmatpush1.msra.mxu0 0.0
    %2409 = vmatprep.subr.mxu0 0.0
    %2410 = vmatpush1.msra.mxu0 0.0
    %2411 = vmatprep.subr.mxu0 0.0
    %2412 = vmatpush1.msra.mxu0 0.0
    %2413 = vmatprep.subr.mxu0 0.0
    %2414 = vmatpush1.msra.mxu0 0.0
    %2415 = vmatprep.mubr.f32.mxu0 0.0
    %2416 = vmatmul.mubr.f32.gmra.mrb[0].mxu0 %v2346
    %v2417 = vpop.f32.mrb[0].mxu0
    %v2418 = vadd.f32 %v2343, %v2417
    %v2419 = vpop.f32.mrb[0].mxu0
    %2420 = vdwg.mxu0
    %v2421 = vlaneseq
    %v2422 = vshrl.u32 %v2421, 7
    %v2423 = vsub.s32 0, %v2422
    %v2424 = vrot.slane %v1197, %v2423
    %2426 = vrot.lane.b32.xlu0 %v2424, 30
    %v2427 = vpop.permute.xlu0 %2426
    %v2429 = vadd.f32 %v2326, %v2427
    %v2430 = vmax.f32 %v2429, 0.0
    %v2431 = vld [vmem:[%s2 + $0xd8] sm:$0xff]
    %v2432 = vld [vmem:[%s2 + $0xe0] sm:$0x7f]
    %v2433 = vld [vmem:[%s2 + $0xe8] sm:$0x1]
    %v2434 = vlaneseq
    %v2435 = vshrl.u32 %v2434, 7
    %v2436 = vsub.s32 0, %v2435
    %v2437 = vrot.slane %v2433, %v2436
    %2439 = vrot.lane.b32.xlu0 %v2430, 98
    %v2440 = vpop.permute.xlu0 %2439
    %v2441 = vsel %vm1118, %v2440, 0
    %vm2443 = vcmask 1046528
    %v2445 = vsel %vm2443, %v2432, 0
    %2447 = vmatprep.subr.mxu0 0.0
    %2448 = vmatpush1.msra.mxu0 %v2431
    %2449 = vmatprep.subr.mxu0 0.0
    %2450 = vmatpush1.msra.mxu0 %v2445
    %2451 = vmatprep.subr.mxu0 0.0
    %2452 = vmatpush1.msra.mxu0 0.0
    %2453 = vmatprep.subr.mxu0 0.0
    %2454 = vmatpush1.msra.mxu0 0.0
    %2455 = vmatprep.subr.mxu0 0.0
    %2456 = vmatpush1.msra.mxu0 0.0
    %2457 = vmatprep.subr.mxu0 0.0
    %2458 = vmatpush1.msra.mxu0 0.0
    %2459 = vmatprep.subr.mxu0 0.0
    %2460 = vmatpush1.msra.mxu0 0.0
    %2461 = vmatprep.subr.mxu0 0.0
    %2462 = vmatpush1.msra.mxu0 0.0
    %2463 = vmatprep.subr.mxu0 0.0
    %2464 = vmatpush1.msra.mxu0 0.0
    %2465 = vmatprep.subr.mxu0 0.0
    %2466 = vmatpush1.msra.mxu0 0.0
    %2467 = vmatprep.subr.mxu0 0.0
    %2468 = vmatpush1.msra.mxu0 0.0
    %2469 = vmatprep.subr.mxu0 0.0
    %2470 = vmatpush1.msra.mxu0 0.0
    %2471 = vmatprep.subr.mxu0 0.0
    %2472 = vmatpush1.msra.mxu0 0.0
    %2473 = vmatprep.subr.mxu0 0.0
    %2474 = vmatpush1.msra.mxu0 0.0
    %2475 = vmatprep.subr.mxu0 0.0
    %2476 = vmatpush1.msra.mxu0 0.0
    %2477 = vmatprep.subr.mxu0 0.0
    %2478 = vmatpush1.msra.mxu0 0.0
    %2479 = vmatprep.subr.mxu0 0.0
    %2480 = vmatpush1.msra.mxu0 0.0
    %2481 = vmatprep.subr.mxu0 0.0
    %2482 = vmatpush1.msra.mxu0 0.0
    %2483 = vmatprep.subr.mxu0 0.0
    %2484 = vmatpush1.msra.mxu0 0.0
    %2485 = vmatprep.subr.mxu0 0.0
    %2486 = vmatpush1.msra.mxu0 0.0
    %2487 = vmatprep.subr.mxu0 0.0
    %2488 = vmatpush1.msra.mxu0 0.0
    %2489 = vmatprep.subr.mxu0 0.0
    %2490 = vmatpush1.msra.mxu0 0.0
    %2491 = vmatprep.subr.mxu0 0.0
    %2492 = vmatpush1.msra.mxu0 0.0
    %2493 = vmatprep.subr.mxu0 0.0
    %2494 = vmatpush1.msra.mxu0 0.0
    %2495 = vmatprep.subr.mxu0 0.0
    %2496 = vmatpush1.msra.mxu0 0.0
    %2497 = vmatprep.subr.mxu0 0.0
    %2498 = vmatpush1.msra.mxu0 0.0
    %2499 = vmatprep.subr.mxu0 0.0
    %2500 = vmatpush1.msra.mxu0 0.0
    %2501 = vmatprep.subr.mxu0 0.0
    %2502 = vmatpush1.msra.mxu0 0.0
    %2503 = vmatprep.subr.mxu0 0.0
    %2504 = vmatpush1.msra.mxu0 0.0
    %2505 = vmatprep.subr.mxu0 0.0
    %2506 = vmatpush1.msra.mxu0 0.0
    %2507 = vmatprep.subr.mxu0 0.0
    %2508 = vmatpush1.msra.mxu0 0.0
    %2509 = vmatprep.subr.mxu0 0.0
    %2510 = vmatpush1.msra.mxu0 0.0
    %2511 = vmatprep.mubr.f32.mxu0 0.0
    %2512 = vmatmul.mubr.f32.gmra.mrb[0].mxu0 %v2441
    %v2513 = vpop.f32.mrb[0].mxu0
    %v2514 = vadd.f32 %v2437, %v2513
    %v2515 = vpop.f32.mrb[0].mxu0
    %2516 = vdwg.mxu0
    %v2517 = vmax.f32 %v2514, 0.0
    %v2518 = vld [vmem:[%s2 + $0xf0] sm:$0xff]
    %v2519 = vld [vmem:[%s2 + $0xf8] sm:$0xf]
    %v2520 = vld [vmem:[%s2 + $0x100] sm:$0x1]
    %v2521 = vlaneseq
    %v2522 = vshrl.u32 %v2521, 7
    %v2523 = vsub.s32 0, %v2522
    %v2524 = vrot.slane %v2520, %v2523
    %v2526 = vsel %vm130, %v2517, 0
    %v2529 = vsel %vm133, %v2519, 0
    %2531 = vmatprep.subr.mxu0 0.0
    %2532 = vmatpush1.msra.mxu0 %v2518
    %2533 = vmatprep.subr.mxu0 0.0
    %2534 = vmatpush1.msra.mxu0 %v2529
    %2535 = vmatprep.subr.mxu0 0.0
    %2536 = vmatpush1.msra.mxu0 0.0
    %2537 = vmatprep.subr.mxu0 0.0
    %2538 = vmatpush1.msra.mxu0 0.0
    %2539 = vmatprep.subr.mxu0 0.0
    %2540 = vmatpush1.msra.mxu0 0.0
    %2541 = vmatprep.subr.mxu0 0.0
    %2542 = vmatpush1.msra.mxu0 0.0
    %2543 = vmatprep.subr.mxu0 0.0
    %2544 = vmatpush1.msra.mxu0 0.0
    %2545 = vmatprep.subr.mxu0 0.0
    %2546 = vmatpush1.msra.mxu0 0.0
    %2547 = vmatprep.subr.mxu0 0.0
    %2548 = vmatpush1.msra.mxu0 0.0
    %2549 = vmatprep.subr.mxu0 0.0
    %2550 = vmatpush1.msra.mxu0 0.0
    %2551 = vmatprep.subr.mxu0 0.0
    %2552 = vmatpush1.msra.mxu0 0.0
    %2553 = vmatprep.subr.mxu0 0.0
    %2554 = vmatpush1.msra.mxu0 0.0
    %2555 = vmatprep.subr.mxu0 0.0
    %2556 = vmatpush1.msra.mxu0 0.0
    %2557 = vmatprep.subr.mxu0 0.0
    %2558 = vmatpush1.msra.mxu0 0.0
    %2559 = vmatprep.subr.mxu0 0.0
    %2560 = vmatpush1.msra.mxu0 0.0
    %2561 = vmatprep.subr.mxu0 0.0
    %2562 = vmatpush1.msra.mxu0 0.0
    %2563 = vmatprep.subr.mxu0 0.0
    %2564 = vmatpush1.msra.mxu0 0.0
    %2565 = vmatprep.subr.mxu0 0.0
    %2566 = vmatpush1.msra.mxu0 0.0
    %2567 = vmatprep.subr.mxu0 0.0
    %2568 = vmatpush1.msra.mxu0 0.0
    %2569 = vmatprep.subr.mxu0 0.0
    %2570 = vmatpush1.msra.mxu0 0.0
    %2571 = vmatprep.subr.mxu0 0.0
    %2572 = vmatpush1.msra.mxu0 0.0
    %2573 = vmatprep.subr.mxu0 0.0
    %2574 = vmatpush1.msra.mxu0 0.0
    %2575 = vmatprep.subr.mxu0 0.0
    %2576 = vmatpush1.msra.mxu0 0.0
    %2577 = vmatprep.subr.mxu0 0.0
    %2578 = vmatpush1.msra.mxu0 0.0
    %2579 = vmatprep.subr.mxu0 0.0
    %2580 = vmatpush1.msra.mxu0 0.0
    %2581 = vmatprep.subr.mxu0 0.0
    %2582 = vmatpush1.msra.mxu0 0.0
    %2583 = vmatprep.subr.mxu0 0.0
    %2584 = vmatpush1.msra.mxu0 0.0
    %2585 = vmatprep.subr.mxu0 0.0
    %2586 = vmatpush1.msra.mxu0 0.0
    %2587 = vmatprep.subr.mxu0 0.0
    %2588 = vmatpush1.msra.mxu0 0.0
    %2589 = vmatprep.subr.mxu0 0.0
    %2590 = vmatpush1.msra.mxu0 0.0
    %2591 = vmatprep.subr.mxu0 0.0
    %2592 = vmatpush1.msra.mxu0 0.0
    %2593 = vmatprep.subr.mxu0 0.0
    %2594 = vmatpush1.msra.mxu0 0.0
    %2595 = vmatprep.mubr.f32.mxu0 0.0
    %2596 = vmatmul.mubr.f32.gmra.mrb[0].mxu0 %v2526
    %v2597 = vpop.f32.mrb[0].mxu0
    %v2598 = vadd.f32 %v2524, %v2597
    %v2599 = vpop.f32.mrb[0].mxu0
    %2600 = vdwg.mxu0
    %v2601 = vlaneseq
    %v2602 = vshrl.u32 %v2601, 7
    %v2603 = vsub.s32 0, %v2602
    %v2604 = vrot.slane %v2250, %v2603
    %2606 = vrot.lane.b32.xlu0 %v2604, 45
    %v2607 = vpop.permute.xlu0 %2606
    %v2609 = vadd.f32 %v2326, %v2607
    %v2610 = vmax.f32 %v2609, 0.0
    %v2611 = vld [vmem:[%s2 + $0x160] sm:$0xff]
    %v2612 = vld [vmem:[%s2 + $0x168] sm:$0x3]
    %v2613 = vld [vmem:[%s2 + $0x170] sm:$0x1]
    %v2614 = vlaneseq
    %v2615 = vshrl.u32 %v2614, 7
    %v2616 = vsub.s32 0, %v2615
    %v2617 = vrot.slane %v2613, %v2616
    %2619 = vrot.lane.b32.xlu0 %v2610, 83
    %v2620 = vpop.permute.xlu0 %2619
    %vm2621 = vcmask 80896
    %v2622 = vsel %vm2621, %v2620, 0
    %v2625 = vsel %vm1527, %v2612, 0
    %2627 = vmatprep.subr.mxu0 0.0
    %2628 = vmatpush1.msra.mxu0 %v2611
    %2629 = vmatprep.subr.mxu0 0.0
    %2630 = vmatpush1.msra.mxu0 %v2625
    %2631 = vmatprep.subr.mxu0 0.0
    %2632 = vmatpush1.msra.mxu0 0.0
    %2633 = vmatprep.subr.mxu0 0.0
    %2634 = vmatpush1.msra.mxu0 0.0
    %2635 = vmatprep.subr.mxu0 0.0
    %2636 = vmatpush1.msra.mxu0 0.0
    %2637 = vmatprep.subr.mxu0 0.0
    %2638 = vmatpush1.msra.mxu0 0.0
    %2639 = vmatprep.subr.mxu0 0.0
    %2640 = vmatpush1.msra.mxu0 0.0
    %2641 = vmatprep.subr.mxu0 0.0
    %2642 = vmatpush1.msra.mxu0 0.0
    %2643 = vmatprep.subr.mxu0 0.0
    %2644 = vmatpush1.msra.mxu0 0.0
    %2645 = vmatprep.subr.mxu0 0.0
    %2646 = vmatpush1.msra.mxu0 0.0
    %2647 = vmatprep.subr.mxu0 0.0
    %2648 = vmatpush1.msra.mxu0 0.0
    %2649 = vmatprep.subr.mxu0 0.0
    %2650 = vmatpush1.msra.mxu0 0.0
    %2651 = vmatprep.subr.mxu0 0.0
    %2652 = vmatpush1.msra.mxu0 0.0
    %2653 = vmatprep.subr.mxu0 0.0
    %2654 = vmatpush1.msra.mxu0 0.0
    %2655 = vmatprep.subr.mxu0 0.0
    %2656 = vmatpush1.msra.mxu0 0.0
    %2657 = vmatprep.subr.mxu0 0.0
    %2658 = vmatpush1.msra.mxu0 0.0
    %2659 = vmatprep.subr.mxu0 0.0
    %2660 = vmatpush1.msra.mxu0 0.0
    %2661 = vmatprep.subr.mxu0 0.0
    %2662 = vmatpush1.msra.mxu0 0.0
    %2663 = vmatprep.subr.mxu0 0.0
    %2664 = vmatpush1.msra.mxu0 0.0
    %2665 = vmatprep.subr.mxu0 0.0
    %2666 = vmatpush1.msra.mxu0 0.0
    %2667 = vmatprep.subr.mxu0 0.0
    %2668 = vmatpush1.msra.mxu0 0.0
    %2669 = vmatprep.subr.mxu0 0.0
    %2670 = vmatpush1.msra.mxu0 0.0
    %2671 = vmatprep.subr.mxu0 0.0
    %2672 = vmatpush1.msra.mxu0 0.0
    %2673 = vmatprep.subr.mxu0 0.0
    %2674 = vmatpush1.msra.mxu0 0.0
    %2675 = vmatprep.subr.mxu0 0.0
    %2676 = vmatpush1.msra.mxu0 0.0
    %2677 = vmatprep.subr.mxu0 0.0
    %2678 = vmatpush1.msra.mxu0 0.0
    %2679 = vmatprep.subr.mxu0 0.0
    %2680 = vmatpush1.msra.mxu0 0.0
    %2681 = vmatprep.subr.mxu0 0.0
    %2682 = vmatpush1.msra.mxu0 0.0
    %2683 = vmatprep.subr.mxu0 0.0
    %2684 = vmatpush1.msra.mxu0 0.0
    %2685 = vmatprep.subr.mxu0 0.0
    %2686 = vmatpush1.msra.mxu0 0.0
    %2687 = vmatprep.subr.mxu0 0.0
    %2688 = vmatpush1.msra.mxu0 0.0
    %2689 = vmatprep.subr.mxu0 0.0
    %2690 = vmatpush1.msra.mxu0 0.0
    %2691 = vmatprep.mubr.f32.mxu0 0.0
    %2692 = vmatmul.mubr.f32.gmra.mrb[0].mxu0 %v2622
    %v2693 = vpop.f32.mrb[0].mxu0
    %v2694 = vadd.f32 %v2617, %v2693
    %v2695 = vpop.f32.mrb[0].mxu0
    %2696 = vdwg.mxu0
    %v2697 = vmax.f32 %v2694, 0.0
    %v2698 = vld [vmem:[%s2 + $0x178] sm:$0xff]
    %v2699 = vld [vmem:[%s2 + $0x180] sm:$0x3]
    %v2700 = vld [vmem:[%s2 + $0x188] sm:$0x1]
    %v2701 = vlaneseq
    %v2702 = vshrl.u32 %v2701, 7
    %v2703 = vsub.s32 0, %v2702
    %v2704 = vrot.slane %v2700, %v2703
    %v2706 = vsel %vm2621, %v2697, 0
    %v2709 = vsel %vm1527, %v2699, 0
    %2711 = vmatprep.subr.mxu0 0.0
    %2712 = vmatpush1.msra.mxu0 %v2698
    %2713 = vmatprep.subr.mxu0 0.0
    %2714 = vmatpush1.msra.mxu0 %v2709
    %2715 = vmatprep.subr.mxu0 0.0
    %2716 = vmatpush1.msra.mxu0 0.0
    %2717 = vmatprep.subr.mxu0 0.0
    %2718 = vmatpush1.msra.mxu0 0.0
    %2719 = vmatprep.subr.mxu0 0.0
    %2720 = vmatpush1.msra.mxu0 0.0
    %2721 = vmatprep.subr.mxu0 0.0
    %2722 = vmatpush1.msra.mxu0 0.0
    %2723 = vmatprep.subr.mxu0 0.0
    %2724 = vmatpush1.msra.mxu0 0.0
    %2725 = vmatprep.subr.mxu0 0.0
    %2726 = vmatpush1.msra.mxu0 0.0
    %2727 = vmatprep.subr.mxu0 0.0
    %2728 = vmatpush1.msra.mxu0 0.0
    %2729 = vmatprep.subr.mxu0 0.0
    %2730 = vmatpush1.msra.mxu0 0.0
    %2731 = vmatprep.subr.mxu0 0.0
    %2732 = vmatpush1.msra.mxu0 0.0
    %2733 = vmatprep.subr.mxu0 0.0
    %2734 = vmatpush1.msra.mxu0 0.0
    %2735 = vmatprep.subr.mxu0 0.0
    %2736 = vmatpush1.msra.mxu0 0.0
    %2737 = vmatprep.subr.mxu0 0.0
    %2738 = vmatpush1.msra.mxu0 0.0
    %2739 = vmatprep.subr.mxu0 0.0
    %2740 = vmatpush1.msra.mxu0 0.0
    %2741 = vmatprep.subr.mxu0 0.0
    %2742 = vmatpush1.msra.mxu0 0.0
    %2743 = vmatprep.subr.mxu0 0.0
    %2744 = vmatpush1.msra.mxu0 0.0
    %2745 = vmatprep.subr.mxu0 0.0
    %2746 = vmatpush1.msra.mxu0 0.0
    %2747 = vmatprep.subr.mxu0 0.0
    %2748 = vmatpush1.msra.mxu0 0.0
    %2749 = vmatprep.subr.mxu0 0.0
    %2750 = vmatpush1.msra.mxu0 0.0
    %2751 = vmatprep.subr.mxu0 0.0
    %2752 = vmatpush1.msra.mxu0 0.0
    %2753 = vmatprep.subr.mxu0 0.0
    %2754 = vmatpush1.msra.mxu0 0.0
    %2755 = vmatprep.subr.mxu0 0.0
    %2756 = vmatpush1.msra.mxu0 0.0
    %2757 = vmatprep.subr.mxu0 0.0
    %2758 = vmatpush1.msra.mxu0 0.0
    %2759 = vmatprep.subr.mxu0 0.0
    %2760 = vmatpush1.msra.mxu0 0.0
    %2761 = vmatprep.subr.mxu0 0.0
    %2762 = vmatpush1.msra.mxu0 0.0
    %2763 = vmatprep.subr.mxu0 0.0
    %2764 = vmatpush1.msra.mxu0 0.0
    %2765 = vmatprep.subr.mxu0 0.0
    %2766 = vmatpush1.msra.mxu0 0.0
    %2767 = vmatprep.subr.mxu0 0.0
    %2768 = vmatpush1.msra.mxu0 0.0
    %2769 = vmatprep.subr.mxu0 0.0
    %2770 = vmatpush1.msra.mxu0 0.0
    %2771 = vmatprep.subr.mxu0 0.0
    %2772 = vmatpush1.msra.mxu0 0.0
    %2773 = vmatprep.subr.mxu0 0.0
    %2774 = vmatpush1.msra.mxu0 0.0
    %2775 = vmatprep.mubr.f32.mxu0 0.0
    %2776 = vmatmul.mubr.f32.gmra.mrb[0].mxu0 %v2706
    %v2777 = vpop.f32.mrb[0].mxu0
    %v2778 = vadd.f32 %v2704, %v2777
    %v2779 = vpop.f32.mrb[0].mxu0
    %2780 = vdwg.mxu0
    %2783 = vrot.lane.b32.xlu0 %v2778, 25
    %v2784 = vpop.permute.xlu0 %2783
    %v2786 = vadd.f32 %v21, %v2784
    %2788 = vrot.lane.b32.xlu0 %v2598, 1
    %v2789 = vpop.permute.xlu0 %2788
    %2792 = vrot.lane.b32.xlu0 %v2418, 13
    %v2793 = vpop.permute.xlu0 %2792
    %vm2795 = vcmask 7168
    %v2796 = vsel %vm2795, %v21, %v2789
    %vm2797 = vcmask 105472
    %v2798 = vsel %vm2797, %v2796, %v2793
    %vm2799 = vcmask 203776
    %v2800 = vsel %vm2799, %v2798, %v2786
    %vm2801 = vcmask 211968
    %v2802 = vsel %vm2801, %v2800, %v21
    %vm2803 = vcmask 408576
    %2804 = vst.msk [vmem:[#allocation2] sm:$0xff] %vm2803, %v2802
    // Predicated region
    $region14: #{tpu_custom_call.1} parent=1 // pred_check
      _
    $region15: #{tpu_custom_call.1} parent=1 // pred_check_branch
      %2806 = sbr.rel (0) target = $region17
    $region16: #{tpu_custom_call.1} parent=1 // pred_region
      %s2808 = ssub.s32 128, 128
      %2809 = vsyncadd [#allocation3], %s2808
      %s2811 = sshll.u32 [#allocation2], 4
      %s2812 = int_to_ptr.vmem [resolvable:$true] %s2811
      %2814 = dma.vmem_to_hbm [thread:$0]  %s2812, 128, %s3, [#allocation3]
    $region17: #{tpu_custom_call.1} parent=1 // pred_fallthru
      _
    // Predicated region
    $region18: #{tpu_custom_call.1} parent=1 // pred_check
      _
    $region19: #{tpu_custom_call.1} parent=1 // pred_check_branch
      %2816 = sbr.rel (0) target = $region21
    $region20: #{tpu_custom_call.1} parent=1 // pred_region
      %2817 = dma.done [#allocation3], 128
    $region21: #{tpu_custom_call.1} parent=1 // pred_fallthru
      _
    %2818 = vsyncpa [#allocation3], 1

</llo_original>
